<compile_context>
chip_gen: v5e
topology: v5e:2x2
jax: 0.10.0
libtpu: 0.0.40
codegen_flags: <defaults>
</compile_context>

<pallas_src>
import numpy as np
import jax
import jax.numpy as jnp
from jax import lax
from jax.experimental import pallas as pl
from jax.experimental.pallas import tpu as pltpu

# ----------------------------- configuration -------------------------------
B, C, H, W = 2, 4, 16, 16          # input (NCHW)
HEADS = 2
DIM_HEADS = 2                       # per-head dim E
HIDDEN = HEADS * DIM_HEADS          # dim_hidden of the attention
HW = H * W
PERMUTATION = (0, 3, 2, 1)          # attend along H; (B,C,H,W) -> (B,W,H,C)


def _inverse_permutation(perm):
    # mirror of sort_and_return_indices: argsort of the permutation
    return tuple(int(i) for i in np.argsort(np.asarray(perm)))


# ------------------------------ Pallas kernel -------------------------------
def _axial_attention_kernel(x_ref, wf_ref, wo_ref, bo_ref, o_ref):
    # x_ref : (1, C, H*W)     one batch element, channels x flattened (h, w)
    # wf_ref: (3*HIDDEN, C)   rows = [Wq^T * scale ; Wk^T ; Wv^T]
    # wo_ref: (HEADS, E, C)   output projection, split per head
    # bo_ref: (C, 1)          output bias
    # o_ref : (1, C, H*W)
    x = x_ref[0].astype(jnp.float32)                                  # (C, HW)

    # Fused QKV projection: a single MXU matmul, lane-dense over H*W.
    qkv = jnp.dot(wf_ref[...].astype(jnp.float32), x,
                  preferred_element_type=jnp.float32)                 # (3*HIDDEN, HW)

    # Attention runs along h for each fixed w.  Flattened index i = h*W + w,
    # so query i may only attend to keys j with i % W == j % W.
    row_w = lax.broadcasted_iota(jnp.int32, (HW, HW), 0) % W
    col_w = lax.broadcasted_iota(jnp.int32, (HW, HW), 1) % W
    same_w = row_w == col_w

    y_t = jnp.zeros((HW, C), dtype=jnp.float32)                       # (HW, C)

    for g in range(HEADS):                           # HEADS = 2, fully unrolled
        lo = g * DIM_HEADS
        q_g = qkv[lo:lo + DIM_HEADS, :]                               # (E, HW)
        k_g = qkv[HIDDEN + lo:HIDDEN + lo + DIM_HEADS, :]             # (E, HW)
        v_g = qkv[2 * HIDDEN + lo:2 * HIDDEN + lo + DIM_HEADS, :]     # (E, HW)

        # All-pairs scores over the flattened axis; cross-w pairs are masked
        # away, which realises the w-batched attention along h densely.
        s = jnp.dot(q_g.T, k_g, preferred_element_type=jnp.float32)   # (HW, HW)
        s = jnp.where(same_w, s, -1e30)
        s = s - jnp.max(s, axis=-1, keepdims=True)
        p = jnp.exp(s)                               # masked entries -> exactly 0
        denom = jnp.sum(p, axis=-1, keepdims=True)                    # (HW, 1)
        inv = pl.reciprocal(denom, approx=True)
        inv = inv * (2.0 - denom * inv)              # one Newton step (EUP + VPU)

        o_g = jnp.dot(p, v_g.T, preferred_element_type=jnp.float32)   # (HW, E)
        o_g = o_g * inv
        y_t = y_t + jnp.dot(o_g, wo_ref[g].astype(jnp.float32),
                            preferred_element_type=jnp.float32)       # (HW, C)

    y = y_t.T + bo_ref[...].astype(jnp.float32)                       # (C, HW)
    o_ref[0] = y.astype(o_ref.dtype)


def _fused_axial_attention(x2, wf, wo_heads, bo_col):
    """x2: (B, C, H*W) -> (B, C, H*W); attention along H per (batch, w, head)."""
    b, c, hw = x2.shape
    return pl.pallas_call(
        _axial_attention_kernel,
        out_shape=jax.ShapeDtypeStruct((b, c, hw), x2.dtype),
        grid_spec=pltpu.PrefetchScalarGridSpec(
            num_scalar_prefetch=0,
            grid=(b,),
            in_specs=[
                pl.BlockSpec((1, c, hw), lambda i: (i, 0, 0)),
                pl.BlockSpec(wf.shape, lambda i: (0, 0)),
                pl.BlockSpec(wo_heads.shape, lambda i: (0, 0, 0)),
                pl.BlockSpec(bo_col.shape, lambda i: (0, 0)),
            ],
            out_specs=pl.BlockSpec((1, c, hw), lambda i: (i, 0, 0)),
        ),
        compiler_params=pltpu.CompilerParams(
            dimension_semantics=("parallel",)),
    )(x2, wf, wo_heads, bo_col)


# --------------------------- PermuteToFrom wrapper ---------------------------
def permute_to_from(x, params, permutation=PERMUTATION):
    """Mirrors PermuteToFrom.forward with fn = SelfAttention.

    Specialised to the image axial-attention permutation (0, 3, 2, 1): the
    permute + reshape pair is folded into the kernel (free (B, C, H*W) views
    outside, same-w masking inside), so no HBM transpose is materialised.
    """
    assert tuple(permutation) == PERMUTATION
    wq, wk, wv, wo, bo = params
    scale = DIM_HEADS ** -0.5
    # fold the softmax scale into Wq and fuse Q/K/V into one weight matrix
    wf = jnp.concatenate([(wq * scale).T, wk.T, wv.T], axis=0)        # (3*HIDDEN, C)
    wo_heads = wo.reshape(HEADS, DIM_HEADS, wo.shape[-1])             # (HEADS, E, C)
    bo_col = bo.reshape(-1, 1)                                        # (C, 1)

    b, c, h, w = x.shape
    x2 = x.reshape(b, c, h * w)                                       # free view
    y2 = _fused_axial_attention(x2, wf, wo_heads, bo_col)
    return y2.reshape(b, c, h, w)


# --------------------------- pure-JAX reference ------------------------------
def _reference(x, params, permutation=PERMUTATION):
    wq, wk, wv, wo, bo = params
    inv_permutation = _inverse_permutation(permutation)
    axial = jnp.transpose(x, permutation)
    shape = axial.shape
    t, d = shape[-2], shape[-1]
    a = axial.reshape(-1, t, d)                                       # (N, T, D)
    q = a @ wq
    k = a @ wk
    v = a @ wv
    N = a.shape[0]
    qh = q.reshape(N, t, HEADS, DIM_HEADS).transpose(0, 2, 1, 3)
    kh = k.reshape(N, t, HEADS, DIM_HEADS).transpose(0, 2, 1, 3)
    vh = v.reshape(N, t, HEADS, DIM_HEADS).transpose(0, 2, 1, 3)
    dots = jnp.einsum('nhte,nhse->nhts', qh, kh) * (DIM_HEADS ** -0.5)
    attn = jax.nn.softmax(dots, axis=-1)
    oh = jnp.einsum('nhts,nhse->nhte', attn, vh)
    out = oh.transpose(0, 2, 1, 3).reshape(N, t, HIDDEN)
    out = out @ wo + bo[0]
    out = out.reshape(shape)
    return jnp.transpose(out, inv_permutation)


# ---------------------------------- main -------------------------------------
if __name__ == "__main__":
    key = jax.random.PRNGKey(0)
    kx, kq, kk, kv, ko, kb = jax.random.split(key, 6)

    x = jax.random.normal(kx, (B, C, H, W), dtype=jnp.float32)

    # deterministic synthetic parameters (shapes from SelfAttention(dim=C, heads, dim_heads))
    wq = jax.random.normal(kq, (C, HIDDEN), dtype=jnp.float32) * 0.1
    wk = jax.random.normal(kk, (C, HIDDEN), dtype=jnp.float32) * 0.1   # first half of to_kv
    wv = jax.random.normal(kv, (C, HIDDEN), dtype=jnp.float32) * 0.1   # second half of to_kv
    wo = jax.random.normal(ko, (HIDDEN, C), dtype=jnp.float32) * 0.1
    bo = jax.random.normal(kb, (1, C), dtype=jnp.float32) * 0.1
    params = (wq, wk, wv, wo, bo)

    fwd = jax.jit(permute_to_from)
    out = jax.block_until_ready(fwd(x, params))

    ref = jax.block_until_ready(_reference(x, params))
    assert out.shape == x.shape
    np.testing.assert_allclose(np.asarray(out), np.asarray(ref), rtol=1e-4, atol=1e-4)

    print("KERNEL_OK")
</pallas_src>

<mosaic_0001>
module attributes {stable_mosaic.version = 11 : i64} {
  func.func @_axial_attention_kernel(%arg0: i32, %arg1: memref<1x4x256xf32, #tpu.memory_space<vmem>>, %arg2: memref<12x4xf32, #tpu.memory_space<vmem>>, %arg3: memref<2x2x4xf32, #tpu.memory_space<vmem>>, %arg4: memref<4x1xf32, #tpu.memory_space<vmem>>, %arg5: memref<1x4x256xf32, #tpu.memory_space<vmem>>) attributes {dimension_semantics = [#tpu.dimension_semantics<parallel>], iteration_bounds = array<i64: 2>, scalar_prefetch = 0 : i64, scratch_operands = 0 : i64, tpu.core_type = #tpu.core_type<tc>, window_params = [{transform_indices = @transform_0, window_bounds = array<i64: 1, 4, 256>}, {pipeline_mode = #tpu.pipeline_mode<synchronous>, transform_indices = @transform_1, window_bounds = array<i64: 12, 4>}, {pipeline_mode = #tpu.pipeline_mode<synchronous>, transform_indices = @transform_2, window_bounds = array<i64: 2, 2, 4>}, {pipeline_mode = #tpu.pipeline_mode<synchronous>, transform_indices = @transform_3, window_bounds = array<i64: 4, 1>}, {transform_indices = @transform_4, window_bounds = array<i64: 1, 4, 256>}]} {
    %c0 = arith.constant 0 : index
    %c0_0 = arith.constant 0 : index
    %c0_1 = arith.constant 0 : index
    %0 = vector.load %arg1[%c0, %c0_0, %c0_1] : memref<1x4x256xf32, #tpu.memory_space<vmem>>, vector<1x4x256xf32>
    %1 = vector.shape_cast %0 : vector<1x4x256xf32> to vector<4x256xf32>
    %c0_2 = arith.constant 0 : index
    %c0_3 = arith.constant 0 : index
    %2 = vector.load %arg2[%c0_2, %c0_3] : memref<12x4xf32, #tpu.memory_space<vmem>>, vector<12x4xf32>
    %cst = arith.constant dense<0.000000e+00> : vector<12x256xf32>
    %3 = tpu.matmul %2, %1, %cst {dimension_numbers = #tpu.dot_dimension_numbers<[1], [0], [0], [1], [0, 0, 1, 1], [], []>} : vector<12x4xf32>, vector<4x256xf32>, vector<12x256xf32> -> vector<12x256xf32>
    %4 = tpu.iota {dimensions = array<i32: 0>} : vector<256x256xi32>
    %c16_i32 = arith.constant 16 : i32
    %c0_i32 = arith.constant 0 : i32
    %5 = arith.cmpi eq, %c16_i32, %c0_i32 : i32
    %c1_i32 = arith.constant 1 : i32
    %6 = arith.select %5, %c1_i32, %c16_i32 : i32
    %7 = vector.broadcast %6 : i32 to vector<256x256xi32>
    %8 = arith.remsi %4, %7 : vector<256x256xi32>
    %c0_i32_4 = arith.constant 0 : i32
    %9 = vector.broadcast %c0_i32_4 : i32 to vector<256x256xi32>
    %10 = arith.cmpi ne, %8, %9 : vector<256x256xi32>
    %c0_i32_5 = arith.constant 0 : i32
    %11 = vector.broadcast %c0_i32_5 : i32 to vector<256x256xi32>
    %12 = arith.cmpi slt, %8, %11 : vector<256x256xi32>
    %c0_i32_6 = arith.constant 0 : i32
    %13 = arith.cmpi slt, %6, %c0_i32_6 : i32
    %14 = vector.broadcast %13 : i1 to vector<256x256xi1>
    %15 = vector.broadcast %14 : vector<256x256xi1> to vector<256x256xi1>
    %16 = arith.xori %12, %15 : vector<256x256xi1>
    %17 = arith.andi %16, %10 : vector<256x256xi1>
    %18 = vector.broadcast %6 : i32 to vector<256x256xi32>
    %19 = arith.addi %8, %18 : vector<256x256xi32>
    %20 = arith.select %17, %19, %8 : vector<256x256xi1>, vector<256x256xi32>
    %21 = tpu.iota {dimensions = array<i32: 1>} : vector<256x256xi32>
    %c16_i32_7 = arith.constant 16 : i32
    %c0_i32_8 = arith.constant 0 : i32
    %22 = arith.cmpi eq, %c16_i32_7, %c0_i32_8 : i32
    %c1_i32_9 = arith.constant 1 : i32
    %23 = arith.select %22, %c1_i32_9, %c16_i32_7 : i32
    %24 = vector.broadcast %23 : i32 to vector<256x256xi32>
    %25 = arith.remsi %21, %24 : vector<256x256xi32>
    %c0_i32_10 = arith.constant 0 : i32
    %26 = vector.broadcast %c0_i32_10 : i32 to vector<256x256xi32>
    %27 = arith.cmpi ne, %25, %26 : vector<256x256xi32>
    %c0_i32_11 = arith.constant 0 : i32
    %28 = vector.broadcast %c0_i32_11 : i32 to vector<256x256xi32>
    %29 = arith.cmpi slt, %25, %28 : vector<256x256xi32>
    %c0_i32_12 = arith.constant 0 : i32
    %30 = arith.cmpi slt, %23, %c0_i32_12 : i32
    %31 = vector.broadcast %30 : i1 to vector<256x256xi1>
    %32 = vector.broadcast %31 : vector<256x256xi1> to vector<256x256xi1>
    %33 = arith.xori %29, %32 : vector<256x256xi1>
    %34 = arith.andi %33, %27 : vector<256x256xi1>
    %35 = vector.broadcast %23 : i32 to vector<256x256xi32>
    %36 = arith.addi %25, %35 : vector<256x256xi32>
    %37 = arith.select %34, %36, %25 : vector<256x256xi1>, vector<256x256xi32>
    %38 = arith.cmpi eq, %20, %37 : vector<256x256xi32>
    %cst_13 = arith.constant 0.000000e+00 : f32
    %39 = vector.broadcast %cst_13 : f32 to vector<256x4xf32>
    %40 = vector.extract_strided_slice %3 {offsets = [0, 0], sizes = [2, 256], strides = [1, 1]} : vector<12x256xf32> to vector<2x256xf32>
    %41 = vector.extract_strided_slice %3 {offsets = [4, 0], sizes = [2, 256], strides = [1, 1]} : vector<12x256xf32> to vector<2x256xf32>
    %42 = vector.extract_strided_slice %3 {offsets = [8, 0], sizes = [2, 256], strides = [1, 1]} : vector<12x256xf32> to vector<2x256xf32>
    %43 = tpu.transpose %40, [1, 0] : vector<2x256xf32> -> vector<256x2xf32>
    %cst_14 = arith.constant dense<0.000000e+00> : vector<256x256xf32>
    %44 = tpu.matmul %43, %41, %cst_14 {dimension_numbers = #tpu.dot_dimension_numbers<[1], [0], [0], [1], [0, 0, 1, 1], [], []>} : vector<256x2xf32>, vector<2x256xf32>, vector<256x256xf32> -> vector<256x256xf32>
    %cst_15 = arith.constant -1.000000e+30 : f32
    %45 = vector.broadcast %cst_15 : f32 to vector<256x256xf32>
    %46 = arith.select %38, %44, %45 : vector<256x256xi1>, vector<256x256xf32>
    %cst_16 = arith.constant dense<0xFF800000> : vector<256xf32>
    %47 = vector.multi_reduction <maximumf>, %46, %cst_16 [1] : vector<256x256xf32> to vector<256xf32>
    %48 = vector.shape_cast %47 : vector<256xf32> to vector<256x1xf32>
    %49 = vector.broadcast %48 : vector<256x1xf32> to vector<256x256xf32>
    %50 = arith.subf %46, %49 : vector<256x256xf32>
    %51 = math.exp %50 : vector<256x256xf32>
    %cst_17 = arith.constant dense<0.000000e+00> : vector<256xf32>
    %52 = vector.multi_reduction <add>, %51, %cst_17 [1] : vector<256x256xf32> to vector<256xf32>
    %53 = vector.shape_cast %52 : vector<256xf32> to vector<256x1xf32>
    %54 = tpu.reciprocal %53 {approx = true} : vector<256x1xf32> -> vector<256x1xf32>
    %55 = arith.mulf %53, %54 : vector<256x1xf32>
    %cst_18 = arith.constant 2.000000e+00 : f32
    %56 = vector.broadcast %cst_18 : f32 to vector<256x1xf32>
    %57 = arith.subf %56, %55 : vector<256x1xf32>
    %58 = arith.mulf %54, %57 : vector<256x1xf32>
    %59 = tpu.transpose %42, [1, 0] : vector<2x256xf32> -> vector<256x2xf32>
    %cst_19 = arith.constant dense<0.000000e+00> : vector<256x2xf32>
    %60 = tpu.matmul %51, %59, %cst_19 {dimension_numbers = #tpu.dot_dimension_numbers<[1], [0], [0], [1], [0, 0, 1, 1], [], []>} : vector<256x256xf32>, vector<256x2xf32>, vector<256x2xf32> -> vector<256x2xf32>
    %61 = vector.broadcast %58 : vector<256x1xf32> to vector<256x2xf32>
    %62 = arith.mulf %60, %61 : vector<256x2xf32>
    %c0_20 = arith.constant 0 : index
    %c0_21 = arith.constant 0 : index
    %c0_22 = arith.constant 0 : index
    %63 = vector.load %arg3[%c0_20, %c0_21, %c0_22] : memref<2x2x4xf32, #tpu.memory_space<vmem>>, vector<1x2x4xf32>
    %64 = vector.shape_cast %63 : vector<1x2x4xf32> to vector<2x4xf32>
    %cst_23 = arith.constant dense<0.000000e+00> : vector<256x4xf32>
    %65 = tpu.matmul %62, %64, %cst_23 {dimension_numbers = #tpu.dot_dimension_numbers<[1], [0], [0], [1], [0, 0, 1, 1], [], []>} : vector<256x2xf32>, vector<2x4xf32>, vector<256x4xf32> -> vector<256x4xf32>
    %66 = arith.addf %39, %65 : vector<256x4xf32>
    %67 = vector.extract_strided_slice %3 {offsets = [2, 0], sizes = [2, 256], strides = [1, 1]} : vector<12x256xf32> to vector<2x256xf32>
    %68 = vector.extract_strided_slice %3 {offsets = [6, 0], sizes = [2, 256], strides = [1, 1]} : vector<12x256xf32> to vector<2x256xf32>
    %69 = vector.extract_strided_slice %3 {offsets = [10, 0], sizes = [2, 256], strides = [1, 1]} : vector<12x256xf32> to vector<2x256xf32>
    %70 = tpu.transpose %67, [1, 0] : vector<2x256xf32> -> vector<256x2xf32>
    %cst_24 = arith.constant dense<0.000000e+00> : vector<256x256xf32>
    %71 = tpu.matmul %70, %68, %cst_24 {dimension_numbers = #tpu.dot_dimension_numbers<[1], [0], [0], [1], [0, 0, 1, 1], [], []>} : vector<256x2xf32>, vector<2x256xf32>, vector<256x256xf32> -> vector<256x256xf32>
    %cst_25 = arith.constant -1.000000e+30 : f32
    %72 = vector.broadcast %cst_25 : f32 to vector<256x256xf32>
    %73 = arith.select %38, %71, %72 : vector<256x256xi1>, vector<256x256xf32>
    %cst_26 = arith.constant dense<0xFF800000> : vector<256xf32>
    %74 = vector.multi_reduction <maximumf>, %73, %cst_26 [1] : vector<256x256xf32> to vector<256xf32>
    %75 = vector.shape_cast %74 : vector<256xf32> to vector<256x1xf32>
    %76 = vector.broadcast %75 : vector<256x1xf32> to vector<256x256xf32>
    %77 = arith.subf %73, %76 : vector<256x256xf32>
    %78 = math.exp %77 : vector<256x256xf32>
    %cst_27 = arith.constant dense<0.000000e+00> : vector<256xf32>
    %79 = vector.multi_reduction <add>, %78, %cst_27 [1] : vector<256x256xf32> to vector<256xf32>
    %80 = vector.shape_cast %79 : vector<256xf32> to vector<256x1xf32>
    %81 = tpu.reciprocal %80 {approx = true} : vector<256x1xf32> -> vector<256x1xf32>
    %82 = arith.mulf %80, %81 : vector<256x1xf32>
    %cst_28 = arith.constant 2.000000e+00 : f32
    %83 = vector.broadcast %cst_28 : f32 to vector<256x1xf32>
    %84 = arith.subf %83, %82 : vector<256x1xf32>
    %85 = arith.mulf %81, %84 : vector<256x1xf32>
    %86 = tpu.transpose %69, [1, 0] : vector<2x256xf32> -> vector<256x2xf32>
    %cst_29 = arith.constant dense<0.000000e+00> : vector<256x2xf32>
    %87 = tpu.matmul %78, %86, %cst_29 {dimension_numbers = #tpu.dot_dimension_numbers<[1], [0], [0], [1], [0, 0, 1, 1], [], []>} : vector<256x256xf32>, vector<256x2xf32>, vector<256x2xf32> -> vector<256x2xf32>
    %88 = vector.broadcast %85 : vector<256x1xf32> to vector<256x2xf32>
    %89 = arith.mulf %87, %88 : vector<256x2xf32>
    %c1 = arith.constant 1 : index
    %c0_30 = arith.constant 0 : index
    %c0_31 = arith.constant 0 : index
    %90 = vector.load %arg3[%c1, %c0_30, %c0_31] : memref<2x2x4xf32, #tpu.memory_space<vmem>>, vector<1x2x4xf32>
    %91 = vector.shape_cast %90 : vector<1x2x4xf32> to vector<2x4xf32>
    %cst_32 = arith.constant dense<0.000000e+00> : vector<256x4xf32>
    %92 = tpu.matmul %89, %91, %cst_32 {dimension_numbers = #tpu.dot_dimension_numbers<[1], [0], [0], [1], [0, 0, 1, 1], [], []>} : vector<256x2xf32>, vector<2x4xf32>, vector<256x4xf32> -> vector<256x4xf32>
    %93 = arith.addf %66, %92 : vector<256x4xf32>
    %94 = tpu.transpose %93, [1, 0] : vector<256x4xf32> -> vector<4x256xf32>
    %c0_33 = arith.constant 0 : index
    %c0_34 = arith.constant 0 : index
    %95 = vector.load %arg4[%c0_33, %c0_34] : memref<4x1xf32, #tpu.memory_space<vmem>>, vector<4x1xf32>
    %96 = vector.broadcast %95 : vector<4x1xf32> to vector<4x256xf32>
    %97 = arith.addf %94, %96 : vector<4x256xf32>
    %c0_35 = arith.constant 0 : index
    %c0_36 = arith.constant 0 : index
    %c0_37 = arith.constant 0 : index
    %98 = vector.load %arg5[%c0_35, %c0_36, %c0_37] : memref<1x4x256xf32, #tpu.memory_space<vmem>>, vector<1x4x256xf32>
    %99 = vector.shape_cast %98 : vector<1x4x256xf32> to vector<4x256xf32>
    %100 = vector.shape_cast %97 : vector<4x256xf32> to vector<1x4x256xf32>
    tpu.vector_store %arg5[%c0_35, %c0_36, %c0_37], %100 {strides = array<i32>} : memref<1x4x256xf32, #tpu.memory_space<vmem>>, vector<1x4x256xf32>,
    return
  }
  func.func @transform_0(%arg0: i32) -> (i32, i32, i32) {
    %c0_i32 = arith.constant 0 : i32
    %c0_i32_0 = arith.constant 0 : i32
    %c0_i32_1 = arith.constant 0 : i32
    return %arg0, %c0_i32, %c0_i32_0 : i32, i32, i32
  }
  func.func @transform_1(%arg0: i32) -> (i32, i32) {
    %c0_i32 = arith.constant 0 : i32
    %c0_i32_0 = arith.constant 0 : i32
    %c0_i32_1 = arith.constant 0 : i32
    return %c0_i32, %c0_i32_0 : i32, i32
  }
  func.func @transform_2(%arg0: i32) -> (i32, i32, i32) {
    %c0_i32 = arith.constant 0 : i32
    %c0_i32_0 = arith.constant 0 : i32
    %c0_i32_1 = arith.constant 0 : i32
    %c0_i32_2 = arith.constant 0 : i32
    return %c0_i32, %c0_i32_0, %c0_i32_1 : i32, i32, i32
  }
  func.func @transform_3(%arg0: i32) -> (i32, i32) {
    %c0_i32 = arith.constant 0 : i32
    %c0_i32_0 = arith.constant 0 : i32
    %c0_i32_1 = arith.constant 0 : i32
    return %c0_i32, %c0_i32_0 : i32, i32
  }
  func.func @transform_4(%arg0: i32) -> (i32, i32, i32) {
    %c0_i32 = arith.constant 0 : i32
    %c0_i32_0 = arith.constant 0 : i32
    %c0_i32_1 = arith.constant 0 : i32
    return %arg0, %c0_i32, %c0_i32_0 : i32, i32, i32
  }
}

</mosaic_0001>

<llo_original>
// kernel: permute_to_from.1
$region0: #{permute_to_from.1}
  #allocation0 [shape = 'u32[]', space=smem, size = 0x4, offset = 0x4, fixed_abs, tag = 'smem constant byte address 0x4 - core index']
  #allocation1 [shape = 'u32[72,128]{1,0:T(1,128)}', space=vmem, size = 0x9000, scoped, tag = 'internal scratch']
  %s0 = inlined_call_operand.vmem [shape: f32[2,4,256], index: 0, kind: input, shape index: {}]
  %s1 = inlined_call_operand.vmem [shape: f32[12,4], index: 1, kind: input, shape index: {}]
  %s2 = inlined_call_operand.vmem [shape: f32[2,2,4], index: 2, kind: input, shape index: {}]
  %s3 = inlined_call_operand.vmem [shape: f32[4,1], index: 3, kind: input, shape index: {}]
  %s4 = inlined_call_operand.vmem [shape: f32[2,4,256], index: 4, kind: output, shape index: {}]
  %s5 = sld [smem:[#allocation0]]
  $region49: #{permute_to_from.1} parent=0
    _
  %s7 = ssub.s32 1, %s5
  %s8 = scalar_select 0, %s7, %s5
  loop: start=0, step=1, limit=4
  $region2: #{permute_to_from.1} parent=0 // loop_pre_header
    _
  $region3: #{permute_to_from.1} parent=0 // loop_header
    %s10 = sphi 0, %s14
    %p11 = scmp.ge.s32.totalorder %s10, 4
    %s20 = sphi 0, %s22
    %s23 = sphi 0, %s20
    %s24 = sphi 0, %s23
    %s40 = sphi 0, %s24
    %s44 = sphi 0, %s44
    %s46 = sphi 0, %s44
    %s47 = sphi 0, %s46
    %s61 = sphi 0, %s47
    %s65 = sphi 0, %s65
    %s67 = sphi 0, %s65
    %s68 = sphi 0, %s67
    %s82 = sphi 0, %s68
    %s86 = sphi 0, %s86
    %s88 = sphi 0, %s86
    %s89 = sphi 0, %s88
    %s103 = sphi 0, %s89
    %s109 = sphi 0, %s111
    %s112 = sphi 0, %s109
    %s113 = sphi 0, %s112
    %s129 = sphi 0, %s113
  $region4: #{permute_to_from.1} parent=0 // loop_header_branch
    %13 = sbr.rel (%p11) target = $region8
  $region5: #{permute_to_from.1} parent=0 // loop_body
    %s15 = ssub.s32 %s10, 1
    %s16 = ssub.s32 %s10, 2
    %s17 = sadd.s32 %s10, 1
    %s18 = ssub.s32 %s10, %s17
    %p19 = scmp.eq.s32.totalorder %s18, 0
    %s21 = sadd.s32 %s20, 1
    %s22 = scalar_select %p19, %s20, %s21
    %p25 = pneg %p19
    %p26 = scmp.eq.s32.totalorder %s10, 1
    %p27 = por %p25, %p26
    %p28 = scmp.ne.s32.totalorder %s20, %s23
    %p29 = scmp.eq.s32.totalorder %s10, 0
    %p30 = por %p28, %p29
    %p31 = scmp.ne.s32.totalorder %s20, %s23
    %p32 = scmp.eq.s32.totalorder %s15, 1
    %p33 = por %p31, %p32
    %p34 = scmp.ne.s32.totalorder %s23, %s24
    %p35 = scmp.eq.s32.totalorder %s15, 0
    %p36 = por %p34, %p35
    %p37 = scmp.ne.s32.totalorder %s23, %s24
    %p38 = scmp.eq.s32.totalorder %s16, 1
    %p39 = por %p37, %p38
    %p41 = scmp.ne.s32.totalorder %s24, %s40
    %p42 = scmp.eq.s32.totalorder %s16, 0
    %p43 = por %p41, %p42
    %s45 = sadd.s32 %s44, 1
    %p48 = scmp.eq.s32.totalorder %s10, 1
    %p49 = scmp.ne.s32.totalorder %s44, %s46
    %p50 = scmp.eq.s32.totalorder %s10, 0
    %p51 = por %p49, %p50
    %p52 = scmp.ne.s32.totalorder %s44, %s46
    %p53 = scmp.eq.s32.totalorder %s15, 1
    %p54 = por %p52, %p53
    %p55 = scmp.ne.s32.totalorder %s46, %s47
    %p56 = scmp.eq.s32.totalorder %s15, 0
    %p57 = por %p55, %p56
    %p58 = scmp.ne.s32.totalorder %s46, %s47
    %p59 = scmp.eq.s32.totalorder %s16, 1
    %p60 = por %p58, %p59
    %p62 = scmp.ne.s32.totalorder %s47, %s61
    %p63 = scmp.eq.s32.totalorder %s16, 0
    %p64 = por %p62, %p63
    %s66 = sadd.s32 %s65, 1
    %p69 = scmp.eq.s32.totalorder %s10, 1
    %p70 = scmp.ne.s32.totalorder %s65, %s67
    %p71 = scmp.eq.s32.totalorder %s10, 0
    %p72 = por %p70, %p71
    %p73 = scmp.ne.s32.totalorder %s65, %s67
    %p74 = scmp.eq.s32.totalorder %s15, 1
    %p75 = por %p73, %p74
    %p76 = scmp.ne.s32.totalorder %s67, %s68
    %p77 = scmp.eq.s32.totalorder %s15, 0
    %p78 = por %p76, %p77
    %p79 = scmp.ne.s32.totalorder %s67, %s68
    %p80 = scmp.eq.s32.totalorder %s16, 1
    %p81 = por %p79, %p80
    %p83 = scmp.ne.s32.totalorder %s68, %s82
    %p84 = scmp.eq.s32.totalorder %s16, 0
    %p85 = por %p83, %p84
    %s87 = sadd.s32 %s86, 1
    %p90 = scmp.eq.s32.totalorder %s10, 1
    %p91 = scmp.ne.s32.totalorder %s86, %s88
    %p92 = scmp.eq.s32.totalorder %s10, 0
    %p93 = por %p91, %p92
    %p94 = scmp.ne.s32.totalorder %s86, %s88
    %p95 = scmp.eq.s32.totalorder %s15, 1
    %p96 = por %p94, %p95
    %p97 = scmp.ne.s32.totalorder %s88, %s89
    %p98 = scmp.eq.s32.totalorder %s15, 0
    %p99 = por %p97, %p98
    %p100 = scmp.ne.s32.totalorder %s88, %s89
    %p101 = scmp.eq.s32.totalorder %s16, 1
    %p102 = por %p100, %p101
    %p104 = scmp.ne.s32.totalorder %s89, %s103
    %p105 = scmp.eq.s32.totalorder %s16, 0
    %p106 = por %p104, %p105
    %s107 = ssub.s32 %s10, %s17
    %p108 = scmp.eq.s32.totalorder %s107, 0
    %s110 = sadd.s32 %s109, 1
    %s111 = scalar_select %p108, %s109, %s110
    %p114 = pneg %p108
    %p115 = scmp.eq.s32.totalorder %s10, 1
    %p116 = por %p114, %p115
    %p117 = scmp.ne.s32.totalorder %s109, %s112
    %p118 = scmp.eq.s32.totalorder %s10, 0
    %p119 = por %p117, %p118
    %p120 = scmp.ne.s32.totalorder %s109, %s112
    %p121 = scmp.eq.s32.totalorder %s15, 1
    %p122 = por %p120, %p121
    %p123 = scmp.ne.s32.totalorder %s112, %s113
    %p124 = scmp.eq.s32.totalorder %s15, 0
    %p125 = por %p123, %p124
    %p126 = scmp.ne.s32.totalorder %s112, %s113
    %p127 = scmp.eq.s32.totalorder %s16, 1
    %p128 = por %p126, %p127
    %p130 = scmp.ne.s32.totalorder %s113, %s129
    %p131 = scmp.eq.s32.totalorder %s16, 0
    %p132 = por %p130, %p131
    %p133 = scmp.le.s32.totalorder 1, %s10
    %p134 = scmp.lt.s32.totalorder %s10, 3
    %p135 = pnand %p133, %p134
    %p136 = pneg %p135
    // Predicated region
    $region9: #{permute_to_from.1} parent=5 // pred_check
      _
    $region10: #{permute_to_from.1} parent=5 // pred_check_branch
      %138 = sbr.rel (%p135) target = $region12
    $region11: #{permute_to_from.1} parent=5 // pred_region
      %s139 = ssub.s32 %s10, 1
      // Predicated region
      $region13: #{permute_to_from.1} parent=11 // pred_check
        %p140 = pneg %p57
      $region14: #{permute_to_from.1} parent=11 // pred_check_branch
        %142 = sbr.rel (%p140) target = $region16
      $region15: #{permute_to_from.1} parent=11 // pred_region
        _
      $region16: #{permute_to_from.1} parent=11 // pred_fallthru
        _
      // Predicated region
      $region17: #{permute_to_from.1} parent=11 // pred_check
        %p143 = pneg %p78
      $region18: #{permute_to_from.1} parent=11 // pred_check_branch
        %145 = sbr.rel (%p143) target = $region20
      $region19: #{permute_to_from.1} parent=11 // pred_region
        _
      $region20: #{permute_to_from.1} parent=11 // pred_fallthru
        _
      // Predicated region
      $region21: #{permute_to_from.1} parent=11 // pred_check
        %p146 = pneg %p99
      $region22: #{permute_to_from.1} parent=11 // pred_check_branch
        %148 = sbr.rel (%p146) target = $region24
      $region23: #{permute_to_from.1} parent=11 // pred_region
        _
      $region24: #{permute_to_from.1} parent=11 // pred_fallthru
        _
    $region12: #{permute_to_from.1} parent=5 // pred_fallthru
      _
    %p149 = scmp.lt.s32.totalorder %s10, 2
    // Predicated region
    $region25: #{permute_to_from.1} parent=5 // pred_check
      %p150 = pneg %p149
    $region26: #{permute_to_from.1} parent=5 // pred_check_branch
      %152 = sbr.rel (%p150) target = $region28
    $region27: #{permute_to_from.1} parent=5 // pred_region
      // Predicated region
      $region29: #{permute_to_from.1} parent=27 // pred_check
        %p153 = pneg %p30
      $region30: #{permute_to_from.1} parent=27 // pred_check_branch
        %155 = sbr.rel (%p153) target = $region32
      $region31: #{permute_to_from.1} parent=27 // pred_region
        %p156 = scmp.lt.s32.totalorder %s10, 1
        %s157 = scalar_select %p156, %s10, 1
        %s158 = smul.addr %s157, 2
        %s159 = smul.addr %s158, 4
        %s160 = scalar_lea.vmem %s0, %s159
      $region32: #{permute_to_from.1} parent=27 // pred_fallthru
        _
    $region28: #{permute_to_from.1} parent=5 // pred_fallthru
      _
    %p161 = scmp.le.s32.totalorder 1, %s10
    %p162 = scmp.lt.s32.totalorder %s10, 3
    %p163 = pnand %p161, %p162
    %p164 = pneg %p163
    // Predicated region
    $region33: #{permute_to_from.1} parent=5 // pred_check
      _
    $region34: #{permute_to_from.1} parent=5 // pred_check_branch
      %166 = sbr.rel (%p163) target = $region36
    $region35: #{permute_to_from.1} parent=5 // pred_region
      %s167 = ssub.s32 %s10, 1
      %p168 = scmp.lt.s32.totalorder %s15, 1
      %s169 = scalar_select %p168, %s15, 1
      %s170 = smul.addr %s169, 2
      %s171 = smul.addr %s170, 4
      %s172 = scalar_lea.vmem %s0, %s171
      %p173 = pneg %p36
      %p174 = pneg %p33
      %p175 = pneg %p57
      %p176 = pneg %p54
      %p177 = pneg %p78
      %p178 = pneg %p75
      %p179 = pneg %p99
      %p180 = pneg %p96
      %p181 = pneg %p125
      %p182 = pneg %p122
      %p183 = scmp.lt.s32.totalorder %s15, 1
      %s184 = scalar_select %p183, %s15, 1
      %s185 = smul.addr %s184, 2
      %s186 = smul.addr %s185, 4
      %s187 = scalar_lea.vmem %s4, %s186
      %p188 = scmp.lt.s32.totalorder %s15, 1
      %s189 = scalar_select %p188, %s15, 1
      %s190 = smul.addr %s189, 2
      %s191 = smul.addr %s190, 4
      %s192 = scalar_lea.vmem %s0, %s191
      %p193 = scmp.lt.s32.totalorder %s15, 1
      %s194 = scalar_select %p193, %s15, 1
      %s195 = smul.addr %s194, 2
      %s196 = smul.addr %s195, 4
      %s197 = scalar_lea.vmem %s4, %s196
      %v198 = vld [vmem:[%s192] sm:$0xff]
      %v199 = vld [vmem:[%s1] sm:$0xff]
      %v200 = vld [vmem:[%s1 + $0x8] sm:$0xf]
      %202 = vst [vmem:[#allocation1] ss:$2 sm:$0xff] %v198
      %v203 = vld.sshfl [vmem:[#allocation1] sm:$0xff pattern:$0x75316420]
      %v204 = vld.sshfl [vmem:[#allocation1 + $0x8] sm:$0xff pattern:$0x75316420]
      %vm205 = vcmask 31744
      %v207 = vsel %vm205, %v199, 0
      %v210 = vsel %vm205, %v200, 0
      %vm212 = vcmask 1043456
      %v213 = vsel %vm212, %v203, 0
      %v215 = vsel %vm212, %v204, 0
      %217 = vmatpush.msra.mxu0 0.0
      %218 = vmatpush.msra.mxu0 0.0
      %219 = vmatpush.msra.mxu0 0.0
      %220 = vmatpush.msra.mxu0 0.0
      %221 = vmatpush.msra.mxu0 0.0
      %222 = vmatpush.msra.mxu0 0.0
      %223 = vmatpush.msra.mxu0 0.0
      %224 = vmatpush.msra.mxu0 0.0
      %225 = vmatpush.msra.mxu0 0.0
      %226 = vmatpush.msra.mxu0 0.0
      %227 = vmatpush.msra.mxu0 0.0
      %228 = vmatpush.msra.mxu0 0.0
      %229 = vmatpush.msra.mxu0 0.0
      %230 = vmatpush.msra.mxu0 0.0
      %231 = vmatpush.msra.mxu0 0.0
      %232 = vmatpush.msra.mxu0 %v213
      %233 = vmatmul.f32.gmra.mxu0 %v207
      %v234 = vpop.f32.mrf.mxu0
      %v235 = vadd.f32 0.0, %v234
      %236 = vmatmul.f32.gmra.mxu0 %v210
      %v237 = vpop.f32.mrf.mxu0
      %v238 = vadd.f32 0.0, %v237
      %239 = vdwg.mxu0
      %240 = vmatpush.msra.mxu0 0.0
      %241 = vmatpush.msra.mxu0 0.0
      %242 = vmatpush.msra.mxu0 0.0
      %243 = vmatpush.msra.mxu0 0.0
      %244 = vmatpush.msra.mxu0 0.0
      %245 = vmatpush.msra.mxu0 0.0
      %246 = vmatpush.msra.mxu0 0.0
      %247 = vmatpush.msra.mxu0 0.0
      %248 = vmatpush.msra.mxu0 0.0
      %249 = vmatpush.msra.mxu0 0.0
      %250 = vmatpush.msra.mxu0 0.0
      %251 = vmatpush.msra.mxu0 0.0
      %252 = vmatpush.msra.mxu0 0.0
      %253 = vmatpush.msra.mxu0 0.0
      %254 = vmatpush.msra.mxu0 0.0
      %255 = vmatpush.msra.mxu0 %v215
      %256 = vmatmul.f32.gmra.mxu0 %v207
      %v257 = vpop.f32.mrf.mxu0
      %v258 = vadd.f32 0.0, %v257
      %259 = vmatmul.f32.gmra.mxu0 %v210
      %v260 = vpop.f32.mrf.mxu0
      %v261 = vadd.f32 0.0, %v260
      %262 = vdwg.mxu0
      %v263 = vlaneseq
      %v264 = vshrl.u32 %v263, 7
      %v265 = vadd.s32 %v264, 8
      %v266 = vadd.s32 %v264, 16
      %v267 = vadd.s32 %v264, 24
      %v268 = vadd.s32 %v264, 32
      %v269 = vadd.s32 %v264, 40
      %v270 = vadd.s32 %v264, 48
      %v271 = vadd.s32 %v264, 56
      %v272 = vadd.s32 %v264, 64
      %v273 = vadd.s32 %v264, 72
      %v274 = vadd.s32 %v264, 80
      %v275 = vadd.s32 %v264, 88
      %v276 = vadd.s32 %v264, 96
      %v277 = vadd.s32 %v264, 104
      %v278 = vadd.s32 %v264, 112
      %v279 = vadd.s32 %v264, 120
      %v280 = vadd.s32 %v264, 128
      %v281 = vadd.s32 %v264, 136
      %v282 = vadd.s32 %v264, 144
      %v283 = vadd.s32 %v264, 152
      %v284 = vadd.s32 %v264, 160
      %v285 = vadd.s32 %v264, 168
      %v286 = vadd.s32 %v264, 176
      %v287 = vadd.s32 %v264, 184
      %v288 = vadd.s32 %v264, 192
      %v289 = vadd.s32 %v264, 200
      %v290 = vadd.s32 %v264, 208
      %v291 = vadd.s32 %v264, 216
      %v292 = vadd.s32 %v264, 224
      %v293 = vadd.s32 %v264, 232
      %v294 = vadd.s32 %v264, 240
      %v295 = vadd.s32 %v264, 248
      %vm296 = vcmp.lt.s32.totalorder %v264, 0
      %v297 = vsub.s32 0, %v264
      %v298 = vsel %vm296, %v297, %v264
      %v299 = vshrl.u32 %v298, 4
      %v300 = vand.u32 %v298, 15
      %v301 = vsub.s32 0, %v300
      %v302 = vsel %vm296, %v301, %v300
      %vm303 = vcmp.lt.s32.totalorder %v265, 0
      %v304 = vsub.s32 0, %v265
      %v305 = vsel %vm303, %v304, %v265
      %v306 = vshrl.u32 %v305, 4
      %v307 = vand.u32 %v305, 15
      %v308 = vsub.s32 0, %v307
      %v309 = vsel %vm303, %v308, %v307
      %vm310 = vcmp.lt.s32.totalorder %v266, 0
      %v311 = vsub.s32 0, %v266
      %v312 = vsel %vm310, %v311, %v266
      %v313 = vshrl.u32 %v312, 4
      %v314 = vand.u32 %v312, 15
      %v315 = vsub.s32 0, %v314
      %v316 = vsel %vm310, %v315, %v314
      %vm317 = vcmp.lt.s32.totalorder %v267, 0
      %v318 = vsub.s32 0, %v267
      %v319 = vsel %vm317, %v318, %v267
      %v320 = vshrl.u32 %v319, 4
      %v321 = vand.u32 %v319, 15
      %v322 = vsub.s32 0, %v321
      %v323 = vsel %vm317, %v322, %v321
      %vm324 = vcmp.lt.s32.totalorder %v268, 0
      %v325 = vsub.s32 0, %v268
      %v326 = vsel %vm324, %v325, %v268
      %v327 = vshrl.u32 %v326, 4
      %v328 = vand.u32 %v326, 15
      %v329 = vsub.s32 0, %v328
      %v330 = vsel %vm324, %v329, %v328
      %vm331 = vcmp.lt.s32.totalorder %v269, 0
      %v332 = vsub.s32 0, %v269
      %v333 = vsel %vm331, %v332, %v269
      %v334 = vshrl.u32 %v333, 4
      %v335 = vand.u32 %v333, 15
      %v336 = vsub.s32 0, %v335
      %v337 = vsel %vm331, %v336, %v335
      %vm338 = vcmp.lt.s32.totalorder %v270, 0
      %v339 = vsub.s32 0, %v270
      %v340 = vsel %vm338, %v339, %v270
      %v341 = vshrl.u32 %v340, 4
      %v342 = vand.u32 %v340, 15
      %v343 = vsub.s32 0, %v342
      %v344 = vsel %vm338, %v343, %v342
      %vm345 = vcmp.lt.s32.totalorder %v271, 0
      %v346 = vsub.s32 0, %v271
      %v347 = vsel %vm345, %v346, %v271
      %v348 = vshrl.u32 %v347, 4
      %v349 = vand.u32 %v347, 15
      %v350 = vsub.s32 0, %v349
      %v351 = vsel %vm345, %v350, %v349
      %vm352 = vcmp.lt.s32.totalorder %v272, 0
      %v353 = vsub.s32 0, %v272
      %v354 = vsel %vm352, %v353, %v272
      %v355 = vshrl.u32 %v354, 4
      %v356 = vand.u32 %v354, 15
      %v357 = vsub.s32 0, %v356
      %v358 = vsel %vm352, %v357, %v356
      %vm359 = vcmp.lt.s32.totalorder %v273, 0
      %v360 = vsub.s32 0, %v273
      %v361 = vsel %vm359, %v360, %v273
      %v362 = vshrl.u32 %v361, 4
      %v363 = vand.u32 %v361, 15
      %v364 = vsub.s32 0, %v363
      %v365 = vsel %vm359, %v364, %v363
      %vm366 = vcmp.lt.s32.totalorder %v274, 0
      %v367 = vsub.s32 0, %v274
      %v368 = vsel %vm366, %v367, %v274
      %v369 = vshrl.u32 %v368, 4
      %v370 = vand.u32 %v368, 15
      %v371 = vsub.s32 0, %v370
      %v372 = vsel %vm366, %v371, %v370
      %vm373 = vcmp.lt.s32.totalorder %v275, 0
      %v374 = vsub.s32 0, %v275
      %v375 = vsel %vm373, %v374, %v275
      %v376 = vshrl.u32 %v375, 4
      %v377 = vand.u32 %v375, 15
      %v378 = vsub.s32 0, %v377
      %v379 = vsel %vm373, %v378, %v377
      %vm380 = vcmp.lt.s32.totalorder %v276, 0
      %v381 = vsub.s32 0, %v276
      %v382 = vsel %vm380, %v381, %v276
      %v383 = vshrl.u32 %v382, 4
      %v384 = vand.u32 %v382, 15
      %v385 = vsub.s32 0, %v384
      %v386 = vsel %vm380, %v385, %v384
      %vm387 = vcmp.lt.s32.totalorder %v277, 0
      %v388 = vsub.s32 0, %v277
      %v389 = vsel %vm387, %v388, %v277
      %v390 = vshrl.u32 %v389, 4
      %v391 = vand.u32 %v389, 15
      %v392 = vsub.s32 0, %v391
      %v393 = vsel %vm387, %v392, %v391
      %vm394 = vcmp.lt.s32.totalorder %v278, 0
      %v395 = vsub.s32 0, %v278
      %v396 = vsel %vm394, %v395, %v278
      %v397 = vshrl.u32 %v396, 4
      %v398 = vand.u32 %v396, 15
      %v399 = vsub.s32 0, %v398
      %v400 = vsel %vm394, %v399, %v398
      %vm401 = vcmp.lt.s32.totalorder %v279, 0
      %v402 = vsub.s32 0, %v279
      %v403 = vsel %vm401, %v402, %v279
      %v404 = vshrl.u32 %v403, 4
      %v405 = vand.u32 %v403, 15
      %v406 = vsub.s32 0, %v405
      %v407 = vsel %vm401, %v406, %v405
      %vm408 = vcmp.lt.s32.totalorder %v280, 0
      %v409 = vsub.s32 0, %v280
      %v410 = vsel %vm408, %v409, %v280
      %v411 = vshrl.u32 %v410, 4
      %v412 = vand.u32 %v410, 15
      %v413 = vsub.s32 0, %v412
      %v414 = vsel %vm408, %v413, %v412
      %vm415 = vcmp.lt.s32.totalorder %v281, 0
      %v416 = vsub.s32 0, %v281
      %v417 = vsel %vm415, %v416, %v281
      %v418 = vshrl.u32 %v417, 4
      %v419 = vand.u32 %v417, 15
      %v420 = vsub.s32 0, %v419
      %v421 = vsel %vm415, %v420, %v419
      %vm422 = vcmp.lt.s32.totalorder %v282, 0
      %v423 = vsub.s32 0, %v282
      %v424 = vsel %vm422, %v423, %v282
      %v425 = vshrl.u32 %v424, 4
      %v426 = vand.u32 %v424, 15
      %v427 = vsub.s32 0, %v426
      %v428 = vsel %vm422, %v427, %v426
      %vm429 = vcmp.lt.s32.totalorder %v283, 0
      %v430 = vsub.s32 0, %v283
      %v431 = vsel %vm429, %v430, %v283
      %v432 = vshrl.u32 %v431, 4
      %v433 = vand.u32 %v431, 15
      %v434 = vsub.s32 0, %v433
      %v435 = vsel %vm429, %v434, %v433
      %vm436 = vcmp.lt.s32.totalorder %v284, 0
      %v437 = vsub.s32 0, %v284
      %v438 = vsel %vm436, %v437, %v284
      %v439 = vshrl.u32 %v438, 4
      %v440 = vand.u32 %v438, 15
      %v441 = vsub.s32 0, %v440
      %v442 = vsel %vm436, %v441, %v440
      %vm443 = vcmp.lt.s32.totalorder %v285, 0
      %v444 = vsub.s32 0, %v285
      %v445 = vsel %vm443, %v444, %v285
      %v446 = vshrl.u32 %v445, 4
      %v447 = vand.u32 %v445, 15
      %v448 = vsub.s32 0, %v447
      %v449 = vsel %vm443, %v448, %v447
      %vm450 = vcmp.lt.s32.totalorder %v286, 0
      %v451 = vsub.s32 0, %v286
      %v452 = vsel %vm450, %v451, %v286
      %v453 = vshrl.u32 %v452, 4
      %v454 = vand.u32 %v452, 15
      %v455 = vsub.s32 0, %v454
      %v456 = vsel %vm450, %v455, %v454
      %vm457 = vcmp.lt.s32.totalorder %v287, 0
      %v458 = vsub.s32 0, %v287
      %v459 = vsel %vm457, %v458, %v287
      %v460 = vshrl.u32 %v459, 4
      %v461 = vand.u32 %v459, 15
      %v462 = vsub.s32 0, %v461
      %v463 = vsel %vm457, %v462, %v461
      %vm464 = vcmp.lt.s32.totalorder %v288, 0
      %v465 = vsub.s32 0, %v288
      %v466 = vsel %vm464, %v465, %v288
      %v467 = vshrl.u32 %v466, 4
      %v468 = vand.u32 %v466, 15
      %v469 = vsub.s32 0, %v468
      %v470 = vsel %vm464, %v469, %v468
      %vm471 = vcmp.lt.s32.totalorder %v289, 0
      %v472 = vsub.s32 0, %v289
      %v473 = vsel %vm471, %v472, %v289
      %v474 = vshrl.u32 %v473, 4
      %v475 = vand.u32 %v473, 15
      %v476 = vsub.s32 0, %v475
      %v477 = vsel %vm471, %v476, %v475
      %vm478 = vcmp.lt.s32.totalorder %v290, 0
      %v479 = vsub.s32 0, %v290
      %v480 = vsel %vm478, %v479, %v290
      %v481 = vshrl.u32 %v480, 4
      %v482 = vand.u32 %v480, 15
      %v483 = vsub.s32 0, %v482
      %v484 = vsel %vm478, %v483, %v482
      %vm485 = vcmp.lt.s32.totalorder %v291, 0
      %v486 = vsub.s32 0, %v291
      %v487 = vsel %vm485, %v486, %v291
      %v488 = vshrl.u32 %v487, 4
      %v489 = vand.u32 %v487, 15
      %v490 = vsub.s32 0, %v489
      %v491 = vsel %vm485, %v490, %v489
      %vm492 = vcmp.lt.s32.totalorder %v292, 0
      %v493 = vsub.s32 0, %v292
      %v494 = vsel %vm492, %v493, %v292
      %v495 = vshrl.u32 %v494, 4
      %v496 = vand.u32 %v494, 15
      %v497 = vsub.s32 0, %v496
      %v498 = vsel %vm492, %v497, %v496
      %vm499 = vcmp.lt.s32.totalorder %v293, 0
      %v500 = vsub.s32 0, %v293
      %v501 = vsel %vm499, %v500, %v293
      %v502 = vshrl.u32 %v501, 4
      %v503 = vand.u32 %v501, 15
      %v504 = vsub.s32 0, %v503
      %v505 = vsel %vm499, %v504, %v503
      %vm506 = vcmp.lt.s32.totalorder %v294, 0
      %v507 = vsub.s32 0, %v294
      %v508 = vsel %vm506, %v507, %v294
      %v509 = vshrl.u32 %v508, 4
      %v510 = vand.u32 %v508, 15
      %v511 = vsub.s32 0, %v510
      %v512 = vsel %vm506, %v511, %v510
      %vm513 = vcmp.lt.s32.totalorder %v295, 0
      %v514 = vsub.s32 0, %v295
      %v515 = vsel %vm513, %v514, %v295
      %v516 = vshrl.u32 %v515, 4
      %v517 = vand.u32 %v515, 15
      %v518 = vsub.s32 0, %v517
      %v519 = vsel %vm513, %v518, %v517
      %vm520 = vcmp.ne.s32.totalorder %v302, 0
      %vm521 = vcmp.ne.s32.totalorder %v309, 0
      %vm522 = vcmp.ne.s32.totalorder %v316, 0
      %vm523 = vcmp.ne.s32.totalorder %v323, 0
      %vm524 = vcmp.ne.s32.totalorder %v330, 0
      %vm525 = vcmp.ne.s32.totalorder %v337, 0
      %vm526 = vcmp.ne.s32.totalorder %v344, 0
      %vm527 = vcmp.ne.s32.totalorder %v351, 0
      %vm528 = vcmp.ne.s32.totalorder %v358, 0
      %vm529 = vcmp.ne.s32.totalorder %v365, 0
      %vm530 = vcmp.ne.s32.totalorder %v372, 0
      %vm531 = vcmp.ne.s32.totalorder %v379, 0
      %vm532 = vcmp.ne.s32.totalorder %v386, 0
      %vm533 = vcmp.ne.s32.totalorder %v393, 0
      %vm534 = vcmp.ne.s32.totalorder %v400, 0
      %vm535 = vcmp.ne.s32.totalorder %v407, 0
      %vm536 = vcmp.ne.s32.totalorder %v414, 0
      %vm537 = vcmp.ne.s32.totalorder %v421, 0
      %vm538 = vcmp.ne.s32.totalorder %v428, 0
      %vm539 = vcmp.ne.s32.totalorder %v435, 0
      %vm540 = vcmp.ne.s32.totalorder %v442, 0
      %vm541 = vcmp.ne.s32.totalorder %v449, 0
      %vm542 = vcmp.ne.s32.totalorder %v456, 0
      %vm543 = vcmp.ne.s32.totalorder %v463, 0
      %vm544 = vcmp.ne.s32.totalorder %v470, 0
      %vm545 = vcmp.ne.s32.totalorder %v477, 0
      %vm546 = vcmp.ne.s32.totalorder %v484, 0
      %vm547 = vcmp.ne.s32.totalorder %v491, 0
      %vm548 = vcmp.ne.s32.totalorder %v498, 0
      %vm549 = vcmp.ne.s32.totalorder %v505, 0
      %vm550 = vcmp.ne.s32.totalorder %v512, 0
      %vm551 = vcmp.ne.s32.totalorder %v519, 0
      %vm552 = vcmp.lt.s32.totalorder %v302, 0
      %vm553 = vcmp.lt.s32.totalorder %v309, 0
      %vm554 = vcmp.lt.s32.totalorder %v316, 0
      %vm555 = vcmp.lt.s32.totalorder %v323, 0
      %vm556 = vcmp.lt.s32.totalorder %v330, 0
      %vm557 = vcmp.lt.s32.totalorder %v337, 0
      %vm558 = vcmp.lt.s32.totalorder %v344, 0
      %vm559 = vcmp.lt.s32.totalorder %v351, 0
      %vm560 = vcmp.lt.s32.totalorder %v358, 0
      %vm561 = vcmp.lt.s32.totalorder %v365, 0
      %vm562 = vcmp.lt.s32.totalorder %v372, 0
      %vm563 = vcmp.lt.s32.totalorder %v379, 0
      %vm564 = vcmp.lt.s32.totalorder %v386, 0
      %vm565 = vcmp.lt.s32.totalorder %v393, 0
      %vm566 = vcmp.lt.s32.totalorder %v400, 0
      %vm567 = vcmp.lt.s32.totalorder %v407, 0
      %vm568 = vcmp.lt.s32.totalorder %v414, 0
      %vm569 = vcmp.lt.s32.totalorder %v421, 0
      %vm570 = vcmp.lt.s32.totalorder %v428, 0
      %vm571 = vcmp.lt.s32.totalorder %v435, 0
      %vm572 = vcmp.lt.s32.totalorder %v442, 0
      %vm573 = vcmp.lt.s32.totalorder %v449, 0
      %vm574 = vcmp.lt.s32.totalorder %v456, 0
      %vm575 = vcmp.lt.s32.totalorder %v463, 0
      %vm576 = vcmp.lt.s32.totalorder %v470, 0
      %vm577 = vcmp.lt.s32.totalorder %v477, 0
      %vm578 = vcmp.lt.s32.totalorder %v484, 0
      %vm579 = vcmp.lt.s32.totalorder %v491, 0
      %vm580 = vcmp.lt.s32.totalorder %v498, 0
      %vm581 = vcmp.lt.s32.totalorder %v505, 0
      %vm582 = vcmp.lt.s32.totalorder %v512, 0
      %vm583 = vcmp.lt.s32.totalorder %v519, 0
      %vm584 = vmand %vm552, %vm520
      %vm585 = vmand %vm553, %vm521
      %vm586 = vmand %vm554, %vm522
      %vm587 = vmand %vm555, %vm523
      %vm588 = vmand %vm556, %vm524
      %vm589 = vmand %vm557, %vm525
      %vm590 = vmand %vm558, %vm526
      %vm591 = vmand %vm559, %vm527
      %vm592 = vmand %vm560, %vm528
      %vm593 = vmand %vm561, %vm529
      %vm594 = vmand %vm562, %vm530
      %vm595 = vmand %vm563, %vm531
      %vm596 = vmand %vm564, %vm532
      %vm597 = vmand %vm565, %vm533
      %vm598 = vmand %vm566, %vm534
      %vm599 = vmand %vm567, %vm535
      %vm600 = vmand %vm568, %vm536
      %vm601 = vmand %vm569, %vm537
      %vm602 = vmand %vm570, %vm538
      %vm603 = vmand %vm571, %vm539
      %vm604 = vmand %vm572, %vm540
      %vm605 = vmand %vm573, %vm541
      %vm606 = vmand %vm574, %vm542
      %vm607 = vmand %vm575, %vm543
      %vm608 = vmand %vm576, %vm544
      %vm609 = vmand %vm577, %vm545
      %vm610 = vmand %vm578, %vm546
      %vm611 = vmand %vm579, %vm547
      %vm612 = vmand %vm580, %vm548
      %vm613 = vmand %vm581, %vm549
      %vm614 = vmand %vm582, %vm550
      %vm615 = vmand %vm583, %vm551
      %v616 = vadd.s32 %v302, 16
      %v617 = vadd.s32 %v309, 16
      %v618 = vadd.s32 %v316, 16
      %v619 = vadd.s32 %v323, 16
      %v620 = vadd.s32 %v330, 16
      %v621 = vadd.s32 %v337, 16
      %v622 = vadd.s32 %v344, 16
      %v623 = vadd.s32 %v351, 16
      %v624 = vadd.s32 %v358, 16
      %v625 = vadd.s32 %v365, 16
      %v626 = vadd.s32 %v372, 16
      %v627 = vadd.s32 %v379, 16
      %v628 = vadd.s32 %v386, 16
      %v629 = vadd.s32 %v393, 16
      %v630 = vadd.s32 %v400, 16
      %v631 = vadd.s32 %v407, 16
      %v632 = vadd.s32 %v414, 16
      %v633 = vadd.s32 %v421, 16
      %v634 = vadd.s32 %v428, 16
      %v635 = vadd.s32 %v435, 16
      %v636 = vadd.s32 %v442, 16
      %v637 = vadd.s32 %v449, 16
      %v638 = vadd.s32 %v456, 16
      %v639 = vadd.s32 %v463, 16
      %v640 = vadd.s32 %v470, 16
      %v641 = vadd.s32 %v477, 16
      %v642 = vadd.s32 %v484, 16
      %v643 = vadd.s32 %v491, 16
      %v644 = vadd.s32 %v498, 16
      %v645 = vadd.s32 %v505, 16
      %v646 = vadd.s32 %v512, 16
      %v647 = vadd.s32 %v519, 16
      %v648 = vsel %vm584, %v616, %v302
      %v649 = vsel %vm585, %v617, %v309
      %v650 = vsel %vm586, %v618, %v316
      %v651 = vsel %vm587, %v619, %v323
      %v652 = vsel %vm588, %v620, %v330
      %v653 = vsel %vm589, %v621, %v337
      %v654 = vsel %vm590, %v622, %v344
      %v655 = vsel %vm591, %v623, %v351
      %v656 = vsel %vm592, %v624, %v358
      %v657 = vsel %vm593, %v625, %v365
      %v658 = vsel %vm594, %v626, %v372
      %v659 = vsel %vm595, %v627, %v379
      %v660 = vsel %vm596, %v628, %v386
      %v661 = vsel %vm597, %v629, %v393
      %v662 = vsel %vm598, %v630, %v400
      %v663 = vsel %vm599, %v631, %v407
      %v664 = vsel %vm600, %v632, %v414
      %v665 = vsel %vm601, %v633, %v421
      %v666 = vsel %vm602, %v634, %v428
      %v667 = vsel %vm603, %v635, %v435
      %v668 = vsel %vm604, %v636, %v442
      %v669 = vsel %vm605, %v637, %v449
      %v670 = vsel %vm606, %v638, %v456
      %v671 = vsel %vm607, %v639, %v463
      %v672 = vsel %vm608, %v640, %v470
      %v673 = vsel %vm609, %v641, %v477
      %v674 = vsel %vm610, %v642, %v484
      %v675 = vsel %vm611, %v643, %v491
      %v676 = vsel %vm612, %v644, %v498
      %v677 = vsel %vm613, %v645, %v505
      %v678 = vsel %vm614, %v646, %v512
      %v679 = vsel %vm615, %v647, %v519
      %v680 = vlaneseq
      %v681 = vand.u32 %v680, 127
      %v682 = vadd.s32 %v681, 128
      %vm683 = vcmp.lt.s32.totalorder %v681, 0
      %v684 = vsub.s32 0, %v681
      %v685 = vsel %vm683, %v684, %v681
      %v686 = vshrl.u32 %v685, 4
      %v687 = vand.u32 %v685, 15
      %v688 = vsub.s32 0, %v687
      %v689 = vsel %vm683, %v688, %v687
      %vm690 = vcmp.lt.s32.totalorder %v682, 0
      %v691 = vsub.s32 0, %v682
      %v692 = vsel %vm690, %v691, %v682
      %v693 = vshrl.u32 %v692, 4
      %v694 = vand.u32 %v692, 15
      %v695 = vsub.s32 0, %v694
      %v696 = vsel %vm690, %v695, %v694
      %vm697 = vcmp.ne.s32.totalorder %v689, 0
      %vm698 = vcmp.ne.s32.totalorder %v696, 0
      %vm699 = vcmp.lt.s32.totalorder %v689, 0
      %vm700 = vcmp.lt.s32.totalorder %v696, 0
      %vm701 = vmand %vm699, %vm697
      %vm702 = vmand %vm700, %vm698
      %v703 = vadd.s32 %v689, 16
      %v704 = vadd.s32 %v696, 16
      %v705 = vsel %vm701, %v703, %v689
      %v706 = vsel %vm702, %v704, %v696
      %vm707 = vcmp.eq.s32.totalorder %v648, %v705
      %vm708 = vcmp.eq.s32.totalorder %v648, %v706
      %vm709 = vcmp.eq.s32.totalorder %v649, %v705
      %vm710 = vcmp.eq.s32.totalorder %v649, %v706
      %vm711 = vcmp.eq.s32.totalorder %v650, %v705
      %vm712 = vcmp.eq.s32.totalorder %v650, %v706
      %vm713 = vcmp.eq.s32.totalorder %v651, %v705
      %vm714 = vcmp.eq.s32.totalorder %v651, %v706
      %vm715 = vcmp.eq.s32.totalorder %v652, %v705
      %vm716 = vcmp.eq.s32.totalorder %v652, %v706
      %vm717 = vcmp.eq.s32.totalorder %v653, %v705
      %vm718 = vcmp.eq.s32.totalorder %v653, %v706
      %vm719 = vcmp.eq.s32.totalorder %v654, %v705
      %vm720 = vcmp.eq.s32.totalorder %v654, %v706
      %vm721 = vcmp.eq.s32.totalorder %v655, %v705
      %vm722 = vcmp.eq.s32.totalorder %v655, %v706
      %vm723 = vcmp.eq.s32.totalorder %v656, %v705
      %vm724 = vcmp.eq.s32.totalorder %v656, %v706
      %vm725 = vcmp.eq.s32.totalorder %v657, %v705
      %vm726 = vcmp.eq.s32.totalorder %v657, %v706
      %vm727 = vcmp.eq.s32.totalorder %v658, %v705
      %vm728 = vcmp.eq.s32.totalorder %v658, %v706
      %vm729 = vcmp.eq.s32.totalorder %v659, %v705
      %vm730 = vcmp.eq.s32.totalorder %v659, %v706
      %vm731 = vcmp.eq.s32.totalorder %v660, %v705
      %vm732 = vcmp.eq.s32.totalorder %v660, %v706
      %vm733 = vcmp.eq.s32.totalorder %v661, %v705
      %vm734 = vcmp.eq.s32.totalorder %v661, %v706
      %vm735 = vcmp.eq.s32.totalorder %v662, %v705
      %vm736 = vcmp.eq.s32.totalorder %v662, %v706
      %vm737 = vcmp.eq.s32.totalorder %v663, %v705
      %vm738 = vcmp.eq.s32.totalorder %v663, %v706
      %vm739 = vcmp.eq.s32.totalorder %v664, %v705
      %vm740 = vcmp.eq.s32.totalorder %v664, %v706
      %vm741 = vcmp.eq.s32.totalorder %v665, %v705
      %vm742 = vcmp.eq.s32.totalorder %v665, %v706
      %vm743 = vcmp.eq.s32.totalorder %v666, %v705
      %vm744 = vcmp.eq.s32.totalorder %v666, %v706
      %vm745 = vcmp.eq.s32.totalorder %v667, %v705
      %vm746 = vcmp.eq.s32.totalorder %v667, %v706
      %vm747 = vcmp.eq.s32.totalorder %v668, %v705
      %vm748 = vcmp.eq.s32.totalorder %v668, %v706
      %vm749 = vcmp.eq.s32.totalorder %v669, %v705
      %vm750 = vcmp.eq.s32.totalorder %v669, %v706
      %vm751 = vcmp.eq.s32.totalorder %v670, %v705
      %vm752 = vcmp.eq.s32.totalorder %v670, %v706
      %vm753 = vcmp.eq.s32.totalorder %v671, %v705
      %vm754 = vcmp.eq.s32.totalorder %v671, %v706
      %vm755 = vcmp.eq.s32.totalorder %v672, %v705
      %vm756 = vcmp.eq.s32.totalorder %v672, %v706
      %vm757 = vcmp.eq.s32.totalorder %v673, %v705
      %vm758 = vcmp.eq.s32.totalorder %v673, %v706
      %vm759 = vcmp.eq.s32.totalorder %v674, %v705
      %vm760 = vcmp.eq.s32.totalorder %v674, %v706
      %vm761 = vcmp.eq.s32.totalorder %v675, %v705
      %vm762 = vcmp.eq.s32.totalorder %v675, %v706
      %vm763 = vcmp.eq.s32.totalorder %v676, %v705
      %vm764 = vcmp.eq.s32.totalorder %v676, %v706
      %vm765 = vcmp.eq.s32.totalorder %v677, %v705
      %vm766 = vcmp.eq.s32.totalorder %v677, %v706
      %vm767 = vcmp.eq.s32.totalorder %v678, %v705
      %vm768 = vcmp.eq.s32.totalorder %v678, %v706
      %vm769 = vcmp.eq.s32.totalorder %v679, %v705
      %vm770 = vcmp.eq.s32.totalorder %v679, %v706
      %771 = vxpose.xlu0.b32.start [1/16] %v235, 128
      %772 = vxpose.xlu0.b32.cont [2/16] 0.0, 128
      %773 = vxpose.xlu0.b32.cont [3/16] 0.0, 128
      %774 = vxpose.xlu0.b32.cont [4/16] 0.0, 128
      %775 = vxpose.xlu0.b32.cont [5/16] 0.0, 128
      %776 = vxpose.xlu0.b32.cont [6/16] 0.0, 128
      %777 = vxpose.xlu0.b32.cont [7/16] 0.0, 128
      %778 = vxpose.xlu0.b32.cont [8/16] 0.0, 128
      %779 = vxpose.xlu0.b32.cont [9/16] 0.0, 128
      %780 = vxpose.xlu0.b32.cont [10/16] 0.0, 128
      %781 = vxpose.xlu0.b32.cont [11/16] 0.0, 128
      %782 = vxpose.xlu0.b32.cont [12/16] 0.0, 128
      %783 = vxpose.xlu0.b32.cont [13/16] 0.0, 128
      %784 = vxpose.xlu0.b32.cont [14/16] 0.0, 128
      %785 = vxpose.xlu0.b32.cont [15/16] 0.0, 128
      %786 = vxpose.xlu0.b32.end [16/16] 0.0, 128
      %v787 = vpop.trf.xlu0
      %v788 = vpop.trf.xlu0
      %v789 = vpop.trf.xlu0
      %v790 = vpop.trf.xlu0
      %v791 = vpop.trf.xlu0
      %v792 = vpop.trf.xlu0
      %v793 = vpop.trf.xlu0
      %v794 = vpop.trf.xlu0
      %v795 = vpop.trf.xlu0
      %v796 = vpop.trf.xlu0
      %v797 = vpop.trf.xlu0
      %v798 = vpop.trf.xlu0
      %v799 = vpop.trf.xlu0
      %v800 = vpop.trf.xlu0
      %v801 = vpop.trf.xlu0
      %v802 = vpop.trf.xlu0
      %803 = vxpose.xlu0.b32.start [1/16] %v258, 128
      %804 = vxpose.xlu0.b32.cont [2/16] 0.0, 128
      %805 = vxpose.xlu0.b32.cont [3/16] 0.0, 128
      %806 = vxpose.xlu0.b32.cont [4/16] 0.0, 128
      %807 = vxpose.xlu0.b32.cont [5/16] 0.0, 128
      %808 = vxpose.xlu0.b32.cont [6/16] 0.0, 128
      %809 = vxpose.xlu0.b32.cont [7/16] 0.0, 128
      %810 = vxpose.xlu0.b32.cont [8/16] 0.0, 128
      %811 = vxpose.xlu0.b32.cont [9/16] 0.0, 128
      %812 = vxpose.xlu0.b32.cont [10/16] 0.0, 128
      %813 = vxpose.xlu0.b32.cont [11/16] 0.0, 128
      %814 = vxpose.xlu0.b32.cont [12/16] 0.0, 128
      %815 = vxpose.xlu0.b32.cont [13/16] 0.0, 128
      %816 = vxpose.xlu0.b32.cont [14/16] 0.0, 128
      %817 = vxpose.xlu0.b32.cont [15/16] 0.0, 128
      %818 = vxpose.xlu0.b32.end [16/16] 0.0, 128
      %v819 = vpop.trf.xlu0
      %v820 = vpop.trf.xlu0
      %v821 = vpop.trf.xlu0
      %v822 = vpop.trf.xlu0
      %v823 = vpop.trf.xlu0
      %v824 = vpop.trf.xlu0
      %v825 = vpop.trf.xlu0
      %v826 = vpop.trf.xlu0
      %v827 = vpop.trf.xlu0
      %v828 = vpop.trf.xlu0
      %v829 = vpop.trf.xlu0
      %v830 = vpop.trf.xlu0
      %v831 = vpop.trf.xlu0
      %v832 = vpop.trf.xlu0
      %v833 = vpop.trf.xlu0
      %v834 = vpop.trf.xlu0
      %v837 = vrot.slane %v235, 4
      %v838 = vrot.slane %v258, 4
      %vm839 = vcmask 15360
      %v841 = vsel %vm839, %v787, 0
      %v844 = vsel %vm839, %v788, 0
      %v847 = vsel %vm839, %v789, 0
      %v850 = vsel %vm839, %v790, 0
      %v853 = vsel %vm839, %v791, 0
      %v856 = vsel %vm839, %v792, 0
      %v859 = vsel %vm839, %v793, 0
      %v862 = vsel %vm839, %v794, 0
      %v865 = vsel %vm839, %v795, 0
      %v868 = vsel %vm839, %v796, 0
      %v871 = vsel %vm839, %v797, 0
      %v874 = vsel %vm839, %v798, 0
      %v877 = vsel %vm839, %v799, 0
      %v880 = vsel %vm839, %v800, 0
      %v883 = vsel %vm839, %v801, 0
      %v886 = vsel %vm839, %v802, 0
      %v889 = vsel %vm839, %v819, 0
      %v892 = vsel %vm839, %v820, 0
      %v895 = vsel %vm839, %v821, 0
      %v898 = vsel %vm839, %v822, 0
      %v901 = vsel %vm839, %v823, 0
      %v904 = vsel %vm839, %v824, 0
      %v907 = vsel %vm839, %v825, 0
      %v910 = vsel %vm839, %v826, 0
      %v913 = vsel %vm839, %v827, 0
      %v916 = vsel %vm839, %v828, 0
      %v919 = vsel %vm839, %v829, 0
      %v922 = vsel %vm839, %v830, 0
      %v925 = vsel %vm839, %v831, 0
      %v928 = vsel %vm839, %v832, 0
      %v931 = vsel %vm839, %v833, 0
      %v934 = vsel %vm839, %v834, 0
      %vm936 = vcmask 1041408
      %v937 = vsel %vm936, %v837, 0
      %v939 = vsel %vm936, %v838, 0
      %941 = vmatpush.msra.mxu0 0.0
      %942 = vmatpush.msra.mxu0 0.0
      %943 = vmatpush.msra.mxu0 0.0
      %944 = vmatpush.msra.mxu0 0.0
      %945 = vmatpush.msra.mxu0 0.0
      %946 = vmatpush.msra.mxu0 0.0
      %947 = vmatpush.msra.mxu0 0.0
      %948 = vmatpush.msra.mxu0 0.0
      %949 = vmatpush.msra.mxu0 0.0
      %950 = vmatpush.msra.mxu0 0.0
      %951 = vmatpush.msra.mxu0 0.0
      %952 = vmatpush.msra.mxu0 0.0
      %953 = vmatpush.msra.mxu0 0.0
      %954 = vmatpush.msra.mxu0 0.0
      %955 = vmatpush.msra.mxu0 0.0
      %956 = vmatpush.msra.mxu0 %v937
      %957 = vmatmul.f32.gmra.mxu0 %v841
      %v958 = vpop.f32.mrf.mxu0
      %v959 = vadd.f32 0.0, %v958
      %960 = vmatmul.f32.gmra.mxu0 %v844
      %v961 = vpop.f32.mrf.mxu0
      %v962 = vadd.f32 0.0, %v961
      %963 = vmatmul.f32.gmra.mxu0 %v847
      %v964 = vpop.f32.mrf.mxu0
      %v965 = vadd.f32 0.0, %v964
      %966 = vmatmul.f32.gmra.mxu0 %v850
      %v967 = vpop.f32.mrf.mxu0
      %v968 = vadd.f32 0.0, %v967
      %969 = vmatmul.f32.gmra.mxu0 %v853
      %v970 = vpop.f32.mrf.mxu0
      %v971 = vadd.f32 0.0, %v970
      %972 = vmatmul.f32.gmra.mxu0 %v856
      %v973 = vpop.f32.mrf.mxu0
      %v974 = vadd.f32 0.0, %v973
      %975 = vmatmul.f32.gmra.mxu0 %v859
      %v976 = vpop.f32.mrf.mxu0
      %v977 = vadd.f32 0.0, %v976
      %978 = vmatmul.f32.gmra.mxu0 %v862
      %v979 = vpop.f32.mrf.mxu0
      %v980 = vadd.f32 0.0, %v979
      %981 = vmatmul.f32.gmra.mxu0 %v865
      %v982 = vpop.f32.mrf.mxu0
      %v983 = vadd.f32 0.0, %v982
      %984 = vmatmul.f32.gmra.mxu0 %v868
      %v985 = vpop.f32.mrf.mxu0
      %v986 = vadd.f32 0.0, %v985
      %987 = vmatmul.f32.gmra.mxu0 %v871
      %v988 = vpop.f32.mrf.mxu0
      %v989 = vadd.f32 0.0, %v988
      %990 = vmatmul.f32.gmra.mxu0 %v874
      %v991 = vpop.f32.mrf.mxu0
      %v992 = vadd.f32 0.0, %v991
      %993 = vmatmul.f32.gmra.mxu0 %v877
      %v994 = vpop.f32.mrf.mxu0
      %v995 = vadd.f32 0.0, %v994
      %996 = vmatmul.f32.gmra.mxu0 %v880
      %v997 = vpop.f32.mrf.mxu0
      %v998 = vadd.f32 0.0, %v997
      %999 = vmatmul.f32.gmra.mxu0 %v883
      %v1000 = vpop.f32.mrf.mxu0
      %v1001 = vadd.f32 0.0, %v1000
      %1002 = vmatmul.f32.gmra.mxu0 %v886
      %v1003 = vpop.f32.mrf.mxu0
      %v1004 = vadd.f32 0.0, %v1003
      %1005 = vmatmul.f32.gmra.mxu0 %v889
      %v1006 = vpop.f32.mrf.mxu0
      %v1007 = vadd.f32 0.0, %v1006
      %1008 = vmatmul.f32.gmra.mxu0 %v892
      %v1009 = vpop.f32.mrf.mxu0
      %v1010 = vadd.f32 0.0, %v1009
      %1011 = vmatmul.f32.gmra.mxu0 %v895
      %v1012 = vpop.f32.mrf.mxu0
      %v1013 = vadd.f32 0.0, %v1012
      %1014 = vmatmul.f32.gmra.mxu0 %v898
      %v1015 = vpop.f32.mrf.mxu0
      %v1016 = vadd.f32 0.0, %v1015
      %1017 = vmatmul.f32.gmra.mxu0 %v901
      %v1018 = vpop.f32.mrf.mxu0
      %v1019 = vadd.f32 0.0, %v1018
      %1020 = vmatmul.f32.gmra.mxu0 %v904
      %v1021 = vpop.f32.mrf.mxu0
      %v1022 = vadd.f32 0.0, %v1021
      %1023 = vmatmul.f32.gmra.mxu0 %v907
      %v1024 = vpop.f32.mrf.mxu0
      %v1025 = vadd.f32 0.0, %v1024
      %1026 = vmatmul.f32.gmra.mxu0 %v910
      %v1027 = vpop.f32.mrf.mxu0
      %v1028 = vadd.f32 0.0, %v1027
      %1029 = vmatmul.f32.gmra.mxu0 %v913
      %v1030 = vpop.f32.mrf.mxu0
      %v1031 = vadd.f32 0.0, %v1030
      %1032 = vmatmul.f32.gmra.mxu0 %v916
      %v1033 = vpop.f32.mrf.mxu0
      %v1034 = vadd.f32 0.0, %v1033
      %1035 = vmatmul.f32.gmra.mxu0 %v919
      %v1036 = vpop.f32.mrf.mxu0
      %v1037 = vadd.f32 0.0, %v1036
      %1038 = vmatmul.f32.gmra.mxu0 %v922
      %v1039 = vpop.f32.mrf.mxu0
      %v1040 = vadd.f32 0.0, %v1039
      %1041 = vmatmul.f32.gmra.mxu0 %v925
      %v1042 = vpop.f32.mrf.mxu0
      %v1043 = vadd.f32 0.0, %v1042
      %1044 = vmatmul.f32.gmra.mxu0 %v928
      %v1045 = vpop.f32.mrf.mxu0
      %v1046 = vadd.f32 0.0, %v1045
      %1047 = vmatmul.f32.gmra.mxu0 %v931
      %v1048 = vpop.f32.mrf.mxu0
      %v1049 = vadd.f32 0.0, %v1048
      %1050 = vmatmul.f32.gmra.mxu0 %v934
      %v1051 = vpop.f32.mrf.mxu0
      %v1052 = vadd.f32 0.0, %v1051
      %1053 = vdwg.mxu0
      %1054 = vmatpush.msra.mxu0 0.0
      %1055 = vmatpush.msra.mxu0 0.0
      %1056 = vmatpush.msra.mxu0 0.0
      %1057 = vmatpush.msra.mxu0 0.0
      %1058 = vmatpush.msra.mxu0 0.0
      %1059 = vmatpush.msra.mxu0 0.0
      %1060 = vmatpush.msra.mxu0 0.0
      %1061 = vmatpush.msra.mxu0 0.0
      %1062 = vmatpush.msra.mxu0 0.0
      %1063 = vmatpush.msra.mxu0 0.0
      %1064 = vmatpush.msra.mxu0 0.0
      %1065 = vmatpush.msra.mxu0 0.0
      %1066 = vmatpush.msra.mxu0 0.0
      %1067 = vmatpush.msra.mxu0 0.0
      %1068 = vmatpush.msra.mxu0 0.0
      %1069 = vmatpush.msra.mxu0 %v939
      %1070 = vmatmul.f32.gmra.mxu0 %v841
      %v1071 = vpop.f32.mrf.mxu0
      %v1072 = vadd.f32 0.0, %v1071
      %1073 = vmatmul.f32.gmra.mxu0 %v844
      %v1074 = vpop.f32.mrf.mxu0
      %v1075 = vadd.f32 0.0, %v1074
      %1076 = vmatmul.f32.gmra.mxu0 %v847
      %v1077 = vpop.f32.mrf.mxu0
      %v1078 = vadd.f32 0.0, %v1077
      %1079 = vmatmul.f32.gmra.mxu0 %v850
      %v1080 = vpop.f32.mrf.mxu0
      %v1081 = vadd.f32 0.0, %v1080
      %1082 = vmatmul.f32.gmra.mxu0 %v853
      %v1083 = vpop.f32.mrf.mxu0
      %v1084 = vadd.f32 0.0, %v1083
      %1085 = vmatmul.f32.gmra.mxu0 %v856
      %v1086 = vpop.f32.mrf.mxu0
      %v1087 = vadd.f32 0.0, %v1086
      %1088 = vmatmul.f32.gmra.mxu0 %v859
      %v1089 = vpop.f32.mrf.mxu0
      %v1090 = vadd.f32 0.0, %v1089
      %1091 = vmatmul.f32.gmra.mxu0 %v862
      %v1092 = vpop.f32.mrf.mxu0
      %v1093 = vadd.f32 0.0, %v1092
      %1094 = vmatmul.f32.gmra.mxu0 %v865
      %v1095 = vpop.f32.mrf.mxu0
      %v1096 = vadd.f32 0.0, %v1095
      %1097 = vmatmul.f32.gmra.mxu0 %v868
      %v1098 = vpop.f32.mrf.mxu0
      %v1099 = vadd.f32 0.0, %v1098
      %1100 = vmatmul.f32.gmra.mxu0 %v871
      %v1101 = vpop.f32.mrf.mxu0
      %v1102 = vadd.f32 0.0, %v1101
      %1103 = vmatmul.f32.gmra.mxu0 %v874
      %v1104 = vpop.f32.mrf.mxu0
      %v1105 = vadd.f32 0.0, %v1104
      %1106 = vmatmul.f32.gmra.mxu0 %v877
      %v1107 = vpop.f32.mrf.mxu0
      %v1108 = vadd.f32 0.0, %v1107
      %1109 = vmatmul.f32.gmra.mxu0 %v880
      %v1110 = vpop.f32.mrf.mxu0
      %v1111 = vadd.f32 0.0, %v1110
      %1112 = vmatmul.f32.gmra.mxu0 %v883
      %v1113 = vpop.f32.mrf.mxu0
      %v1114 = vadd.f32 0.0, %v1113
      %1115 = vmatmul.f32.gmra.mxu0 %v886
      %v1116 = vpop.f32.mrf.mxu0
      %v1117 = vadd.f32 0.0, %v1116
      %1118 = vmatmul.f32.gmra.mxu0 %v889
      %v1119 = vpop.f32.mrf.mxu0
      %v1120 = vadd.f32 0.0, %v1119
      %1121 = vmatmul.f32.gmra.mxu0 %v892
      %v1122 = vpop.f32.mrf.mxu0
      %v1123 = vadd.f32 0.0, %v1122
      %1124 = vmatmul.f32.gmra.mxu0 %v895
      %v1125 = vpop.f32.mrf.mxu0
      %v1126 = vadd.f32 0.0, %v1125
      %1127 = vmatmul.f32.gmra.mxu0 %v898
      %v1128 = vpop.f32.mrf.mxu0
      %v1129 = vadd.f32 0.0, %v1128
      %1130 = vmatmul.f32.gmra.mxu0 %v901
      %v1131 = vpop.f32.mrf.mxu0
      %v1132 = vadd.f32 0.0, %v1131
      %1133 = vmatmul.f32.gmra.mxu0 %v904
      %v1134 = vpop.f32.mrf.mxu0
      %v1135 = vadd.f32 0.0, %v1134
      %1136 = vmatmul.f32.gmra.mxu0 %v907
      %v1137 = vpop.f32.mrf.mxu0
      %v1138 = vadd.f32 0.0, %v1137
      %1139 = vmatmul.f32.gmra.mxu0 %v910
      %v1140 = vpop.f32.mrf.mxu0
      %v1141 = vadd.f32 0.0, %v1140
      %1142 = vmatmul.f32.gmra.mxu0 %v913
      %v1143 = vpop.f32.mrf.mxu0
      %v1144 = vadd.f32 0.0, %v1143
      %1145 = vmatmul.f32.gmra.mxu0 %v916
      %v1146 = vpop.f32.mrf.mxu0
      %v1147 = vadd.f32 0.0, %v1146
      %1148 = vmatmul.f32.gmra.mxu0 %v919
      %v1149 = vpop.f32.mrf.mxu0
      %v1150 = vadd.f32 0.0, %v1149
      %1151 = vmatmul.f32.gmra.mxu0 %v922
      %v1152 = vpop.f32.mrf.mxu0
      %v1153 = vadd.f32 0.0, %v1152
      %1154 = vmatmul.f32.gmra.mxu0 %v925
      %v1155 = vpop.f32.mrf.mxu0
      %v1156 = vadd.f32 0.0, %v1155
      %1157 = vmatmul.f32.gmra.mxu0 %v928
      %v1158 = vpop.f32.mrf.mxu0
      %v1159 = vadd.f32 0.0, %v1158
      %1160 = vmatmul.f32.gmra.mxu0 %v931
      %v1161 = vpop.f32.mrf.mxu0
      %v1162 = vadd.f32 0.0, %v1161
      %1163 = vmatmul.f32.gmra.mxu0 %v934
      %v1164 = vpop.f32.mrf.mxu0
      %v1165 = vadd.f32 0.0, %v1164
      %1166 = vdwg.mxu0
      %v1167 = vsel %vm707, %v959, -1e+30
      %v1168 = vsel %vm708, %v1072, -1e+30
      %v1169 = vsel %vm709, %v962, -1e+30
      %v1170 = vsel %vm710, %v1075, -1e+30
      %v1171 = vsel %vm711, %v965, -1e+30
      %v1172 = vsel %vm712, %v1078, -1e+30
      %v1173 = vsel %vm713, %v968, -1e+30
      %v1174 = vsel %vm714, %v1081, -1e+30
      %v1175 = vsel %vm715, %v971, -1e+30
      %v1176 = vsel %vm716, %v1084, -1e+30
      %v1177 = vsel %vm717, %v974, -1e+30
      %v1178 = vsel %vm718, %v1087, -1e+30
      %v1179 = vsel %vm719, %v977, -1e+30
      %v1180 = vsel %vm720, %v1090, -1e+30
      %v1181 = vsel %vm721, %v980, -1e+30
      %v1182 = vsel %vm722, %v1093, -1e+30
      %v1183 = vsel %vm723, %v983, -1e+30
      %v1184 = vsel %vm724, %v1096, -1e+30
      %v1185 = vsel %vm725, %v986, -1e+30
      %v1186 = vsel %vm726, %v1099, -1e+30
      %v1187 = vsel %vm727, %v989, -1e+30
      %v1188 = vsel %vm728, %v1102, -1e+30
      %v1189 = vsel %vm729, %v992, -1e+30
      %v1190 = vsel %vm730, %v1105, -1e+30
      %v1191 = vsel %vm731, %v995, -1e+30
      %v1192 = vsel %vm732, %v1108, -1e+30
      %v1193 = vsel %vm733, %v998, -1e+30
      %v1194 = vsel %vm734, %v1111, -1e+30
      %v1195 = vsel %vm735, %v1001, -1e+30
      %v1196 = vsel %vm736, %v1114, -1e+30
      %v1197 = vsel %vm737, %v1004, -1e+30
      %v1198 = vsel %vm738, %v1117, -1e+30
      %v1199 = vsel %vm739, %v1007, -1e+30
      %v1200 = vsel %vm740, %v1120, -1e+30
      %v1201 = vsel %vm741, %v1010, -1e+30
      %v1202 = vsel %vm742, %v1123, -1e+30
      %v1203 = vsel %vm743, %v1013, -1e+30
      %v1204 = vsel %vm744, %v1126, -1e+30
      %v1205 = vsel %vm745, %v1016, -1e+30
      %v1206 = vsel %vm746, %v1129, -1e+30
      %v1207 = vsel %vm747, %v1019, -1e+30
      %v1208 = vsel %vm748, %v1132, -1e+30
      %v1209 = vsel %vm749, %v1022, -1e+30
      %v1210 = vsel %vm750, %v1135, -1e+30
      %v1211 = vsel %vm751, %v1025, -1e+30
      %v1212 = vsel %vm752, %v1138, -1e+30
      %v1213 = vsel %vm753, %v1028, -1e+30
      %v1214 = vsel %vm754, %v1141, -1e+30
      %v1215 = vsel %vm755, %v1031, -1e+30
      %v1216 = vsel %vm756, %v1144, -1e+30
      %v1217 = vsel %vm757, %v1034, -1e+30
      %v1218 = vsel %vm758, %v1147, -1e+30
      %v1219 = vsel %vm759, %v1037, -1e+30
      %v1220 = vsel %vm760, %v1150, -1e+30
      %v1221 = vsel %vm761, %v1040, -1e+30
      %v1222 = vsel %vm762, %v1153, -1e+30
      %v1223 = vsel %vm763, %v1043, -1e+30
      %v1224 = vsel %vm764, %v1156, -1e+30
      %v1225 = vsel %vm765, %v1046, -1e+30
      %v1226 = vsel %vm766, %v1159, -1e+30
      %v1227 = vsel %vm767, %v1049, -1e+30
      %v1228 = vsel %vm768, %v1162, -1e+30
      %v1229 = vsel %vm769, %v1052, -1e+30
      %v1230 = vsel %vm770, %v1165, -1e+30
      %v1231 = vmax.f32 %v1167, %v1168
      %1232 = vmax.xlane.f32.xlu0 %v1231
      %v1233 = vpop.xlane.xlu0 %1232
      %v1234 = vmax.f32 %v1169, %v1170
      %1235 = vmax.xlane.f32.xlu0 %v1234
      %v1236 = vpop.xlane.xlu0 %1235
      %v1237 = vmax.f32 %v1171, %v1172
      %1238 = vmax.xlane.f32.xlu0 %v1237
      %v1239 = vpop.xlane.xlu0 %1238
      %v1240 = vmax.f32 %v1173, %v1174
      %1241 = vmax.xlane.f32.xlu0 %v1240
      %v1242 = vpop.xlane.xlu0 %1241
      %v1243 = vmax.f32 %v1175, %v1176
      %1244 = vmax.xlane.f32.xlu0 %v1243
      %v1245 = vpop.xlane.xlu0 %1244
      %v1246 = vmax.f32 %v1177, %v1178
      %1247 = vmax.xlane.f32.xlu0 %v1246
      %v1248 = vpop.xlane.xlu0 %1247
      %v1249 = vmax.f32 %v1179, %v1180
      %1250 = vmax.xlane.f32.xlu0 %v1249
      %v1251 = vpop.xlane.xlu0 %1250
      %v1252 = vmax.f32 %v1181, %v1182
      %1253 = vmax.xlane.f32.xlu0 %v1252
      %v1254 = vpop.xlane.xlu0 %1253
      %v1255 = vmax.f32 %v1183, %v1184
      %1256 = vmax.xlane.f32.xlu0 %v1255
      %v1257 = vpop.xlane.xlu0 %1256
      %v1258 = vmax.f32 %v1185, %v1186
      %1259 = vmax.xlane.f32.xlu0 %v1258
      %v1260 = vpop.xlane.xlu0 %1259
      %v1261 = vmax.f32 %v1187, %v1188
      %1262 = vmax.xlane.f32.xlu0 %v1261
      %v1263 = vpop.xlane.xlu0 %1262
      %v1264 = vmax.f32 %v1189, %v1190
      %1265 = vmax.xlane.f32.xlu0 %v1264
      %v1266 = vpop.xlane.xlu0 %1265
      %v1267 = vmax.f32 %v1191, %v1192
      %1268 = vmax.xlane.f32.xlu0 %v1267
      %v1269 = vpop.xlane.xlu0 %1268
      %v1270 = vmax.f32 %v1193, %v1194
      %1271 = vmax.xlane.f32.xlu0 %v1270
      %v1272 = vpop.xlane.xlu0 %1271
      %v1273 = vmax.f32 %v1195, %v1196
      %1274 = vmax.xlane.f32.xlu0 %v1273
      %v1275 = vpop.xlane.xlu0 %1274
      %v1276 = vmax.f32 %v1197, %v1198
      %1277 = vmax.xlane.f32.xlu0 %v1276
      %v1278 = vpop.xlane.xlu0 %1277
      %v1279 = vmax.f32 %v1199, %v1200
      %1280 = vmax.xlane.f32.xlu0 %v1279
      %v1281 = vpop.xlane.xlu0 %1280
      %v1282 = vmax.f32 %v1201, %v1202
      %1283 = vmax.xlane.f32.xlu0 %v1282
      %v1284 = vpop.xlane.xlu0 %1283
      %v1285 = vmax.f32 %v1203, %v1204
      %1286 = vmax.xlane.f32.xlu0 %v1285
      %v1287 = vpop.xlane.xlu0 %1286
      %v1288 = vmax.f32 %v1205, %v1206
      %1289 = vmax.xlane.f32.xlu0 %v1288
      %v1290 = vpop.xlane.xlu0 %1289
      %v1291 = vmax.f32 %v1207, %v1208
      %1292 = vmax.xlane.f32.xlu0 %v1291
      %v1293 = vpop.xlane.xlu0 %1292
      %v1294 = vmax.f32 %v1209, %v1210
      %1295 = vmax.xlane.f32.xlu0 %v1294
      %v1296 = vpop.xlane.xlu0 %1295
      %v1297 = vmax.f32 %v1211, %v1212
      %1298 = vmax.xlane.f32.xlu0 %v1297
      %v1299 = vpop.xlane.xlu0 %1298
      %v1300 = vmax.f32 %v1213, %v1214
      %1301 = vmax.xlane.f32.xlu0 %v1300
      %v1302 = vpop.xlane.xlu0 %1301
      %v1303 = vmax.f32 %v1215, %v1216
      %1304 = vmax.xlane.f32.xlu0 %v1303
      %v1305 = vpop.xlane.xlu0 %1304
      %v1306 = vmax.f32 %v1217, %v1218
      %1307 = vmax.xlane.f32.xlu0 %v1306
      %v1308 = vpop.xlane.xlu0 %1307
      %v1309 = vmax.f32 %v1219, %v1220
      %1310 = vmax.xlane.f32.xlu0 %v1309
      %v1311 = vpop.xlane.xlu0 %1310
      %v1312 = vmax.f32 %v1221, %v1222
      %1313 = vmax.xlane.f32.xlu0 %v1312
      %v1314 = vpop.xlane.xlu0 %1313
      %v1315 = vmax.f32 %v1223, %v1224
      %1316 = vmax.xlane.f32.xlu0 %v1315
      %v1317 = vpop.xlane.xlu0 %1316
      %v1318 = vmax.f32 %v1225, %v1226
      %1319 = vmax.xlane.f32.xlu0 %v1318
      %v1320 = vpop.xlane.xlu0 %1319
      %v1321 = vmax.f32 %v1227, %v1228
      %1322 = vmax.xlane.f32.xlu0 %v1321
      %v1323 = vpop.xlane.xlu0 %1322
      %v1324 = vmax.f32 %v1229, %v1230
      %1325 = vmax.xlane.f32.xlu0 %v1324
      %v1326 = vpop.xlane.xlu0 %1325
      %v1327 = vsub.f32 %v1167, %v1233
      %v1328 = vsub.f32 %v1168, %v1233
      %v1329 = vsub.f32 %v1169, %v1236
      %v1330 = vsub.f32 %v1170, %v1236
      %v1331 = vsub.f32 %v1171, %v1239
      %v1332 = vsub.f32 %v1172, %v1239
      %v1333 = vsub.f32 %v1173, %v1242
      %v1334 = vsub.f32 %v1174, %v1242
      %v1335 = vsub.f32 %v1175, %v1245
      %v1336 = vsub.f32 %v1176, %v1245
      %v1337 = vsub.f32 %v1177, %v1248
      %v1338 = vsub.f32 %v1178, %v1248
      %v1339 = vsub.f32 %v1179, %v1251
      %v1340 = vsub.f32 %v1180, %v1251
      %v1341 = vsub.f32 %v1181, %v1254
      %v1342 = vsub.f32 %v1182, %v1254
      %v1343 = vsub.f32 %v1183, %v1257
      %v1344 = vsub.f32 %v1184, %v1257
      %v1345 = vsub.f32 %v1185, %v1260
      %v1346 = vsub.f32 %v1186, %v1260
      %v1347 = vsub.f32 %v1187, %v1263
      %v1348 = vsub.f32 %v1188, %v1263
      %v1349 = vsub.f32 %v1189, %v1266
      %v1350 = vsub.f32 %v1190, %v1266
      %v1351 = vsub.f32 %v1191, %v1269
      %v1352 = vsub.f32 %v1192, %v1269
      %v1353 = vsub.f32 %v1193, %v1272
      %v1354 = vsub.f32 %v1194, %v1272
      %v1355 = vsub.f32 %v1195, %v1275
      %v1356 = vsub.f32 %v1196, %v1275
      %v1357 = vsub.f32 %v1197, %v1278
      %v1358 = vsub.f32 %v1198, %v1278
      %v1359 = vsub.f32 %v1199, %v1281
      %v1360 = vsub.f32 %v1200, %v1281
      %v1361 = vsub.f32 %v1201, %v1284
      %v1362 = vsub.f32 %v1202, %v1284
      %v1363 = vsub.f32 %v1203, %v1287
      %v1364 = vsub.f32 %v1204, %v1287
      %v1365 = vsub.f32 %v1205, %v1290
      %v1366 = vsub.f32 %v1206, %v1290
      %v1367 = vsub.f32 %v1207, %v1293
      %v1368 = vsub.f32 %v1208, %v1293
      %v1369 = vsub.f32 %v1209, %v1296
      %v1370 = vsub.f32 %v1210, %v1296
      %v1371 = vsub.f32 %v1211, %v1299
      %v1372 = vsub.f32 %v1212, %v1299
      %v1373 = vsub.f32 %v1213, %v1302
      %v1374 = vsub.f32 %v1214, %v1302
      %v1375 = vsub.f32 %v1215, %v1305
      %v1376 = vsub.f32 %v1216, %v1305
      %v1377 = vsub.f32 %v1217, %v1308
      %v1378 = vsub.f32 %v1218, %v1308
      %v1379 = vsub.f32 %v1219, %v1311
      %v1380 = vsub.f32 %v1220, %v1311
      %v1381 = vsub.f32 %v1221, %v1314
      %v1382 = vsub.f32 %v1222, %v1314
      %v1383 = vsub.f32 %v1223, %v1317
      %v1384 = vsub.f32 %v1224, %v1317
      %v1385 = vsub.f32 %v1225, %v1320
      %v1386 = vsub.f32 %v1226, %v1320
      %v1387 = vsub.f32 %v1227, %v1323
      %v1388 = vsub.f32 %v1228, %v1323
      %v1389 = vsub.f32 %v1229, %v1326
      %v1390 = vsub.f32 %v1230, %v1326
      %v1391 = vmul.f32 %v1327, 1.442695
      %v1392 = vpow.pop %v1391
      %v1393 = vmul.f32 %v1328, 1.442695
      %v1394 = vpow.pop %v1393
      %v1395 = vmul.f32 %v1329, 1.442695
      %v1396 = vpow.pop %v1395
      %v1397 = vmul.f32 %v1330, 1.442695
      %v1398 = vpow.pop %v1397
      %v1399 = vmul.f32 %v1331, 1.442695
      %v1400 = vpow.pop %v1399
      %v1401 = vmul.f32 %v1332, 1.442695
      %v1402 = vpow.pop %v1401
      %v1403 = vmul.f32 %v1333, 1.442695
      %v1404 = vpow.pop %v1403
      %v1405 = vmul.f32 %v1334, 1.442695
      %v1406 = vpow.pop %v1405
      %v1407 = vmul.f32 %v1335, 1.442695
      %v1408 = vpow.pop %v1407
      %v1409 = vmul.f32 %v1336, 1.442695
      %v1410 = vpow.pop %v1409
      %v1411 = vmul.f32 %v1337, 1.442695
      %v1412 = vpow.pop %v1411
      %v1413 = vmul.f32 %v1338, 1.442695
      %v1414 = vpow.pop %v1413
      %v1415 = vmul.f32 %v1339, 1.442695
      %v1416 = vpow.pop %v1415
      %v1417 = vmul.f32 %v1340, 1.442695
      %v1418 = vpow.pop %v1417
      %v1419 = vmul.f32 %v1341, 1.442695
      %v1420 = vpow.pop %v1419
      %v1421 = vmul.f32 %v1342, 1.442695
      %v1422 = vpow.pop %v1421
      %v1423 = vmul.f32 %v1343, 1.442695
      %v1424 = vpow.pop %v1423
      %v1425 = vmul.f32 %v1344, 1.442695
      %v1426 = vpow.pop %v1425
      %v1427 = vmul.f32 %v1345, 1.442695
      %v1428 = vpow.pop %v1427
      %v1429 = vmul.f32 %v1346, 1.442695
      %v1430 = vpow.pop %v1429
      %v1431 = vmul.f32 %v1347, 1.442695
      %v1432 = vpow.pop %v1431
      %v1433 = vmul.f32 %v1348, 1.442695
      %v1434 = vpow.pop %v1433
      %v1435 = vmul.f32 %v1349, 1.442695
      %v1436 = vpow.pop %v1435
      %v1437 = vmul.f32 %v1350, 1.442695
      %v1438 = vpow.pop %v1437
      %v1439 = vmul.f32 %v1351, 1.442695
      %v1440 = vpow.pop %v1439
      %v1441 = vmul.f32 %v1352, 1.442695
      %v1442 = vpow.pop %v1441
      %v1443 = vmul.f32 %v1353, 1.442695
      %v1444 = vpow.pop %v1443
      %v1445 = vmul.f32 %v1354, 1.442695
      %v1446 = vpow.pop %v1445
      %v1447 = vmul.f32 %v1355, 1.442695
      %v1448 = vpow.pop %v1447
      %v1449 = vmul.f32 %v1356, 1.442695
      %v1450 = vpow.pop %v1449
      %v1451 = vmul.f32 %v1357, 1.442695
      %v1452 = vpow.pop %v1451
      %v1453 = vmul.f32 %v1358, 1.442695
      %v1454 = vpow.pop %v1453
      %v1455 = vmul.f32 %v1359, 1.442695
      %v1456 = vpow.pop %v1455
      %v1457 = vmul.f32 %v1360, 1.442695
      %v1458 = vpow.pop %v1457
      %v1459 = vmul.f32 %v1361, 1.442695
      %v1460 = vpow.pop %v1459
      %v1461 = vmul.f32 %v1362, 1.442695
      %v1462 = vpow.pop %v1461
      %v1463 = vmul.f32 %v1363, 1.442695
      %v1464 = vpow.pop %v1463
      %v1465 = vmul.f32 %v1364, 1.442695
      %v1466 = vpow.pop %v1465
      %v1467 = vmul.f32 %v1365, 1.442695
      %v1468 = vpow.pop %v1467
      %v1469 = vmul.f32 %v1366, 1.442695
      %v1470 = vpow.pop %v1469
      %v1471 = vmul.f32 %v1367, 1.442695
      %v1472 = vpow.pop %v1471
      %v1473 = vmul.f32 %v1368, 1.442695
      %v1474 = vpow.pop %v1473
      %v1475 = vmul.f32 %v1369, 1.442695
      %v1476 = vpow.pop %v1475
      %v1477 = vmul.f32 %v1370, 1.442695
      %v1478 = vpow.pop %v1477
      %v1479 = vmul.f32 %v1371, 1.442695
      %v1480 = vpow.pop %v1479
      %v1481 = vmul.f32 %v1372, 1.442695
      %v1482 = vpow.pop %v1481
      %v1483 = vmul.f32 %v1373, 1.442695
      %v1484 = vpow.pop %v1483
      %v1485 = vmul.f32 %v1374, 1.442695
      %v1486 = vpow.pop %v1485
      %v1487 = vmul.f32 %v1375, 1.442695
      %v1488 = vpow.pop %v1487
      %v1489 = vmul.f32 %v1376, 1.442695
      %v1490 = vpow.pop %v1489
      %v1491 = vmul.f32 %v1377, 1.442695
      %v1492 = vpow.pop %v1491
      %v1493 = vmul.f32 %v1378, 1.442695
      %v1494 = vpow.pop %v1493
      %v1495 = vmul.f32 %v1379, 1.442695
      %v1496 = vpow.pop %v1495
      %v1497 = vmul.f32 %v1380, 1.442695
      %v1498 = vpow.pop %v1497
      %v1499 = vmul.f32 %v1381, 1.442695
      %v1500 = vpow.pop %v1499
      %v1501 = vmul.f32 %v1382, 1.442695
      %v1502 = vpow.pop %v1501
      %v1503 = vmul.f32 %v1383, 1.442695
      %v1504 = vpow.pop %v1503
      %v1505 = vmul.f32 %v1384, 1.442695
      %v1506 = vpow.pop %v1505
      %v1507 = vmul.f32 %v1385, 1.442695
      %v1508 = vpow.pop %v1507
      %v1509 = vmul.f32 %v1386, 1.442695
      %v1510 = vpow.pop %v1509
      %v1511 = vmul.f32 %v1387, 1.442695
      %v1512 = vpow.pop %v1511
      %v1513 = vmul.f32 %v1388, 1.442695
      %v1514 = vpow.pop %v1513
      %v1515 = vmul.f32 %v1389, 1.442695
      %v1516 = vpow.pop %v1515
      %v1517 = vmul.f32 %v1390, 1.442695
      %v1518 = vpow.pop %v1517
      %v1519 = vadd.f32 %v1392, %v1394
      %1520 = vadd.xlane.f32.xlu0 %v1519
      %v1521 = vpop.xlane.xlu0 %1520
      %v1522 = vadd.f32 %v1396, %v1398
      %1523 = vadd.xlane.f32.xlu0 %v1522
      %v1524 = vpop.xlane.xlu0 %1523
      %v1525 = vadd.f32 %v1400, %v1402
      %1526 = vadd.xlane.f32.xlu0 %v1525
      %v1527 = vpop.xlane.xlu0 %1526
      %v1528 = vadd.f32 %v1404, %v1406
      %1529 = vadd.xlane.f32.xlu0 %v1528
      %v1530 = vpop.xlane.xlu0 %1529
      %v1531 = vadd.f32 %v1408, %v1410
      %1532 = vadd.xlane.f32.xlu0 %v1531
      %v1533 = vpop.xlane.xlu0 %1532
      %v1534 = vadd.f32 %v1412, %v1414
      %1535 = vadd.xlane.f32.xlu0 %v1534
      %v1536 = vpop.xlane.xlu0 %1535
      %v1537 = vadd.f32 %v1416, %v1418
      %1538 = vadd.xlane.f32.xlu0 %v1537
      %v1539 = vpop.xlane.xlu0 %1538
      %v1540 = vadd.f32 %v1420, %v1422
      %1541 = vadd.xlane.f32.xlu0 %v1540
      %v1542 = vpop.xlane.xlu0 %1541
      %v1543 = vadd.f32 %v1424, %v1426
      %1544 = vadd.xlane.f32.xlu0 %v1543
      %v1545 = vpop.xlane.xlu0 %1544
      %v1546 = vadd.f32 %v1428, %v1430
      %1547 = vadd.xlane.f32.xlu0 %v1546
      %v1548 = vpop.xlane.xlu0 %1547
      %v1549 = vadd.f32 %v1432, %v1434
      %1550 = vadd.xlane.f32.xlu0 %v1549
      %v1551 = vpop.xlane.xlu0 %1550
      %v1552 = vadd.f32 %v1436, %v1438
      %1553 = vadd.xlane.f32.xlu0 %v1552
      %v1554 = vpop.xlane.xlu0 %1553
      %v1555 = vadd.f32 %v1440, %v1442
      %1556 = vadd.xlane.f32.xlu0 %v1555
      %v1557 = vpop.xlane.xlu0 %1556
      %v1558 = vadd.f32 %v1444, %v1446
      %1559 = vadd.xlane.f32.xlu0 %v1558
      %v1560 = vpop.xlane.xlu0 %1559
      %v1561 = vadd.f32 %v1448, %v1450
      %1562 = vadd.xlane.f32.xlu0 %v1561
      %v1563 = vpop.xlane.xlu0 %1562
      %v1564 = vadd.f32 %v1452, %v1454
      %1565 = vadd.xlane.f32.xlu0 %v1564
      %v1566 = vpop.xlane.xlu0 %1565
      %v1567 = vadd.f32 %v1456, %v1458
      %1568 = vadd.xlane.f32.xlu0 %v1567
      %v1569 = vpop.xlane.xlu0 %1568
      %v1570 = vadd.f32 %v1460, %v1462
      %1571 = vadd.xlane.f32.xlu0 %v1570
      %v1572 = vpop.xlane.xlu0 %1571
      %v1573 = vadd.f32 %v1464, %v1466
      %1574 = vadd.xlane.f32.xlu0 %v1573
      %v1575 = vpop.xlane.xlu0 %1574
      %v1576 = vadd.f32 %v1468, %v1470
      %1577 = vadd.xlane.f32.xlu0 %v1576
      %v1578 = vpop.xlane.xlu0 %1577
      %v1579 = vadd.f32 %v1472, %v1474
      %1580 = vadd.xlane.f32.xlu0 %v1579
      %v1581 = vpop.xlane.xlu0 %1580
      %v1582 = vadd.f32 %v1476, %v1478
      %1583 = vadd.xlane.f32.xlu0 %v1582
      %v1584 = vpop.xlane.xlu0 %1583
      %v1585 = vadd.f32 %v1480, %v1482
      %1586 = vadd.xlane.f32.xlu0 %v1585
      %v1587 = vpop.xlane.xlu0 %1586
      %v1588 = vadd.f32 %v1484, %v1486
      %1589 = vadd.xlane.f32.xlu0 %v1588
      %v1590 = vpop.xlane.xlu0 %1589
      %v1591 = vadd.f32 %v1488, %v1490
      %1592 = vadd.xlane.f32.xlu0 %v1591
      %v1593 = vpop.xlane.xlu0 %1592
      %v1594 = vadd.f32 %v1492, %v1494
      %1595 = vadd.xlane.f32.xlu0 %v1594
      %v1596 = vpop.xlane.xlu0 %1595
      %v1597 = vadd.f32 %v1496, %v1498
      %1598 = vadd.xlane.f32.xlu0 %v1597
      %v1599 = vpop.xlane.xlu0 %1598
      %v1600 = vadd.f32 %v1500, %v1502
      %1601 = vadd.xlane.f32.xlu0 %v1600
      %v1602 = vpop.xlane.xlu0 %1601
      %v1603 = vadd.f32 %v1504, %v1506
      %1604 = vadd.xlane.f32.xlu0 %v1603
      %v1605 = vpop.xlane.xlu0 %1604
      %v1606 = vadd.f32 %v1508, %v1510
      %1607 = vadd.xlane.f32.xlu0 %v1606
      %v1608 = vpop.xlane.xlu0 %1607
      %v1609 = vadd.f32 %v1512, %v1514
      %1610 = vadd.xlane.f32.xlu0 %v1609
      %v1611 = vpop.xlane.xlu0 %1610
      %v1612 = vadd.f32 %v1516, %v1518
      %1613 = vadd.xlane.f32.xlu0 %v1612
      %v1614 = vpop.xlane.xlu0 %1613
      %v1615 = vrcp.pop %v1521
      %v1616 = vrcp.pop %v1524
      %v1617 = vrcp.pop %v1527
      %v1618 = vrcp.pop %v1530
      %v1619 = vrcp.pop %v1533
      %v1620 = vrcp.pop %v1536
      %v1621 = vrcp.pop %v1539
      %v1622 = vrcp.pop %v1542
      %v1623 = vrcp.pop %v1545
      %v1624 = vrcp.pop %v1548
      %v1625 = vrcp.pop %v1551
      %v1626 = vrcp.pop %v1554
      %v1627 = vrcp.pop %v1557
      %v1628 = vrcp.pop %v1560
      %v1629 = vrcp.pop %v1563
      %v1630 = vrcp.pop %v1566
      %v1631 = vrcp.pop %v1569
      %v1632 = vrcp.pop %v1572
      %v1633 = vrcp.pop %v1575
      %v1634 = vrcp.pop %v1578
      %v1635 = vrcp.pop %v1581
      %v1636 = vrcp.pop %v1584
      %v1637 = vrcp.pop %v1587
      %v1638 = vrcp.pop %v1590
      %v1639 = vrcp.pop %v1593
      %v1640 = vrcp.pop %v1596
      %v1641 = vrcp.pop %v1599
      %v1642 = vrcp.pop %v1602
      %v1643 = vrcp.pop %v1605
      %v1644 = vrcp.pop %v1608
      %v1645 = vrcp.pop %v1611
      %v1646 = vrcp.pop %v1614
      %v1647 = vmul.f32 %v1521, %v1615
      %v1648 = vmul.f32 %v1524, %v1616
      %v1649 = vmul.f32 %v1527, %v1617
      %v1650 = vmul.f32 %v1530, %v1618
      %v1651 = vmul.f32 %v1533, %v1619
      %v1652 = vmul.f32 %v1536, %v1620
      %v1653 = vmul.f32 %v1539, %v1621
      %v1654 = vmul.f32 %v1542, %v1622
      %v1655 = vmul.f32 %v1545, %v1623
      %v1656 = vmul.f32 %v1548, %v1624
      %v1657 = vmul.f32 %v1551, %v1625
      %v1658 = vmul.f32 %v1554, %v1626
      %v1659 = vmul.f32 %v1557, %v1627
      %v1660 = vmul.f32 %v1560, %v1628
      %v1661 = vmul.f32 %v1563, %v1629
      %v1662 = vmul.f32 %v1566, %v1630
      %v1663 = vmul.f32 %v1569, %v1631
      %v1664 = vmul.f32 %v1572, %v1632
      %v1665 = vmul.f32 %v1575, %v1633
      %v1666 = vmul.f32 %v1578, %v1634
      %v1667 = vmul.f32 %v1581, %v1635
      %v1668 = vmul.f32 %v1584, %v1636
      %v1669 = vmul.f32 %v1587, %v1637
      %v1670 = vmul.f32 %v1590, %v1638
      %v1671 = vmul.f32 %v1593, %v1639
      %v1672 = vmul.f32 %v1596, %v1640
      %v1673 = vmul.f32 %v1599, %v1641
      %v1674 = vmul.f32 %v1602, %v1642
      %v1675 = vmul.f32 %v1605, %v1643
      %v1676 = vmul.f32 %v1608, %v1644
      %v1677 = vmul.f32 %v1611, %v1645
      %v1678 = vmul.f32 %v1614, %v1646
      %v1679 = vsub.f32 2.0, %v1647
      %v1680 = vsub.f32 2.0, %v1648
      %v1681 = vsub.f32 2.0, %v1649
      %v1682 = vsub.f32 2.0, %v1650
      %v1683 = vsub.f32 2.0, %v1651
      %v1684 = vsub.f32 2.0, %v1652
      %v1685 = vsub.f32 2.0, %v1653
      %v1686 = vsub.f32 2.0, %v1654
      %v1687 = vsub.f32 2.0, %v1655
      %v1688 = vsub.f32 2.0, %v1656
      %v1689 = vsub.f32 2.0, %v1657
      %v1690 = vsub.f32 2.0, %v1658
      %v1691 = vsub.f32 2.0, %v1659
      %v1692 = vsub.f32 2.0, %v1660
      %v1693 = vsub.f32 2.0, %v1661
      %v1694 = vsub.f32 2.0, %v1662
      %v1695 = vsub.f32 2.0, %v1663
      %v1696 = vsub.f32 2.0, %v1664
      %v1697 = vsub.f32 2.0, %v1665
      %v1698 = vsub.f32 2.0, %v1666
      %v1699 = vsub.f32 2.0, %v1667
      %v1700 = vsub.f32 2.0, %v1668
      %v1701 = vsub.f32 2.0, %v1669
      %v1702 = vsub.f32 2.0, %v1670
      %v1703 = vsub.f32 2.0, %v1671
      %v1704 = vsub.f32 2.0, %v1672
      %v1705 = vsub.f32 2.0, %v1673
      %v1706 = vsub.f32 2.0, %v1674
      %v1707 = vsub.f32 2.0, %v1675
      %v1708 = vsub.f32 2.0, %v1676
      %v1709 = vsub.f32 2.0, %v1677
      %v1710 = vsub.f32 2.0, %v1678
      %v1711 = vmul.f32 %v1615, %v1679
      %v1712 = vmul.f32 %v1616, %v1680
      %v1713 = vmul.f32 %v1617, %v1681
      %v1714 = vmul.f32 %v1618, %v1682
      %v1715 = vmul.f32 %v1619, %v1683
      %v1716 = vmul.f32 %v1620, %v1684
      %v1717 = vmul.f32 %v1621, %v1685
      %v1718 = vmul.f32 %v1622, %v1686
      %v1719 = vmul.f32 %v1623, %v1687
      %v1720 = vmul.f32 %v1624, %v1688
      %v1721 = vmul.f32 %v1625, %v1689
      %v1722 = vmul.f32 %v1626, %v1690
      %v1723 = vmul.f32 %v1627, %v1691
      %v1724 = vmul.f32 %v1628, %v1692
      %v1725 = vmul.f32 %v1629, %v1693
      %v1726 = vmul.f32 %v1630, %v1694
      %v1727 = vmul.f32 %v1631, %v1695
      %v1728 = vmul.f32 %v1632, %v1696
      %v1729 = vmul.f32 %v1633, %v1697
      %v1730 = vmul.f32 %v1634, %v1698
      %v1731 = vmul.f32 %v1635, %v1699
      %v1732 = vmul.f32 %v1636, %v1700
      %v1733 = vmul.f32 %v1637, %v1701
      %v1734 = vmul.f32 %v1638, %v1702
      %v1735 = vmul.f32 %v1639, %v1703
      %v1736 = vmul.f32 %v1640, %v1704
      %v1737 = vmul.f32 %v1641, %v1705
      %v1738 = vmul.f32 %v1642, %v1706
      %v1739 = vmul.f32 %v1643, %v1707
      %v1740 = vmul.f32 %v1644, %v1708
      %v1741 = vmul.f32 %v1645, %v1709
      %v1742 = vmul.f32 %v1646, %v1710
      %1743 = vmatpush.xpose.msra.mxu0 0.0
      %1744 = vmatpush.xpose.msra.mxu0 0.0
      %1745 = vmatpush.xpose.msra.mxu0 0.0
      %1746 = vmatpush.xpose.msra.mxu0 0.0
      %1747 = vmatpush.xpose.msra.mxu0 0.0
      %1748 = vmatpush.xpose.msra.mxu0 0.0
      %1749 = vmatpush.xpose.msra.mxu0 0.0
      %1750 = vmatpush.xpose.msra.mxu0 0.0
      %1751 = vmatpush.xpose.msra.mxu0 0.0
      %1752 = vmatpush.xpose.msra.mxu0 0.0
      %1753 = vmatpush.xpose.msra.mxu0 0.0
      %1754 = vmatpush.xpose.msra.mxu0 0.0
      %1755 = vmatpush.xpose.msra.mxu0 0.0
      %1756 = vmatpush.xpose.msra.mxu0 0.0
      %1757 = vmatpush.xpose.msra.mxu0 0.0
      %1758 = vmatpush.xpose.msra.mxu0 %v238
      %1759 = vmatmul.f32.gmra.mxu0 %v1392
      %v1760 = vpop.f32.mrf.mxu0
      %v1761 = vadd.f32 0.0, %v1760
      %1762 = vmatmul.f32.gmra.mxu0 %v1396
      %v1763 = vpop.f32.mrf.mxu0
      %v1764 = vadd.f32 0.0, %v1763
      %1765 = vmatmul.f32.gmra.mxu0 %v1400
      %v1766 = vpop.f32.mrf.mxu0
      %v1767 = vadd.f32 0.0, %v1766
      %1768 = vmatmul.f32.gmra.mxu0 %v1404
      %v1769 = vpop.f32.mrf.mxu0
      %v1770 = vadd.f32 0.0, %v1769
      %1771 = vmatmul.f32.gmra.mxu0 %v1408
      %v1772 = vpop.f32.mrf.mxu0
      %v1773 = vadd.f32 0.0, %v1772
      %1774 = vmatmul.f32.gmra.mxu0 %v1412
      %v1775 = vpop.f32.mrf.mxu0
      %v1776 = vadd.f32 0.0, %v1775
      %1777 = vmatmul.f32.gmra.mxu0 %v1416
      %v1778 = vpop.f32.mrf.mxu0
      %v1779 = vadd.f32 0.0, %v1778
      %1780 = vmatmul.f32.gmra.mxu0 %v1420
      %v1781 = vpop.f32.mrf.mxu0
      %v1782 = vadd.f32 0.0, %v1781
      %1783 = vmatmul.f32.gmra.mxu0 %v1424
      %v1784 = vpop.f32.mrf.mxu0
      %v1785 = vadd.f32 0.0, %v1784
      %1786 = vmatmul.f32.gmra.mxu0 %v1428
      %v1787 = vpop.f32.mrf.mxu0
      %v1788 = vadd.f32 0.0, %v1787
      %1789 = vmatmul.f32.gmra.mxu0 %v1432
      %v1790 = vpop.f32.mrf.mxu0
      %v1791 = vadd.f32 0.0, %v1790
      %1792 = vmatmul.f32.gmra.mxu0 %v1436
      %v1793 = vpop.f32.mrf.mxu0
      %v1794 = vadd.f32 0.0, %v1793
      %1795 = vmatmul.f32.gmra.mxu0 %v1440
      %v1796 = vpop.f32.mrf.mxu0
      %v1797 = vadd.f32 0.0, %v1796
      %1798 = vmatmul.f32.gmra.mxu0 %v1444
      %v1799 = vpop.f32.mrf.mxu0
      %v1800 = vadd.f32 0.0, %v1799
      %1801 = vmatmul.f32.gmra.mxu0 %v1448
      %v1802 = vpop.f32.mrf.mxu0
      %v1803 = vadd.f32 0.0, %v1802
      %1804 = vmatmul.f32.gmra.mxu0 %v1452
      %v1805 = vpop.f32.mrf.mxu0
      %v1806 = vadd.f32 0.0, %v1805
      %1807 = vmatmul.f32.gmra.mxu0 %v1456
      %v1808 = vpop.f32.mrf.mxu0
      %v1809 = vadd.f32 0.0, %v1808
      %1810 = vmatmul.f32.gmra.mxu0 %v1460
      %v1811 = vpop.f32.mrf.mxu0
      %v1812 = vadd.f32 0.0, %v1811
      %1813 = vmatmul.f32.gmra.mxu0 %v1464
      %v1814 = vpop.f32.mrf.mxu0
      %v1815 = vadd.f32 0.0, %v1814
      %1816 = vmatmul.f32.gmra.mxu0 %v1468
      %v1817 = vpop.f32.mrf.mxu0
      %v1818 = vadd.f32 0.0, %v1817
      %1819 = vmatmul.f32.gmra.mxu0 %v1472
      %v1820 = vpop.f32.mrf.mxu0
      %v1821 = vadd.f32 0.0, %v1820
      %1822 = vmatmul.f32.gmra.mxu0 %v1476
      %v1823 = vpop.f32.mrf.mxu0
      %v1824 = vadd.f32 0.0, %v1823
      %1825 = vmatmul.f32.gmra.mxu0 %v1480
      %v1826 = vpop.f32.mrf.mxu0
      %v1827 = vadd.f32 0.0, %v1826
      %1828 = vmatmul.f32.gmra.mxu0 %v1484
      %v1829 = vpop.f32.mrf.mxu0
      %v1830 = vadd.f32 0.0, %v1829
      %1831 = vmatmul.f32.gmra.mxu0 %v1488
      %v1832 = vpop.f32.mrf.mxu0
      %v1833 = vadd.f32 0.0, %v1832
      %1834 = vmatmul.f32.gmra.mxu0 %v1492
      %v1835 = vpop.f32.mrf.mxu0
      %v1836 = vadd.f32 0.0, %v1835
      %1837 = vmatmul.f32.gmra.mxu0 %v1496
      %v1838 = vpop.f32.mrf.mxu0
      %v1839 = vadd.f32 0.0, %v1838
      %1840 = vmatmul.f32.gmra.mxu0 %v1500
      %v1841 = vpop.f32.mrf.mxu0
      %v1842 = vadd.f32 0.0, %v1841
      %1843 = vmatmul.f32.gmra.mxu0 %v1504
      %v1844 = vpop.f32.mrf.mxu0
      %v1845 = vadd.f32 0.0, %v1844
      %1846 = vmatmul.f32.gmra.mxu0 %v1508
      %v1847 = vpop.f32.mrf.mxu0
      %v1848 = vadd.f32 0.0, %v1847
      %1849 = vmatmul.f32.gmra.mxu0 %v1512
      %v1850 = vpop.f32.mrf.mxu0
      %v1851 = vadd.f32 0.0, %v1850
      %1852 = vmatmul.f32.gmra.mxu0 %v1516
      %v1853 = vpop.f32.mrf.mxu0
      %v1854 = vadd.f32 0.0, %v1853
      %1855 = vdwg.mxu0
      %1856 = vmatpush.xpose.msra.mxu0 0.0
      %1857 = vmatpush.xpose.msra.mxu0 0.0
      %1858 = vmatpush.xpose.msra.mxu0 0.0
      %1859 = vmatpush.xpose.msra.mxu0 0.0
      %1860 = vmatpush.xpose.msra.mxu0 0.0
      %1861 = vmatpush.xpose.msra.mxu0 0.0
      %1862 = vmatpush.xpose.msra.mxu0 0.0
      %1863 = vmatpush.xpose.msra.mxu0 0.0
      %1864 = vmatpush.xpose.msra.mxu0 0.0
      %1865 = vmatpush.xpose.msra.mxu0 0.0
      %1866 = vmatpush.xpose.msra.mxu0 0.0
      %1867 = vmatpush.xpose.msra.mxu0 0.0
      %1868 = vmatpush.xpose.msra.mxu0 0.0
      %1869 = vmatpush.xpose.msra.mxu0 0.0
      %1870 = vmatpush.xpose.msra.mxu0 0.0
      %1871 = vmatpush.xpose.msra.mxu0 %v261
      %1872 = vmatmul.f32.gmra.mxu0 %v1394
      %v1873 = vpop.f32.mrf.mxu0
      %v1874 = vadd.f32 %v1761, %v1873
      %1875 = vmatmul.f32.gmra.mxu0 %v1398
      %v1876 = vpop.f32.mrf.mxu0
      %v1877 = vadd.f32 %v1764, %v1876
      %1878 = vmatmul.f32.gmra.mxu0 %v1402
      %v1879 = vpop.f32.mrf.mxu0
      %v1880 = vadd.f32 %v1767, %v1879
      %1881 = vmatmul.f32.gmra.mxu0 %v1406
      %v1882 = vpop.f32.mrf.mxu0
      %v1883 = vadd.f32 %v1770, %v1882
      %1884 = vmatmul.f32.gmra.mxu0 %v1410
      %v1885 = vpop.f32.mrf.mxu0
      %v1886 = vadd.f32 %v1773, %v1885
      %1887 = vmatmul.f32.gmra.mxu0 %v1414
      %v1888 = vpop.f32.mrf.mxu0
      %v1889 = vadd.f32 %v1776, %v1888
      %1890 = vmatmul.f32.gmra.mxu0 %v1418
      %v1891 = vpop.f32.mrf.mxu0
      %v1892 = vadd.f32 %v1779, %v1891
      %1893 = vmatmul.f32.gmra.mxu0 %v1422
      %v1894 = vpop.f32.mrf.mxu0
      %v1895 = vadd.f32 %v1782, %v1894
      %1896 = vmatmul.f32.gmra.mxu0 %v1426
      %v1897 = vpop.f32.mrf.mxu0
      %v1898 = vadd.f32 %v1785, %v1897
      %1899 = vmatmul.f32.gmra.mxu0 %v1430
      %v1900 = vpop.f32.mrf.mxu0
      %v1901 = vadd.f32 %v1788, %v1900
      %1902 = vmatmul.f32.gmra.mxu0 %v1434
      %v1903 = vpop.f32.mrf.mxu0
      %v1904 = vadd.f32 %v1791, %v1903
      %1905 = vmatmul.f32.gmra.mxu0 %v1438
      %v1906 = vpop.f32.mrf.mxu0
      %v1907 = vadd.f32 %v1794, %v1906
      %1908 = vmatmul.f32.gmra.mxu0 %v1442
      %v1909 = vpop.f32.mrf.mxu0
      %v1910 = vadd.f32 %v1797, %v1909
      %1911 = vmatmul.f32.gmra.mxu0 %v1446
      %v1912 = vpop.f32.mrf.mxu0
      %v1913 = vadd.f32 %v1800, %v1912
      %1914 = vmatmul.f32.gmra.mxu0 %v1450
      %v1915 = vpop.f32.mrf.mxu0
      %v1916 = vadd.f32 %v1803, %v1915
      %1917 = vmatmul.f32.gmra.mxu0 %v1454
      %v1918 = vpop.f32.mrf.mxu0
      %v1919 = vadd.f32 %v1806, %v1918
      %1920 = vmatmul.f32.gmra.mxu0 %v1458
      %v1921 = vpop.f32.mrf.mxu0
      %v1922 = vadd.f32 %v1809, %v1921
      %1923 = vmatmul.f32.gmra.mxu0 %v1462
      %v1924 = vpop.f32.mrf.mxu0
      %v1925 = vadd.f32 %v1812, %v1924
      %1926 = vmatmul.f32.gmra.mxu0 %v1466
      %v1927 = vpop.f32.mrf.mxu0
      %v1928 = vadd.f32 %v1815, %v1927
      %1929 = vmatmul.f32.gmra.mxu0 %v1470
      %v1930 = vpop.f32.mrf.mxu0
      %v1931 = vadd.f32 %v1818, %v1930
      %1932 = vmatmul.f32.gmra.mxu0 %v1474
      %v1933 = vpop.f32.mrf.mxu0
      %v1934 = vadd.f32 %v1821, %v1933
      %1935 = vmatmul.f32.gmra.mxu0 %v1478
      %v1936 = vpop.f32.mrf.mxu0
      %v1937 = vadd.f32 %v1824, %v1936
      %1938 = vmatmul.f32.gmra.mxu0 %v1482
      %v1939 = vpop.f32.mrf.mxu0
      %v1940 = vadd.f32 %v1827, %v1939
      %1941 = vmatmul.f32.gmra.mxu0 %v1486
      %v1942 = vpop.f32.mrf.mxu0
      %v1943 = vadd.f32 %v1830, %v1942
      %1944 = vmatmul.f32.gmra.mxu0 %v1490
      %v1945 = vpop.f32.mrf.mxu0
      %v1946 = vadd.f32 %v1833, %v1945
      %1947 = vmatmul.f32.gmra.mxu0 %v1494
      %v1948 = vpop.f32.mrf.mxu0
      %v1949 = vadd.f32 %v1836, %v1948
      %1950 = vmatmul.f32.gmra.mxu0 %v1498
      %v1951 = vpop.f32.mrf.mxu0
      %v1952 = vadd.f32 %v1839, %v1951
      %1953 = vmatmul.f32.gmra.mxu0 %v1502
      %v1954 = vpop.f32.mrf.mxu0
      %v1955 = vadd.f32 %v1842, %v1954
      %1956 = vmatmul.f32.gmra.mxu0 %v1506
      %v1957 = vpop.f32.mrf.mxu0
      %v1958 = vadd.f32 %v1845, %v1957
      %1959 = vmatmul.f32.gmra.mxu0 %v1510
      %v1960 = vpop.f32.mrf.mxu0
      %v1961 = vadd.f32 %v1848, %v1960
      %1962 = vmatmul.f32.gmra.mxu0 %v1514
      %v1963 = vpop.f32.mrf.mxu0
      %v1964 = vadd.f32 %v1851, %v1963
      %1965 = vmatmul.f32.gmra.mxu0 %v1518
      %v1966 = vpop.f32.mrf.mxu0
      %v1967 = vadd.f32 %v1854, %v1966
      %1968 = vdwg.mxu0
      %v1969 = vmul.f32 %v1874, %v1711
      %v1970 = vmul.f32 %v1877, %v1712
      %v1971 = vmul.f32 %v1880, %v1713
      %v1972 = vmul.f32 %v1883, %v1714
      %v1973 = vmul.f32 %v1886, %v1715
      %v1974 = vmul.f32 %v1889, %v1716
      %v1975 = vmul.f32 %v1892, %v1717
      %v1976 = vmul.f32 %v1895, %v1718
      %v1977 = vmul.f32 %v1898, %v1719
      %v1978 = vmul.f32 %v1901, %v1720
      %v1979 = vmul.f32 %v1904, %v1721
      %v1980 = vmul.f32 %v1907, %v1722
      %v1981 = vmul.f32 %v1910, %v1723
      %v1982 = vmul.f32 %v1913, %v1724
      %v1983 = vmul.f32 %v1916, %v1725
      %v1984 = vmul.f32 %v1919, %v1726
      %v1985 = vmul.f32 %v1922, %v1727
      %v1986 = vmul.f32 %v1925, %v1728
      %v1987 = vmul.f32 %v1928, %v1729
      %v1988 = vmul.f32 %v1931, %v1730
      %v1989 = vmul.f32 %v1934, %v1731
      %v1990 = vmul.f32 %v1937, %v1732
      %v1991 = vmul.f32 %v1940, %v1733
      %v1992 = vmul.f32 %v1943, %v1734
      %v1993 = vmul.f32 %v1946, %v1735
      %v1994 = vmul.f32 %v1949, %v1736
      %v1995 = vmul.f32 %v1952, %v1737
      %v1996 = vmul.f32 %v1955, %v1738
      %v1997 = vmul.f32 %v1958, %v1739
      %v1998 = vmul.f32 %v1961, %v1740
      %v1999 = vmul.f32 %v1964, %v1741
      %v2000 = vmul.f32 %v1967, %v1742
      %v2001 = vld [vmem:[%s2] sm:$0x3]
      %v2002 = vrot.slane %v235, 2
      %v2003 = vrot.slane %v258, 2
      %2006 = vxpose.xlu0.b32.start [1/16] %v2002, 128
      %2007 = vxpose.xlu0.b32.cont [2/16] 0.0, 128
      %2008 = vxpose.xlu0.b32.cont [3/16] 0.0, 128
      %2009 = vxpose.xlu0.b32.cont [4/16] 0.0, 128
      %2010 = vxpose.xlu0.b32.cont [5/16] 0.0, 128
      %2011 = vxpose.xlu0.b32.cont [6/16] 0.0, 128
      %2012 = vxpose.xlu0.b32.cont [7/16] 0.0, 128
      %2013 = vxpose.xlu0.b32.cont [8/16] 0.0, 128
      %2014 = vxpose.xlu0.b32.cont [9/16] 0.0, 128
      %2015 = vxpose.xlu0.b32.cont [10/16] 0.0, 128
      %2016 = vxpose.xlu0.b32.cont [11/16] 0.0, 128
      %2017 = vxpose.xlu0.b32.cont [12/16] 0.0, 128
      %2018 = vxpose.xlu0.b32.cont [13/16] 0.0, 128
      %2019 = vxpose.xlu0.b32.cont [14/16] 0.0, 128
      %2020 = vxpose.xlu0.b32.cont [15/16] 0.0, 128
      %2021 = vxpose.xlu0.b32.end [16/16] 0.0, 128
      %v2022 = vpop.trf.xlu0
      %v2023 = vpop.trf.xlu0
      %v2024 = vpop.trf.xlu0
      %v2025 = vpop.trf.xlu0
      %v2026 = vpop.trf.xlu0
      %v2027 = vpop.trf.xlu0
      %v2028 = vpop.trf.xlu0
      %v2029 = vpop.trf.xlu0
      %v2030 = vpop.trf.xlu0
      %v2031 = vpop.trf.xlu0
      %v2032 = vpop.trf.xlu0
      %v2033 = vpop.trf.xlu0
      %v2034 = vpop.trf.xlu0
      %v2035 = vpop.trf.xlu0
      %v2036 = vpop.trf.xlu0
      %v2037 = vpop.trf.xlu0
      %2038 = vxpose.xlu0.b32.start [1/16] %v2003, 128
      %2039 = vxpose.xlu0.b32.cont [2/16] 0.0, 128
      %2040 = vxpose.xlu0.b32.cont [3/16] 0.0, 128
      %2041 = vxpose.xlu0.b32.cont [4/16] 0.0, 128
      %2042 = vxpose.xlu0.b32.cont [5/16] 0.0, 128
      %2043 = vxpose.xlu0.b32.cont [6/16] 0.0, 128
      %2044 = vxpose.xlu0.b32.cont [7/16] 0.0, 128
      %2045 = vxpose.xlu0.b32.cont [8/16] 0.0, 128
      %2046 = vxpose.xlu0.b32.cont [9/16] 0.0, 128
      %2047 = vxpose.xlu0.b32.cont [10/16] 0.0, 128
      %2048 = vxpose.xlu0.b32.cont [11/16] 0.0, 128
      %2049 = vxpose.xlu0.b32.cont [12/16] 0.0, 128
      %2050 = vxpose.xlu0.b32.cont [13/16] 0.0, 128
      %2051 = vxpose.xlu0.b32.cont [14/16] 0.0, 128
      %2052 = vxpose.xlu0.b32.cont [15/16] 0.0, 128
      %2053 = vxpose.xlu0.b32.end [16/16] 0.0, 128
      %v2054 = vpop.trf.xlu0
      %v2055 = vpop.trf.xlu0
      %v2056 = vpop.trf.xlu0
      %v2057 = vpop.trf.xlu0
      %v2058 = vpop.trf.xlu0
      %v2059 = vpop.trf.xlu0
      %v2060 = vpop.trf.xlu0
      %v2061 = vpop.trf.xlu0
      %v2062 = vpop.trf.xlu0
      %v2063 = vpop.trf.xlu0
      %v2064 = vpop.trf.xlu0
      %v2065 = vpop.trf.xlu0
      %v2066 = vpop.trf.xlu0
      %v2067 = vpop.trf.xlu0
      %v2068 = vpop.trf.xlu0
      %v2069 = vpop.trf.xlu0
      %v2070 = vrot.slane %v235, 6
      %v2071 = vrot.slane %v258, 6
      %v2073 = vsel %vm839, %v2022, 0
      %v2076 = vsel %vm839, %v2023, 0
      %v2079 = vsel %vm839, %v2024, 0
      %v2082 = vsel %vm839, %v2025, 0
      %v2085 = vsel %vm839, %v2026, 0
      %v2088 = vsel %vm839, %v2027, 0
      %v2091 = vsel %vm839, %v2028, 0
      %v2094 = vsel %vm839, %v2029, 0
      %v2097 = vsel %vm839, %v2030, 0
      %v2100 = vsel %vm839, %v2031, 0
      %v2103 = vsel %vm839, %v2032, 0
      %v2106 = vsel %vm839, %v2033, 0
      %v2109 = vsel %vm839, %v2034, 0
      %v2112 = vsel %vm839, %v2035, 0
      %v2115 = vsel %vm839, %v2036, 0
      %v2118 = vsel %vm839, %v2037, 0
      %v2121 = vsel %vm839, %v2054, 0
      %v2124 = vsel %vm839, %v2055, 0
      %v2127 = vsel %vm839, %v2056, 0
      %v2130 = vsel %vm839, %v2057, 0
      %v2133 = vsel %vm839, %v2058, 0
      %v2136 = vsel %vm839, %v2059, 0
      %v2139 = vsel %vm839, %v2060, 0
      %v2142 = vsel %vm839, %v2061, 0
      %v2145 = vsel %vm839, %v2062, 0
      %v2148 = vsel %vm839, %v2063, 0
      %v2151 = vsel %vm839, %v2064, 0
      %v2154 = vsel %vm839, %v2065, 0
      %v2157 = vsel %vm839, %v2066, 0
      %v2160 = vsel %vm839, %v2067, 0
      %v2163 = vsel %vm839, %v2068, 0
      %v2166 = vsel %vm839, %v2069, 0
      %v2168 = vsel %vm936, %v2070, 0
      %v2170 = vsel %vm936, %v2071, 0
      %2172 = vmatpush.msra.mxu0 0.0
      %2173 = vmatpush.msra.mxu0 0.0
      %2174 = vmatpush.msra.mxu0 0.0
      %2175 = vmatpush.msra.mxu0 0.0
      %2176 = vmatpush.msra.mxu0 0.0
      %2177 = vmatpush.msra.mxu0 0.0
      %2178 = vmatpush.msra.mxu0 0.0
      %2179 = vmatpush.msra.mxu0 0.0
      %2180 = vmatpush.msra.mxu0 0.0
      %2181 = vmatpush.msra.mxu0 0.0
      %2182 = vmatpush.msra.mxu0 0.0
      %2183 = vmatpush.msra.mxu0 0.0
      %2184 = vmatpush.msra.mxu0 0.0
      %2185 = vmatpush.msra.mxu0 0.0
      %2186 = vmatpush.msra.mxu0 0.0
      %2187 = vmatpush.msra.mxu0 %v2168
      %2188 = vmatmul.f32.gmra.mxu0 %v2073
      %v2189 = vpop.f32.mrf.mxu0
      %v2190 = vadd.f32 0.0, %v2189
      %2191 = vmatmul.f32.gmra.mxu0 %v2076
      %v2192 = vpop.f32.mrf.mxu0
      %v2193 = vadd.f32 0.0, %v2192
      %2194 = vmatmul.f32.gmra.mxu0 %v2079
      %v2195 = vpop.f32.mrf.mxu0
      %v2196 = vadd.f32 0.0, %v2195
      %2197 = vmatmul.f32.gmra.mxu0 %v2082
      %v2198 = vpop.f32.mrf.mxu0
      %v2199 = vadd.f32 0.0, %v2198
      %2200 = vmatmul.f32.gmra.mxu0 %v2085
      %v2201 = vpop.f32.mrf.mxu0
      %v2202 = vadd.f32 0.0, %v2201
      %2203 = vmatmul.f32.gmra.mxu0 %v2088
      %v2204 = vpop.f32.mrf.mxu0
      %v2205 = vadd.f32 0.0, %v2204
      %2206 = vmatmul.f32.gmra.mxu0 %v2091
      %v2207 = vpop.f32.mrf.mxu0
      %v2208 = vadd.f32 0.0, %v2207
      %2209 = vmatmul.f32.gmra.mxu0 %v2094
      %v2210 = vpop.f32.mrf.mxu0
      %v2211 = vadd.f32 0.0, %v2210
      %2212 = vmatmul.f32.gmra.mxu0 %v2097
      %v2213 = vpop.f32.mrf.mxu0
      %v2214 = vadd.f32 0.0, %v2213
      %2215 = vmatmul.f32.gmra.mxu0 %v2100
      %v2216 = vpop.f32.mrf.mxu0
      %v2217 = vadd.f32 0.0, %v2216
      %2218 = vmatmul.f32.gmra.mxu0 %v2103
      %v2219 = vpop.f32.mrf.mxu0
      %v2220 = vadd.f32 0.0, %v2219
      %2221 = vmatmul.f32.gmra.mxu0 %v2106
      %v2222 = vpop.f32.mrf.mxu0
      %v2223 = vadd.f32 0.0, %v2222
      %2224 = vmatmul.f32.gmra.mxu0 %v2109
      %v2225 = vpop.f32.mrf.mxu0
      %v2226 = vadd.f32 0.0, %v2225
      %2227 = vmatmul.f32.gmra.mxu0 %v2112
      %v2228 = vpop.f32.mrf.mxu0
      %v2229 = vadd.f32 0.0, %v2228
      %2230 = vmatmul.f32.gmra.mxu0 %v2115
      %v2231 = vpop.f32.mrf.mxu0
      %v2232 = vadd.f32 0.0, %v2231
      %2233 = vmatmul.f32.gmra.mxu0 %v2118
      %v2234 = vpop.f32.mrf.mxu0
      %v2235 = vadd.f32 0.0, %v2234
      %2236 = vmatmul.f32.gmra.mxu0 %v2121
      %v2237 = vpop.f32.mrf.mxu0
      %v2238 = vadd.f32 0.0, %v2237
      %2239 = vmatmul.f32.gmra.mxu0 %v2124
      %v2240 = vpop.f32.mrf.mxu0
      %v2241 = vadd.f32 0.0, %v2240
      %2242 = vmatmul.f32.gmra.mxu0 %v2127
      %v2243 = vpop.f32.mrf.mxu0
      %v2244 = vadd.f32 0.0, %v2243
      %2245 = vmatmul.f32.gmra.mxu0 %v2130
      %v2246 = vpop.f32.mrf.mxu0
      %v2247 = vadd.f32 0.0, %v2246
      %2248 = vmatmul.f32.gmra.mxu0 %v2133
      %v2249 = vpop.f32.mrf.mxu0
      %v2250 = vadd.f32 0.0, %v2249
      %2251 = vmatmul.f32.gmra.mxu0 %v2136
      %v2252 = vpop.f32.mrf.mxu0
      %v2253 = vadd.f32 0.0, %v2252
      %2254 = vmatmul.f32.gmra.mxu0 %v2139
      %v2255 = vpop.f32.mrf.mxu0
      %v2256 = vadd.f32 0.0, %v2255
      %2257 = vmatmul.f32.gmra.mxu0 %v2142
      %v2258 = vpop.f32.mrf.mxu0
      %v2259 = vadd.f32 0.0, %v2258
      %2260 = vmatmul.f32.gmra.mxu0 %v2145
      %v2261 = vpop.f32.mrf.mxu0
      %v2262 = vadd.f32 0.0, %v2261
      %2263 = vmatmul.f32.gmra.mxu0 %v2148
      %v2264 = vpop.f32.mrf.mxu0
      %v2265 = vadd.f32 0.0, %v2264
      %2266 = vmatmul.f32.gmra.mxu0 %v2151
      %v2267 = vpop.f32.mrf.mxu0
      %v2268 = vadd.f32 0.0, %v2267
      %2269 = vmatmul.f32.gmra.mxu0 %v2154
      %v2270 = vpop.f32.mrf.mxu0
      %v2271 = vadd.f32 0.0, %v2270
      %2272 = vmatmul.f32.gmra.mxu0 %v2157
      %v2273 = vpop.f32.mrf.mxu0
      %v2274 = vadd.f32 0.0, %v2273
      %2275 = vmatmul.f32.gmra.mxu0 %v2160
      %v2276 = vpop.f32.mrf.mxu0
      %v2277 = vadd.f32 0.0, %v2276
      %2278 = vmatmul.f32.gmra.mxu0 %v2163
      %v2279 = vpop.f32.mrf.mxu0
      %v2280 = vadd.f32 0.0, %v2279
      %2281 = vmatmul.f32.gmra.mxu0 %v2166
      %v2282 = vpop.f32.mrf.mxu0
      %v2283 = vadd.f32 0.0, %v2282
      %2284 = vdwg.mxu0
      %2285 = vmatpush.msra.mxu0 0.0
      %2286 = vmatpush.msra.mxu0 0.0
      %2287 = vmatpush.msra.mxu0 0.0
      %2288 = vmatpush.msra.mxu0 0.0
      %2289 = vmatpush.msra.mxu0 0.0
      %2290 = vmatpush.msra.mxu0 0.0
      %2291 = vmatpush.msra.mxu0 0.0
      %2292 = vmatpush.msra.mxu0 0.0
      %2293 = vmatpush.msra.mxu0 0.0
      %2294 = vmatpush.msra.mxu0 0.0
      %2295 = vmatpush.msra.mxu0 0.0
      %2296 = vmatpush.msra.mxu0 0.0
      %2297 = vmatpush.msra.mxu0 0.0
      %2298 = vmatpush.msra.mxu0 0.0
      %2299 = vmatpush.msra.mxu0 0.0
      %2300 = vmatpush.msra.mxu0 %v2170
      %2301 = vmatmul.f32.gmra.mxu0 %v2073
      %v2302 = vpop.f32.mrf.mxu0
      %v2303 = vadd.f32 0.0, %v2302
      %2304 = vmatmul.f32.gmra.mxu0 %v2076
      %v2305 = vpop.f32.mrf.mxu0
      %v2306 = vadd.f32 0.0, %v2305
      %2307 = vmatmul.f32.gmra.mxu0 %v2079
      %v2308 = vpop.f32.mrf.mxu0
      %v2309 = vadd.f32 0.0, %v2308
      %2310 = vmatmul.f32.gmra.mxu0 %v2082
      %v2311 = vpop.f32.mrf.mxu0
      %v2312 = vadd.f32 0.0, %v2311
      %2313 = vmatmul.f32.gmra.mxu0 %v2085
      %v2314 = vpop.f32.mrf.mxu0
      %v2315 = vadd.f32 0.0, %v2314
      %2316 = vmatmul.f32.gmra.mxu0 %v2088
      %v2317 = vpop.f32.mrf.mxu0
      %v2318 = vadd.f32 0.0, %v2317
      %2319 = vmatmul.f32.gmra.mxu0 %v2091
      %v2320 = vpop.f32.mrf.mxu0
      %v2321 = vadd.f32 0.0, %v2320
      %2322 = vmatmul.f32.gmra.mxu0 %v2094
      %v2323 = vpop.f32.mrf.mxu0
      %v2324 = vadd.f32 0.0, %v2323
      %2325 = vmatmul.f32.gmra.mxu0 %v2097
      %v2326 = vpop.f32.mrf.mxu0
      %v2327 = vadd.f32 0.0, %v2326
      %2328 = vmatmul.f32.gmra.mxu0 %v2100
      %v2329 = vpop.f32.mrf.mxu0
      %v2330 = vadd.f32 0.0, %v2329
      %2331 = vmatmul.f32.gmra.mxu0 %v2103
      %v2332 = vpop.f32.mrf.mxu0
      %v2333 = vadd.f32 0.0, %v2332
      %2334 = vmatmul.f32.gmra.mxu0 %v2106
      %v2335 = vpop.f32.mrf.mxu0
      %v2336 = vadd.f32 0.0, %v2335
      %2337 = vmatmul.f32.gmra.mxu0 %v2109
      %v2338 = vpop.f32.mrf.mxu0
      %v2339 = vadd.f32 0.0, %v2338
      %2340 = vmatmul.f32.gmra.mxu0 %v2112
      %v2341 = vpop.f32.mrf.mxu0
      %v2342 = vadd.f32 0.0, %v2341
      %2343 = vmatmul.f32.gmra.mxu0 %v2115
      %v2344 = vpop.f32.mrf.mxu0
      %v2345 = vadd.f32 0.0, %v2344
      %2346 = vmatmul.f32.gmra.mxu0 %v2118
      %v2347 = vpop.f32.mrf.mxu0
      %v2348 = vadd.f32 0.0, %v2347
      %2349 = vmatmul.f32.gmra.mxu0 %v2121
      %v2350 = vpop.f32.mrf.mxu0
      %v2351 = vadd.f32 0.0, %v2350
      %2352 = vmatmul.f32.gmra.mxu0 %v2124
      %v2353 = vpop.f32.mrf.mxu0
      %v2354 = vadd.f32 0.0, %v2353
      %2355 = vmatmul.f32.gmra.mxu0 %v2127
      %v2356 = vpop.f32.mrf.mxu0
      %v2357 = vadd.f32 0.0, %v2356
      %2358 = vmatmul.f32.gmra.mxu0 %v2130
      %v2359 = vpop.f32.mrf.mxu0
      %v2360 = vadd.f32 0.0, %v2359
      %2361 = vmatmul.f32.gmra.mxu0 %v2133
      %v2362 = vpop.f32.mrf.mxu0
      %v2363 = vadd.f32 0.0, %v2362
      %2364 = vmatmul.f32.gmra.mxu0 %v2136
      %v2365 = vpop.f32.mrf.mxu0
      %v2366 = vadd.f32 0.0, %v2365
      %2367 = vmatmul.f32.gmra.mxu0 %v2139
      %v2368 = vpop.f32.mrf.mxu0
      %v2369 = vadd.f32 0.0, %v2368
      %2370 = vmatmul.f32.gmra.mxu0 %v2142
      %v2371 = vpop.f32.mrf.mxu0
      %v2372 = vadd.f32 0.0, %v2371
      %2373 = vmatmul.f32.gmra.mxu0 %v2145
      %v2374 = vpop.f32.mrf.mxu0
      %v2375 = vadd.f32 0.0, %v2374
      %2376 = vmatmul.f32.gmra.mxu0 %v2148
      %v2377 = vpop.f32.mrf.mxu0
      %v2378 = vadd.f32 0.0, %v2377
      %2379 = vmatmul.f32.gmra.mxu0 %v2151
      %v2380 = vpop.f32.mrf.mxu0
      %v2381 = vadd.f32 0.0, %v2380
      %2382 = vmatmul.f32.gmra.mxu0 %v2154
      %v2383 = vpop.f32.mrf.mxu0
      %v2384 = vadd.f32 0.0, %v2383
      %2385 = vmatmul.f32.gmra.mxu0 %v2157
      %v2386 = vpop.f32.mrf.mxu0
      %v2387 = vadd.f32 0.0, %v2386
      %2388 = vmatmul.f32.gmra.mxu0 %v2160
      %v2389 = vpop.f32.mrf.mxu0
      %v2390 = vadd.f32 0.0, %v2389
      %2391 = vmatmul.f32.gmra.mxu0 %v2163
      %v2392 = vpop.f32.mrf.mxu0
      %v2393 = vadd.f32 0.0, %v2392
      %2394 = vmatmul.f32.gmra.mxu0 %v2166
      %v2395 = vpop.f32.mrf.mxu0
      %v2396 = vadd.f32 0.0, %v2395
      %2397 = vdwg.mxu0
      %v2398 = vsel %vm707, %v2190, -1e+30
      %v2399 = vsel %vm708, %v2303, -1e+30
      %v2400 = vsel %vm709, %v2193, -1e+30
      %v2401 = vsel %vm710, %v2306, -1e+30
      %v2402 = vsel %vm711, %v2196, -1e+30
      %v2403 = vsel %vm712, %v2309, -1e+30
      %v2404 = vsel %vm713, %v2199, -1e+30
      %v2405 = vsel %vm714, %v2312, -1e+30
      %v2406 = vsel %vm715, %v2202, -1e+30
      %v2407 = vsel %vm716, %v2315, -1e+30
      %v2408 = vsel %vm717, %v2205, -1e+30
      %v2409 = vsel %vm718, %v2318, -1e+30
      %v2410 = vsel %vm719, %v2208, -1e+30
      %v2411 = vsel %vm720, %v2321, -1e+30
      %v2412 = vsel %vm721, %v2211, -1e+30
      %v2413 = vsel %vm722, %v2324, -1e+30
      %v2414 = vsel %vm723, %v2214, -1e+30
      %v2415 = vsel %vm724, %v2327, -1e+30
      %v2416 = vsel %vm725, %v2217, -1e+30
      %v2417 = vsel %vm726, %v2330, -1e+30
      %v2418 = vsel %vm727, %v2220, -1e+30
      %v2419 = vsel %vm728, %v2333, -1e+30
      %v2420 = vsel %vm729, %v2223, -1e+30
      %v2421 = vsel %vm730, %v2336, -1e+30
      %v2422 = vsel %vm731, %v2226, -1e+30
      %v2423 = vsel %vm732, %v2339, -1e+30
      %v2424 = vsel %vm733, %v2229, -1e+30
      %v2425 = vsel %vm734, %v2342, -1e+30
      %v2426 = vsel %vm735, %v2232, -1e+30
      %v2427 = vsel %vm736, %v2345, -1e+30
      %v2428 = vsel %vm737, %v2235, -1e+30
      %v2429 = vsel %vm738, %v2348, -1e+30
      %v2430 = vsel %vm739, %v2238, -1e+30
      %v2431 = vsel %vm740, %v2351, -1e+30
      %v2432 = vsel %vm741, %v2241, -1e+30
      %v2433 = vsel %vm742, %v2354, -1e+30
      %v2434 = vsel %vm743, %v2244, -1e+30
      %v2435 = vsel %vm744, %v2357, -1e+30
      %v2436 = vsel %vm745, %v2247, -1e+30
      %v2437 = vsel %vm746, %v2360, -1e+30
      %v2438 = vsel %vm747, %v2250, -1e+30
      %v2439 = vsel %vm748, %v2363, -1e+30
      %v2440 = vsel %vm749, %v2253, -1e+30
      %v2441 = vsel %vm750, %v2366, -1e+30
      %v2442 = vsel %vm751, %v2256, -1e+30
      %v2443 = vsel %vm752, %v2369, -1e+30
      %v2444 = vsel %vm753, %v2259, -1e+30
      %v2445 = vsel %vm754, %v2372, -1e+30
      %v2446 = vsel %vm755, %v2262, -1e+30
      %v2447 = vsel %vm756, %v2375, -1e+30
      %v2448 = vsel %vm757, %v2265, -1e+30
      %v2449 = vsel %vm758, %v2378, -1e+30
      %v2450 = vsel %vm759, %v2268, -1e+30
      %v2451 = vsel %vm760, %v2381, -1e+30
      %v2452 = vsel %vm761, %v2271, -1e+30
      %v2453 = vsel %vm762, %v2384, -1e+30
      %v2454 = vsel %vm763, %v2274, -1e+30
      %v2455 = vsel %vm764, %v2387, -1e+30
      %v2456 = vsel %vm765, %v2277, -1e+30
      %v2457 = vsel %vm766, %v2390, -1e+30
      %v2458 = vsel %vm767, %v2280, -1e+30
      %v2459 = vsel %vm768, %v2393, -1e+30
      %v2460 = vsel %vm769, %v2283, -1e+30
      %v2461 = vsel %vm770, %v2396, -1e+30
      %v2462 = vmax.f32 %v2398, %v2399
      %2463 = vmax.xlane.f32.xlu0 %v2462
      %v2464 = vpop.xlane.xlu0 %2463
      %v2465 = vmax.f32 %v2400, %v2401
      %2466 = vmax.xlane.f32.xlu0 %v2465
      %v2467 = vpop.xlane.xlu0 %2466
      %v2468 = vmax.f32 %v2402, %v2403
      %2469 = vmax.xlane.f32.xlu0 %v2468
      %v2470 = vpop.xlane.xlu0 %2469
      %v2471 = vmax.f32 %v2404, %v2405
      %2472 = vmax.xlane.f32.xlu0 %v2471
      %v2473 = vpop.xlane.xlu0 %2472
      %v2474 = vmax.f32 %v2406, %v2407
      %2475 = vmax.xlane.f32.xlu0 %v2474
      %v2476 = vpop.xlane.xlu0 %2475
      %v2477 = vmax.f32 %v2408, %v2409
      %2478 = vmax.xlane.f32.xlu0 %v2477
      %v2479 = vpop.xlane.xlu0 %2478
      %v2480 = vmax.f32 %v2410, %v2411
      %2481 = vmax.xlane.f32.xlu0 %v2480
      %v2482 = vpop.xlane.xlu0 %2481
      %v2483 = vmax.f32 %v2412, %v2413
      %2484 = vmax.xlane.f32.xlu0 %v2483
      %v2485 = vpop.xlane.xlu0 %2484
      %v2486 = vmax.f32 %v2414, %v2415
      %2487 = vmax.xlane.f32.xlu0 %v2486
      %v2488 = vpop.xlane.xlu0 %2487
      %v2489 = vmax.f32 %v2416, %v2417
      %2490 = vmax.xlane.f32.xlu0 %v2489
      %v2491 = vpop.xlane.xlu0 %2490
      %v2492 = vmax.f32 %v2418, %v2419
      %2493 = vmax.xlane.f32.xlu0 %v2492
      %v2494 = vpop.xlane.xlu0 %2493
      %v2495 = vmax.f32 %v2420, %v2421
      %2496 = vmax.xlane.f32.xlu0 %v2495
      %v2497 = vpop.xlane.xlu0 %2496
      %v2498 = vmax.f32 %v2422, %v2423
      %2499 = vmax.xlane.f32.xlu0 %v2498
      %v2500 = vpop.xlane.xlu0 %2499
      %v2501 = vmax.f32 %v2424, %v2425
      %2502 = vmax.xlane.f32.xlu0 %v2501
      %v2503 = vpop.xlane.xlu0 %2502
      %v2504 = vmax.f32 %v2426, %v2427
      %2505 = vmax.xlane.f32.xlu0 %v2504
      %v2506 = vpop.xlane.xlu0 %2505
      %v2507 = vmax.f32 %v2428, %v2429
      %2508 = vmax.xlane.f32.xlu0 %v2507
      %v2509 = vpop.xlane.xlu0 %2508
      %v2510 = vmax.f32 %v2430, %v2431
      %2511 = vmax.xlane.f32.xlu0 %v2510
      %v2512 = vpop.xlane.xlu0 %2511
      %v2513 = vmax.f32 %v2432, %v2433
      %2514 = vmax.xlane.f32.xlu0 %v2513
      %v2515 = vpop.xlane.xlu0 %2514
      %v2516 = vmax.f32 %v2434, %v2435
      %2517 = vmax.xlane.f32.xlu0 %v2516
      %v2518 = vpop.xlane.xlu0 %2517
      %v2519 = vmax.f32 %v2436, %v2437
      %2520 = vmax.xlane.f32.xlu0 %v2519
      %v2521 = vpop.xlane.xlu0 %2520
      %v2522 = vmax.f32 %v2438, %v2439
      %2523 = vmax.xlane.f32.xlu0 %v2522
      %v2524 = vpop.xlane.xlu0 %2523
      %v2525 = vmax.f32 %v2440, %v2441
      %2526 = vmax.xlane.f32.xlu0 %v2525
      %v2527 = vpop.xlane.xlu0 %2526
      %v2528 = vmax.f32 %v2442, %v2443
      %2529 = vmax.xlane.f32.xlu0 %v2528
      %v2530 = vpop.xlane.xlu0 %2529
      %v2531 = vmax.f32 %v2444, %v2445
      %2532 = vmax.xlane.f32.xlu0 %v2531
      %v2533 = vpop.xlane.xlu0 %2532
      %v2534 = vmax.f32 %v2446, %v2447
      %2535 = vmax.xlane.f32.xlu0 %v2534
      %v2536 = vpop.xlane.xlu0 %2535
      %v2537 = vmax.f32 %v2448, %v2449
      %2538 = vmax.xlane.f32.xlu0 %v2537
      %v2539 = vpop.xlane.xlu0 %2538
      %v2540 = vmax.f32 %v2450, %v2451
      %2541 = vmax.xlane.f32.xlu0 %v2540
      %v2542 = vpop.xlane.xlu0 %2541
      %v2543 = vmax.f32 %v2452, %v2453
      %2544 = vmax.xlane.f32.xlu0 %v2543
      %v2545 = vpop.xlane.xlu0 %2544
      %v2546 = vmax.f32 %v2454, %v2455
      %2547 = vmax.xlane.f32.xlu0 %v2546
      %v2548 = vpop.xlane.xlu0 %2547
      %v2549 = vmax.f32 %v2456, %v2457
      %2550 = vmax.xlane.f32.xlu0 %v2549
      %v2551 = vpop.xlane.xlu0 %2550
      %v2552 = vmax.f32 %v2458, %v2459
      %2553 = vmax.xlane.f32.xlu0 %v2552
      %v2554 = vpop.xlane.xlu0 %2553
      %v2555 = vmax.f32 %v2460, %v2461
      %2556 = vmax.xlane.f32.xlu0 %v2555
      %v2557 = vpop.xlane.xlu0 %2556
      %v2558 = vsub.f32 %v2398, %v2464
      %v2559 = vsub.f32 %v2399, %v2464
      %v2560 = vsub.f32 %v2400, %v2467
      %v2561 = vsub.f32 %v2401, %v2467
      %v2562 = vsub.f32 %v2402, %v2470
      %v2563 = vsub.f32 %v2403, %v2470
      %v2564 = vsub.f32 %v2404, %v2473
      %v2565 = vsub.f32 %v2405, %v2473
      %v2566 = vsub.f32 %v2406, %v2476
      %v2567 = vsub.f32 %v2407, %v2476
      %v2568 = vsub.f32 %v2408, %v2479
      %v2569 = vsub.f32 %v2409, %v2479
      %v2570 = vsub.f32 %v2410, %v2482
      %v2571 = vsub.f32 %v2411, %v2482
      %v2572 = vsub.f32 %v2412, %v2485
      %v2573 = vsub.f32 %v2413, %v2485
      %v2574 = vsub.f32 %v2414, %v2488
      %v2575 = vsub.f32 %v2415, %v2488
      %v2576 = vsub.f32 %v2416, %v2491
      %v2577 = vsub.f32 %v2417, %v2491
      %v2578 = vsub.f32 %v2418, %v2494
      %v2579 = vsub.f32 %v2419, %v2494
      %v2580 = vsub.f32 %v2420, %v2497
      %v2581 = vsub.f32 %v2421, %v2497
      %v2582 = vsub.f32 %v2422, %v2500
      %v2583 = vsub.f32 %v2423, %v2500
      %v2584 = vsub.f32 %v2424, %v2503
      %v2585 = vsub.f32 %v2425, %v2503
      %v2586 = vsub.f32 %v2426, %v2506
      %v2587 = vsub.f32 %v2427, %v2506
      %v2588 = vsub.f32 %v2428, %v2509
      %v2589 = vsub.f32 %v2429, %v2509
      %v2590 = vsub.f32 %v2430, %v2512
      %v2591 = vsub.f32 %v2431, %v2512
      %v2592 = vsub.f32 %v2432, %v2515
      %v2593 = vsub.f32 %v2433, %v2515
      %v2594 = vsub.f32 %v2434, %v2518
      %v2595 = vsub.f32 %v2435, %v2518
      %v2596 = vsub.f32 %v2436, %v2521
      %v2597 = vsub.f32 %v2437, %v2521
      %v2598 = vsub.f32 %v2438, %v2524
      %v2599 = vsub.f32 %v2439, %v2524
      %v2600 = vsub.f32 %v2440, %v2527
      %v2601 = vsub.f32 %v2441, %v2527
      %v2602 = vsub.f32 %v2442, %v2530
      %v2603 = vsub.f32 %v2443, %v2530
      %v2604 = vsub.f32 %v2444, %v2533
      %v2605 = vsub.f32 %v2445, %v2533
      %v2606 = vsub.f32 %v2446, %v2536
      %v2607 = vsub.f32 %v2447, %v2536
      %v2608 = vsub.f32 %v2448, %v2539
      %v2609 = vsub.f32 %v2449, %v2539
      %v2610 = vsub.f32 %v2450, %v2542
      %v2611 = vsub.f32 %v2451, %v2542
      %v2612 = vsub.f32 %v2452, %v2545
      %v2613 = vsub.f32 %v2453, %v2545
      %v2614 = vsub.f32 %v2454, %v2548
      %v2615 = vsub.f32 %v2455, %v2548
      %v2616 = vsub.f32 %v2456, %v2551
      %v2617 = vsub.f32 %v2457, %v2551
      %v2618 = vsub.f32 %v2458, %v2554
      %v2619 = vsub.f32 %v2459, %v2554
      %v2620 = vsub.f32 %v2460, %v2557
      %v2621 = vsub.f32 %v2461, %v2557
      %v2622 = vmul.f32 %v2558, 1.442695
      %v2623 = vpow.pop %v2622
      %v2624 = vmul.f32 %v2559, 1.442695
      %v2625 = vpow.pop %v2624
      %v2626 = vmul.f32 %v2560, 1.442695
      %v2627 = vpow.pop %v2626
      %v2628 = vmul.f32 %v2561, 1.442695
      %v2629 = vpow.pop %v2628
      %v2630 = vmul.f32 %v2562, 1.442695
      %v2631 = vpow.pop %v2630
      %v2632 = vmul.f32 %v2563, 1.442695
      %v2633 = vpow.pop %v2632
      %v2634 = vmul.f32 %v2564, 1.442695
      %v2635 = vpow.pop %v2634
      %v2636 = vmul.f32 %v2565, 1.442695
      %v2637 = vpow.pop %v2636
      %v2638 = vmul.f32 %v2566, 1.442695
      %v2639 = vpow.pop %v2638
      %v2640 = vmul.f32 %v2567, 1.442695
      %v2641 = vpow.pop %v2640
      %v2642 = vmul.f32 %v2568, 1.442695
      %v2643 = vpow.pop %v2642
      %v2644 = vmul.f32 %v2569, 1.442695
      %v2645 = vpow.pop %v2644
      %v2646 = vmul.f32 %v2570, 1.442695
      %v2647 = vpow.pop %v2646
      %v2648 = vmul.f32 %v2571, 1.442695
      %v2649 = vpow.pop %v2648
      %v2650 = vmul.f32 %v2572, 1.442695
      %v2651 = vpow.pop %v2650
      %v2652 = vmul.f32 %v2573, 1.442695
      %v2653 = vpow.pop %v2652
      %v2654 = vmul.f32 %v2574, 1.442695
      %v2655 = vpow.pop %v2654
      %v2656 = vmul.f32 %v2575, 1.442695
      %v2657 = vpow.pop %v2656
      %v2658 = vmul.f32 %v2576, 1.442695
      %v2659 = vpow.pop %v2658
      %v2660 = vmul.f32 %v2577, 1.442695
      %v2661 = vpow.pop %v2660
      %v2662 = vmul.f32 %v2578, 1.442695
      %v2663 = vpow.pop %v2662
      %v2664 = vmul.f32 %v2579, 1.442695
      %v2665 = vpow.pop %v2664
      %v2666 = vmul.f32 %v2580, 1.442695
      %v2667 = vpow.pop %v2666
      %v2668 = vmul.f32 %v2581, 1.442695
      %v2669 = vpow.pop %v2668
      %v2670 = vmul.f32 %v2582, 1.442695
      %v2671 = vpow.pop %v2670
      %v2672 = vmul.f32 %v2583, 1.442695
      %v2673 = vpow.pop %v2672
      %v2674 = vmul.f32 %v2584, 1.442695
      %v2675 = vpow.pop %v2674
      %v2676 = vmul.f32 %v2585, 1.442695
      %v2677 = vpow.pop %v2676
      %v2678 = vmul.f32 %v2586, 1.442695
      %v2679 = vpow.pop %v2678
      %v2680 = vmul.f32 %v2587, 1.442695
      %v2681 = vpow.pop %v2680
      %v2682 = vmul.f32 %v2588, 1.442695
      %v2683 = vpow.pop %v2682
      %v2684 = vmul.f32 %v2589, 1.442695
      %v2685 = vpow.pop %v2684
      %v2686 = vmul.f32 %v2590, 1.442695
      %v2687 = vpow.pop %v2686
      %v2688 = vmul.f32 %v2591, 1.442695
      %v2689 = vpow.pop %v2688
      %v2690 = vmul.f32 %v2592, 1.442695
      %v2691 = vpow.pop %v2690
      %v2692 = vmul.f32 %v2593, 1.442695
      %v2693 = vpow.pop %v2692
      %v2694 = vmul.f32 %v2594, 1.442695
      %v2695 = vpow.pop %v2694
      %v2696 = vmul.f32 %v2595, 1.442695
      %v2697 = vpow.pop %v2696
      %v2698 = vmul.f32 %v2596, 1.442695
      %v2699 = vpow.pop %v2698
      %v2700 = vmul.f32 %v2597, 1.442695
      %v2701 = vpow.pop %v2700
      %v2702 = vmul.f32 %v2598, 1.442695
      %v2703 = vpow.pop %v2702
      %v2704 = vmul.f32 %v2599, 1.442695
      %v2705 = vpow.pop %v2704
      %v2706 = vmul.f32 %v2600, 1.442695
      %v2707 = vpow.pop %v2706
      %v2708 = vmul.f32 %v2601, 1.442695
      %v2709 = vpow.pop %v2708
      %v2710 = vmul.f32 %v2602, 1.442695
      %v2711 = vpow.pop %v2710
      %v2712 = vmul.f32 %v2603, 1.442695
      %v2713 = vpow.pop %v2712
      %v2714 = vmul.f32 %v2604, 1.442695
      %v2715 = vpow.pop %v2714
      %v2716 = vmul.f32 %v2605, 1.442695
      %v2717 = vpow.pop %v2716
      %v2718 = vmul.f32 %v2606, 1.442695
      %v2719 = vpow.pop %v2718
      %v2720 = vmul.f32 %v2607, 1.442695
      %v2721 = vpow.pop %v2720
      %v2722 = vmul.f32 %v2608, 1.442695
      %v2723 = vpow.pop %v2722
      %v2724 = vmul.f32 %v2609, 1.442695
      %v2725 = vpow.pop %v2724
      %v2726 = vmul.f32 %v2610, 1.442695
      %v2727 = vpow.pop %v2726
      %v2728 = vmul.f32 %v2611, 1.442695
      %v2729 = vpow.pop %v2728
      %v2730 = vmul.f32 %v2612, 1.442695
      %v2731 = vpow.pop %v2730
      %v2732 = vmul.f32 %v2613, 1.442695
      %v2733 = vpow.pop %v2732
      %v2734 = vmul.f32 %v2614, 1.442695
      %v2735 = vpow.pop %v2734
      %v2736 = vmul.f32 %v2615, 1.442695
      %v2737 = vpow.pop %v2736
      %v2738 = vmul.f32 %v2616, 1.442695
      %v2739 = vpow.pop %v2738
      %v2740 = vmul.f32 %v2617, 1.442695
      %v2741 = vpow.pop %v2740
      %v2742 = vmul.f32 %v2618, 1.442695
      %v2743 = vpow.pop %v2742
      %v2744 = vmul.f32 %v2619, 1.442695
      %v2745 = vpow.pop %v2744
      %v2746 = vmul.f32 %v2620, 1.442695
      %v2747 = vpow.pop %v2746
      %v2748 = vmul.f32 %v2621, 1.442695
      %v2749 = vpow.pop %v2748
      %v2750 = vadd.f32 %v2623, %v2625
      %2751 = vadd.xlane.f32.xlu0 %v2750
      %v2752 = vpop.xlane.xlu0 %2751
      %v2753 = vadd.f32 %v2627, %v2629
      %2754 = vadd.xlane.f32.xlu0 %v2753
      %v2755 = vpop.xlane.xlu0 %2754
      %v2756 = vadd.f32 %v2631, %v2633
      %2757 = vadd.xlane.f32.xlu0 %v2756
      %v2758 = vpop.xlane.xlu0 %2757
      %v2759 = vadd.f32 %v2635, %v2637
      %2760 = vadd.xlane.f32.xlu0 %v2759
      %v2761 = vpop.xlane.xlu0 %2760
      %v2762 = vadd.f32 %v2639, %v2641
      %2763 = vadd.xlane.f32.xlu0 %v2762
      %v2764 = vpop.xlane.xlu0 %2763
      %v2765 = vadd.f32 %v2643, %v2645
      %2766 = vadd.xlane.f32.xlu0 %v2765
      %v2767 = vpop.xlane.xlu0 %2766
      %v2768 = vadd.f32 %v2647, %v2649
      %2769 = vadd.xlane.f32.xlu0 %v2768
      %v2770 = vpop.xlane.xlu0 %2769
      %v2771 = vadd.f32 %v2651, %v2653
      %2772 = vadd.xlane.f32.xlu0 %v2771
      %v2773 = vpop.xlane.xlu0 %2772
      %v2774 = vadd.f32 %v2655, %v2657
      %2775 = vadd.xlane.f32.xlu0 %v2774
      %v2776 = vpop.xlane.xlu0 %2775
      %v2777 = vadd.f32 %v2659, %v2661
      %2778 = vadd.xlane.f32.xlu0 %v2777
      %v2779 = vpop.xlane.xlu0 %2778
      %v2780 = vadd.f32 %v2663, %v2665
      %2781 = vadd.xlane.f32.xlu0 %v2780
      %v2782 = vpop.xlane.xlu0 %2781
      %v2783 = vadd.f32 %v2667, %v2669
      %2784 = vadd.xlane.f32.xlu0 %v2783
      %v2785 = vpop.xlane.xlu0 %2784
      %v2786 = vadd.f32 %v2671, %v2673
      %2787 = vadd.xlane.f32.xlu0 %v2786
      %v2788 = vpop.xlane.xlu0 %2787
      %v2789 = vadd.f32 %v2675, %v2677
      %2790 = vadd.xlane.f32.xlu0 %v2789
      %v2791 = vpop.xlane.xlu0 %2790
      %v2792 = vadd.f32 %v2679, %v2681
      %2793 = vadd.xlane.f32.xlu0 %v2792
      %v2794 = vpop.xlane.xlu0 %2793
      %v2795 = vadd.f32 %v2683, %v2685
      %2796 = vadd.xlane.f32.xlu0 %v2795
      %v2797 = vpop.xlane.xlu0 %2796
      %v2798 = vadd.f32 %v2687, %v2689
      %2799 = vadd.xlane.f32.xlu0 %v2798
      %v2800 = vpop.xlane.xlu0 %2799
      %v2801 = vadd.f32 %v2691, %v2693
      %2802 = vadd.xlane.f32.xlu0 %v2801
      %v2803 = vpop.xlane.xlu0 %2802
      %v2804 = vadd.f32 %v2695, %v2697
      %2805 = vadd.xlane.f32.xlu0 %v2804
      %v2806 = vpop.xlane.xlu0 %2805
      %v2807 = vadd.f32 %v2699, %v2701
      %2808 = vadd.xlane.f32.xlu0 %v2807
      %v2809 = vpop.xlane.xlu0 %2808
      %v2810 = vadd.f32 %v2703, %v2705
      %2811 = vadd.xlane.f32.xlu0 %v2810
      %v2812 = vpop.xlane.xlu0 %2811
      %v2813 = vadd.f32 %v2707, %v2709
      %2814 = vadd.xlane.f32.xlu0 %v2813
      %v2815 = vpop.xlane.xlu0 %2814
      %v2816 = vadd.f32 %v2711, %v2713
      %2817 = vadd.xlane.f32.xlu0 %v2816
      %v2818 = vpop.xlane.xlu0 %2817
      %v2819 = vadd.f32 %v2715, %v2717
      %2820 = vadd.xlane.f32.xlu0 %v2819
      %v2821 = vpop.xlane.xlu0 %2820
      %v2822 = vadd.f32 %v2719, %v2721
      %2823 = vadd.xlane.f32.xlu0 %v2822
      %v2824 = vpop.xlane.xlu0 %2823
      %v2825 = vadd.f32 %v2723, %v2725
      %2826 = vadd.xlane.f32.xlu0 %v2825
      %v2827 = vpop.xlane.xlu0 %2826
      %v2828 = vadd.f32 %v2727, %v2729
      %2829 = vadd.xlane.f32.xlu0 %v2828
      %v2830 = vpop.xlane.xlu0 %2829
      %v2831 = vadd.f32 %v2731, %v2733
      %2832 = vadd.xlane.f32.xlu0 %v2831
      %v2833 = vpop.xlane.xlu0 %2832
      %v2834 = vadd.f32 %v2735, %v2737
      %2835 = vadd.xlane.f32.xlu0 %v2834
      %v2836 = vpop.xlane.xlu0 %2835
      %v2837 = vadd.f32 %v2739, %v2741
      %2838 = vadd.xlane.f32.xlu0 %v2837
      %v2839 = vpop.xlane.xlu0 %2838
      %v2840 = vadd.f32 %v2743, %v2745
      %2841 = vadd.xlane.f32.xlu0 %v2840
      %v2842 = vpop.xlane.xlu0 %2841
      %v2843 = vadd.f32 %v2747, %v2749
      %2844 = vadd.xlane.f32.xlu0 %v2843
      %v2845 = vpop.xlane.xlu0 %2844
      %v2846 = vrcp.pop %v2752
      %v2847 = vrcp.pop %v2755
      %v2848 = vrcp.pop %v2758
      %v2849 = vrcp.pop %v2761
      %v2850 = vrcp.pop %v2764
      %v2851 = vrcp.pop %v2767
      %v2852 = vrcp.pop %v2770
      %v2853 = vrcp.pop %v2773
      %v2854 = vrcp.pop %v2776
      %v2855 = vrcp.pop %v2779
      %v2856 = vrcp.pop %v2782
      %v2857 = vrcp.pop %v2785
      %v2858 = vrcp.pop %v2788
      %v2859 = vrcp.pop %v2791
      %v2860 = vrcp.pop %v2794
      %v2861 = vrcp.pop %v2797
      %v2862 = vrcp.pop %v2800
      %v2863 = vrcp.pop %v2803
      %v2864 = vrcp.pop %v2806
      %v2865 = vrcp.pop %v2809
      %v2866 = vrcp.pop %v2812
      %v2867 = vrcp.pop %v2815
      %v2868 = vrcp.pop %v2818
      %v2869 = vrcp.pop %v2821
      %v2870 = vrcp.pop %v2824
      %v2871 = vrcp.pop %v2827
      %v2872 = vrcp.pop %v2830
      %v2873 = vrcp.pop %v2833
      %v2874 = vrcp.pop %v2836
      %v2875 = vrcp.pop %v2839
      %v2876 = vrcp.pop %v2842
      %v2877 = vrcp.pop %v2845
      %v2878 = vmul.f32 %v2752, %v2846
      %v2879 = vmul.f32 %v2755, %v2847
      %v2880 = vmul.f32 %v2758, %v2848
      %v2881 = vmul.f32 %v2761, %v2849
      %v2882 = vmul.f32 %v2764, %v2850
      %v2883 = vmul.f32 %v2767, %v2851
      %v2884 = vmul.f32 %v2770, %v2852
      %v2885 = vmul.f32 %v2773, %v2853
      %v2886 = vmul.f32 %v2776, %v2854
      %v2887 = vmul.f32 %v2779, %v2855
      %v2888 = vmul.f32 %v2782, %v2856
      %v2889 = vmul.f32 %v2785, %v2857
      %v2890 = vmul.f32 %v2788, %v2858
      %v2891 = vmul.f32 %v2791, %v2859
      %v2892 = vmul.f32 %v2794, %v2860
      %v2893 = vmul.f32 %v2797, %v2861
      %v2894 = vmul.f32 %v2800, %v2862
      %v2895 = vmul.f32 %v2803, %v2863
      %v2896 = vmul.f32 %v2806, %v2864
      %v2897 = vmul.f32 %v2809, %v2865
      %v2898 = vmul.f32 %v2812, %v2866
      %v2899 = vmul.f32 %v2815, %v2867
      %v2900 = vmul.f32 %v2818, %v2868
      %v2901 = vmul.f32 %v2821, %v2869
      %v2902 = vmul.f32 %v2824, %v2870
      %v2903 = vmul.f32 %v2827, %v2871
      %v2904 = vmul.f32 %v2830, %v2872
      %v2905 = vmul.f32 %v2833, %v2873
      %v2906 = vmul.f32 %v2836, %v2874
      %v2907 = vmul.f32 %v2839, %v2875
      %v2908 = vmul.f32 %v2842, %v2876
      %v2909 = vmul.f32 %v2845, %v2877
      %v2910 = vsub.f32 2.0, %v2878
      %v2911 = vsub.f32 2.0, %v2879
      %v2912 = vsub.f32 2.0, %v2880
      %v2913 = vsub.f32 2.0, %v2881
      %v2914 = vsub.f32 2.0, %v2882
      %v2915 = vsub.f32 2.0, %v2883
      %v2916 = vsub.f32 2.0, %v2884
      %v2917 = vsub.f32 2.0, %v2885
      %v2918 = vsub.f32 2.0, %v2886
      %v2919 = vsub.f32 2.0, %v2887
      %v2920 = vsub.f32 2.0, %v2888
      %v2921 = vsub.f32 2.0, %v2889
      %v2922 = vsub.f32 2.0, %v2890
      %v2923 = vsub.f32 2.0, %v2891
      %v2924 = vsub.f32 2.0, %v2892
      %v2925 = vsub.f32 2.0, %v2893
      %v2926 = vsub.f32 2.0, %v2894
      %v2927 = vsub.f32 2.0, %v2895
      %v2928 = vsub.f32 2.0, %v2896
      %v2929 = vsub.f32 2.0, %v2897
      %v2930 = vsub.f32 2.0, %v2898
      %v2931 = vsub.f32 2.0, %v2899
      %v2932 = vsub.f32 2.0, %v2900
      %v2933 = vsub.f32 2.0, %v2901
      %v2934 = vsub.f32 2.0, %v2902
      %v2935 = vsub.f32 2.0, %v2903
      %v2936 = vsub.f32 2.0, %v2904
      %v2937 = vsub.f32 2.0, %v2905
      %v2938 = vsub.f32 2.0, %v2906
      %v2939 = vsub.f32 2.0, %v2907
      %v2940 = vsub.f32 2.0, %v2908
      %v2941 = vsub.f32 2.0, %v2909
      %v2942 = vmul.f32 %v2846, %v2910
      %v2943 = vmul.f32 %v2847, %v2911
      %v2944 = vmul.f32 %v2848, %v2912
      %v2945 = vmul.f32 %v2849, %v2913
      %v2946 = vmul.f32 %v2850, %v2914
      %v2947 = vmul.f32 %v2851, %v2915
      %v2948 = vmul.f32 %v2852, %v2916
      %v2949 = vmul.f32 %v2853, %v2917
      %v2950 = vmul.f32 %v2854, %v2918
      %v2951 = vmul.f32 %v2855, %v2919
      %v2952 = vmul.f32 %v2856, %v2920
      %v2953 = vmul.f32 %v2857, %v2921
      %v2954 = vmul.f32 %v2858, %v2922
      %v2955 = vmul.f32 %v2859, %v2923
      %v2956 = vmul.f32 %v2860, %v2924
      %v2957 = vmul.f32 %v2861, %v2925
      %v2958 = vmul.f32 %v2862, %v2926
      %v2959 = vmul.f32 %v2863, %v2927
      %v2960 = vmul.f32 %v2864, %v2928
      %v2961 = vmul.f32 %v2865, %v2929
      %v2962 = vmul.f32 %v2866, %v2930
      %v2963 = vmul.f32 %v2867, %v2931
      %v2964 = vmul.f32 %v2868, %v2932
      %v2965 = vmul.f32 %v2869, %v2933
      %v2966 = vmul.f32 %v2870, %v2934
      %v2967 = vmul.f32 %v2871, %v2935
      %v2968 = vmul.f32 %v2872, %v2936
      %v2969 = vmul.f32 %v2873, %v2937
      %v2970 = vmul.f32 %v2874, %v2938
      %v2971 = vmul.f32 %v2875, %v2939
      %v2972 = vmul.f32 %v2876, %v2940
      %v2973 = vmul.f32 %v2877, %v2941
      %v2976 = vrot.slane %v238, 2
      %v2977 = vrot.slane %v261, 2
      %2980 = vmatpush.xpose.msra.mxu0 0.0
      %2981 = vmatpush.xpose.msra.mxu0 0.0
      %2982 = vmatpush.xpose.msra.mxu0 0.0
      %2983 = vmatpush.xpose.msra.mxu0 0.0
      %2984 = vmatpush.xpose.msra.mxu0 0.0
      %2985 = vmatpush.xpose.msra.mxu0 0.0
      %2986 = vmatpush.xpose.msra.mxu0 0.0
      %2987 = vmatpush.xpose.msra.mxu0 0.0
      %2988 = vmatpush.xpose.msra.mxu0 0.0
      %2989 = vmatpush.xpose.msra.mxu0 0.0
      %2990 = vmatpush.xpose.msra.mxu0 0.0
      %2991 = vmatpush.xpose.msra.mxu0 0.0
      %2992 = vmatpush.xpose.msra.mxu0 0.0
      %2993 = vmatpush.xpose.msra.mxu0 0.0
      %2994 = vmatpush.xpose.msra.mxu0 0.0
      %2995 = vmatpush.xpose.msra.mxu0 %v2976
      %2996 = vmatmul.f32.gmra.mxu0 %v2623
      %v2997 = vpop.f32.mrf.mxu0
      %v2998 = vadd.f32 0.0, %v2997
      %2999 = vmatmul.f32.gmra.mxu0 %v2627
      %v3000 = vpop.f32.mrf.mxu0
      %v3001 = vadd.f32 0.0, %v3000
      %3002 = vmatmul.f32.gmra.mxu0 %v2631
      %v3003 = vpop.f32.mrf.mxu0
      %v3004 = vadd.f32 0.0, %v3003
      %3005 = vmatmul.f32.gmra.mxu0 %v2635
      %v3006 = vpop.f32.mrf.mxu0
      %v3007 = vadd.f32 0.0, %v3006
      %3008 = vmatmul.f32.gmra.mxu0 %v2639
      %v3009 = vpop.f32.mrf.mxu0
      %v3010 = vadd.f32 0.0, %v3009
      %3011 = vmatmul.f32.gmra.mxu0 %v2643
      %v3012 = vpop.f32.mrf.mxu0
      %v3013 = vadd.f32 0.0, %v3012
      %3014 = vmatmul.f32.gmra.mxu0 %v2647
      %v3015 = vpop.f32.mrf.mxu0
      %v3016 = vadd.f32 0.0, %v3015
      %3017 = vmatmul.f32.gmra.mxu0 %v2651
      %v3018 = vpop.f32.mrf.mxu0
      %v3019 = vadd.f32 0.0, %v3018
      %3020 = vmatmul.f32.gmra.mxu0 %v2655
      %v3021 = vpop.f32.mrf.mxu0
      %v3022 = vadd.f32 0.0, %v3021
      %3023 = vmatmul.f32.gmra.mxu0 %v2659
      %v3024 = vpop.f32.mrf.mxu0
      %v3025 = vadd.f32 0.0, %v3024
      %3026 = vmatmul.f32.gmra.mxu0 %v2663
      %v3027 = vpop.f32.mrf.mxu0
      %v3028 = vadd.f32 0.0, %v3027
      %3029 = vmatmul.f32.gmra.mxu0 %v2667
      %v3030 = vpop.f32.mrf.mxu0
      %v3031 = vadd.f32 0.0, %v3030
      %3032 = vmatmul.f32.gmra.mxu0 %v2671
      %v3033 = vpop.f32.mrf.mxu0
      %v3034 = vadd.f32 0.0, %v3033
      %3035 = vmatmul.f32.gmra.mxu0 %v2675
      %v3036 = vpop.f32.mrf.mxu0
      %v3037 = vadd.f32 0.0, %v3036
      %3038 = vmatmul.f32.gmra.mxu0 %v2679
      %v3039 = vpop.f32.mrf.mxu0
      %v3040 = vadd.f32 0.0, %v3039
      %3041 = vmatmul.f32.gmra.mxu0 %v2683
      %v3042 = vpop.f32.mrf.mxu0
      %v3043 = vadd.f32 0.0, %v3042
      %3044 = vmatmul.f32.gmra.mxu0 %v2687
      %v3045 = vpop.f32.mrf.mxu0
      %v3046 = vadd.f32 0.0, %v3045
      %3047 = vmatmul.f32.gmra.mxu0 %v2691
      %v3048 = vpop.f32.mrf.mxu0
      %v3049 = vadd.f32 0.0, %v3048
      %3050 = vmatmul.f32.gmra.mxu0 %v2695
      %v3051 = vpop.f32.mrf.mxu0
      %v3052 = vadd.f32 0.0, %v3051
      %3053 = vmatmul.f32.gmra.mxu0 %v2699
      %v3054 = vpop.f32.mrf.mxu0
      %v3055 = vadd.f32 0.0, %v3054
      %3056 = vmatmul.f32.gmra.mxu0 %v2703
      %v3057 = vpop.f32.mrf.mxu0
      %v3058 = vadd.f32 0.0, %v3057
      %3059 = vmatmul.f32.gmra.mxu0 %v2707
      %v3060 = vpop.f32.mrf.mxu0
      %v3061 = vadd.f32 0.0, %v3060
      %3062 = vmatmul.f32.gmra.mxu0 %v2711
      %v3063 = vpop.f32.mrf.mxu0
      %v3064 = vadd.f32 0.0, %v3063
      %3065 = vmatmul.f32.gmra.mxu0 %v2715
      %v3066 = vpop.f32.mrf.mxu0
      %v3067 = vadd.f32 0.0, %v3066
      %3068 = vmatmul.f32.gmra.mxu0 %v2719
      %v3069 = vpop.f32.mrf.mxu0
      %v3070 = vadd.f32 0.0, %v3069
      %3071 = vmatmul.f32.gmra.mxu0 %v2723
      %v3072 = vpop.f32.mrf.mxu0
      %v3073 = vadd.f32 0.0, %v3072
      %3074 = vmatmul.f32.gmra.mxu0 %v2727
      %v3075 = vpop.f32.mrf.mxu0
      %v3076 = vadd.f32 0.0, %v3075
      %3077 = vmatmul.f32.gmra.mxu0 %v2731
      %v3078 = vpop.f32.mrf.mxu0
      %v3079 = vadd.f32 0.0, %v3078
      %3080 = vmatmul.f32.gmra.mxu0 %v2735
      %v3081 = vpop.f32.mrf.mxu0
      %v3082 = vadd.f32 0.0, %v3081
      %3083 = vmatmul.f32.gmra.mxu0 %v2739
      %v3084 = vpop.f32.mrf.mxu0
      %v3085 = vadd.f32 0.0, %v3084
      %3086 = vmatmul.f32.gmra.mxu0 %v2743
      %v3087 = vpop.f32.mrf.mxu0
      %v3088 = vadd.f32 0.0, %v3087
      %3089 = vmatmul.f32.gmra.mxu0 %v2747
      %v3090 = vpop.f32.mrf.mxu0
      %v3091 = vadd.f32 0.0, %v3090
      %3092 = vdwg.mxu0
      %3093 = vmatpush.xpose.msra.mxu0 0.0
      %3094 = vmatpush.xpose.msra.mxu0 0.0
      %3095 = vmatpush.xpose.msra.mxu0 0.0
      %3096 = vmatpush.xpose.msra.mxu0 0.0
      %3097 = vmatpush.xpose.msra.mxu0 0.0
      %3098 = vmatpush.xpose.msra.mxu0 0.0
      %3099 = vmatpush.xpose.msra.mxu0 0.0
      %3100 = vmatpush.xpose.msra.mxu0 0.0
      %3101 = vmatpush.xpose.msra.mxu0 0.0
      %3102 = vmatpush.xpose.msra.mxu0 0.0
      %3103 = vmatpush.xpose.msra.mxu0 0.0
      %3104 = vmatpush.xpose.msra.mxu0 0.0
      %3105 = vmatpush.xpose.msra.mxu0 0.0
      %3106 = vmatpush.xpose.msra.mxu0 0.0
      %3107 = vmatpush.xpose.msra.mxu0 0.0
      %3108 = vmatpush.xpose.msra.mxu0 %v2977
      %3109 = vmatmul.f32.gmra.mxu0 %v2625
      %v3110 = vpop.f32.mrf.mxu0
      %v3111 = vadd.f32 %v2998, %v3110
      %3112 = vmatmul.f32.gmra.mxu0 %v2629
      %v3113 = vpop.f32.mrf.mxu0
      %v3114 = vadd.f32 %v3001, %v3113
      %3115 = vmatmul.f32.gmra.mxu0 %v2633
      %v3116 = vpop.f32.mrf.mxu0
      %v3117 = vadd.f32 %v3004, %v3116
      %3118 = vmatmul.f32.gmra.mxu0 %v2637
      %v3119 = vpop.f32.mrf.mxu0
      %v3120 = vadd.f32 %v3007, %v3119
      %3121 = vmatmul.f32.gmra.mxu0 %v2641
      %v3122 = vpop.f32.mrf.mxu0
      %v3123 = vadd.f32 %v3010, %v3122
      %3124 = vmatmul.f32.gmra.mxu0 %v2645
      %v3125 = vpop.f32.mrf.mxu0
      %v3126 = vadd.f32 %v3013, %v3125
      %3127 = vmatmul.f32.gmra.mxu0 %v2649
      %v3128 = vpop.f32.mrf.mxu0
      %v3129 = vadd.f32 %v3016, %v3128
      %3130 = vmatmul.f32.gmra.mxu0 %v2653
      %v3131 = vpop.f32.mrf.mxu0
      %v3132 = vadd.f32 %v3019, %v3131
      %3133 = vmatmul.f32.gmra.mxu0 %v2657
      %v3134 = vpop.f32.mrf.mxu0
      %v3135 = vadd.f32 %v3022, %v3134
      %3136 = vmatmul.f32.gmra.mxu0 %v2661
      %v3137 = vpop.f32.mrf.mxu0
      %v3138 = vadd.f32 %v3025, %v3137
      %3139 = vmatmul.f32.gmra.mxu0 %v2665
      %v3140 = vpop.f32.mrf.mxu0
      %v3141 = vadd.f32 %v3028, %v3140
      %3142 = vmatmul.f32.gmra.mxu0 %v2669
      %v3143 = vpop.f32.mrf.mxu0
      %v3144 = vadd.f32 %v3031, %v3143
      %3145 = vmatmul.f32.gmra.mxu0 %v2673
      %v3146 = vpop.f32.mrf.mxu0
      %v3147 = vadd.f32 %v3034, %v3146
      %3148 = vmatmul.f32.gmra.mxu0 %v2677
      %v3149 = vpop.f32.mrf.mxu0
      %v3150 = vadd.f32 %v3037, %v3149
      %3151 = vmatmul.f32.gmra.mxu0 %v2681
      %v3152 = vpop.f32.mrf.mxu0
      %v3153 = vadd.f32 %v3040, %v3152
      %3154 = vmatmul.f32.gmra.mxu0 %v2685
      %v3155 = vpop.f32.mrf.mxu0
      %v3156 = vadd.f32 %v3043, %v3155
      %3157 = vmatmul.f32.gmra.mxu0 %v2689
      %v3158 = vpop.f32.mrf.mxu0
      %v3159 = vadd.f32 %v3046, %v3158
      %3160 = vmatmul.f32.gmra.mxu0 %v2693
      %v3161 = vpop.f32.mrf.mxu0
      %v3162 = vadd.f32 %v3049, %v3161
      %3163 = vmatmul.f32.gmra.mxu0 %v2697
      %v3164 = vpop.f32.mrf.mxu0
      %v3165 = vadd.f32 %v3052, %v3164
      %3166 = vmatmul.f32.gmra.mxu0 %v2701
      %v3167 = vpop.f32.mrf.mxu0
      %v3168 = vadd.f32 %v3055, %v3167
      %3169 = vmatmul.f32.gmra.mxu0 %v2705
      %v3170 = vpop.f32.mrf.mxu0
      %v3171 = vadd.f32 %v3058, %v3170
      %3172 = vmatmul.f32.gmra.mxu0 %v2709
      %v3173 = vpop.f32.mrf.mxu0
      %v3174 = vadd.f32 %v3061, %v3173
      %3175 = vmatmul.f32.gmra.mxu0 %v2713
      %v3176 = vpop.f32.mrf.mxu0
      %v3177 = vadd.f32 %v3064, %v3176
      %3178 = vmatmul.f32.gmra.mxu0 %v2717
      %v3179 = vpop.f32.mrf.mxu0
      %v3180 = vadd.f32 %v3067, %v3179
      %3181 = vmatmul.f32.gmra.mxu0 %v2721
      %v3182 = vpop.f32.mrf.mxu0
      %v3183 = vadd.f32 %v3070, %v3182
      %3184 = vmatmul.f32.gmra.mxu0 %v2725
      %v3185 = vpop.f32.mrf.mxu0
      %v3186 = vadd.f32 %v3073, %v3185
      %3187 = vmatmul.f32.gmra.mxu0 %v2729
      %v3188 = vpop.f32.mrf.mxu0
      %v3189 = vadd.f32 %v3076, %v3188
      %3190 = vmatmul.f32.gmra.mxu0 %v2733
      %v3191 = vpop.f32.mrf.mxu0
      %v3192 = vadd.f32 %v3079, %v3191
      %3193 = vmatmul.f32.gmra.mxu0 %v2737
      %v3194 = vpop.f32.mrf.mxu0
      %v3195 = vadd.f32 %v3082, %v3194
      %3196 = vmatmul.f32.gmra.mxu0 %v2741
      %v3197 = vpop.f32.mrf.mxu0
      %v3198 = vadd.f32 %v3085, %v3197
      %3199 = vmatmul.f32.gmra.mxu0 %v2745
      %v3200 = vpop.f32.mrf.mxu0
      %v3201 = vadd.f32 %v3088, %v3200
      %3202 = vmatmul.f32.gmra.mxu0 %v2749
      %v3203 = vpop.f32.mrf.mxu0
      %v3204 = vadd.f32 %v3091, %v3203
      %3205 = vdwg.mxu0
      %v3206 = vmul.f32 %v3111, %v2942
      %v3207 = vmul.f32 %v3114, %v2943
      %v3208 = vmul.f32 %v3117, %v2944
      %v3209 = vmul.f32 %v3120, %v2945
      %v3210 = vmul.f32 %v3123, %v2946
      %v3211 = vmul.f32 %v3126, %v2947
      %v3212 = vmul.f32 %v3129, %v2948
      %v3213 = vmul.f32 %v3132, %v2949
      %v3214 = vmul.f32 %v3135, %v2950
      %v3215 = vmul.f32 %v3138, %v2951
      %v3216 = vmul.f32 %v3141, %v2952
      %v3217 = vmul.f32 %v3144, %v2953
      %v3218 = vmul.f32 %v3147, %v2954
      %v3219 = vmul.f32 %v3150, %v2955
      %v3220 = vmul.f32 %v3153, %v2956
      %v3221 = vmul.f32 %v3156, %v2957
      %v3222 = vmul.f32 %v3159, %v2958
      %v3223 = vmul.f32 %v3162, %v2959
      %v3224 = vmul.f32 %v3165, %v2960
      %v3225 = vmul.f32 %v3168, %v2961
      %v3226 = vmul.f32 %v3171, %v2962
      %v3227 = vmul.f32 %v3174, %v2963
      %v3228 = vmul.f32 %v3177, %v2964
      %v3229 = vmul.f32 %v3180, %v2965
      %v3230 = vmul.f32 %v3183, %v2966
      %v3231 = vmul.f32 %v3186, %v2967
      %v3232 = vmul.f32 %v3189, %v2968
      %v3233 = vmul.f32 %v3192, %v2969
      %v3234 = vmul.f32 %v3195, %v2970
      %v3235 = vmul.f32 %v3198, %v2971
      %v3236 = vmul.f32 %v3201, %v2972
      %v3237 = vmul.f32 %v3204, %v2973
      %s3238 = scalar_lea.vmem %s2, 2
      %v3239 = vld [vmem:[%s3238] sm:$0x3]
      %v3241 = vsel %vm839, %v3206, 0
      %v3244 = vsel %vm839, %v3207, 0
      %v3247 = vsel %vm839, %v3208, 0
      %v3250 = vsel %vm839, %v3209, 0
      %v3253 = vsel %vm839, %v3210, 0
      %v3256 = vsel %vm839, %v3211, 0
      %v3259 = vsel %vm839, %v3212, 0
      %v3262 = vsel %vm839, %v3213, 0
      %v3265 = vsel %vm839, %v3214, 0
      %v3268 = vsel %vm839, %v3215, 0
      %v3271 = vsel %vm839, %v3216, 0
      %v3274 = vsel %vm839, %v3217, 0
      %v3277 = vsel %vm839, %v3218, 0
      %v3280 = vsel %vm839, %v3219, 0
      %v3283 = vsel %vm839, %v3220, 0
      %v3286 = vsel %vm839, %v3221, 0
      %v3289 = vsel %vm839, %v3222, 0
      %v3292 = vsel %vm839, %v3223, 0
      %v3295 = vsel %vm839, %v3224, 0
      %v3298 = vsel %vm839, %v3225, 0
      %v3301 = vsel %vm839, %v3226, 0
      %v3304 = vsel %vm839, %v3227, 0
      %v3307 = vsel %vm839, %v3228, 0
      %v3310 = vsel %vm839, %v3229, 0
      %v3313 = vsel %vm839, %v3230, 0
      %v3316 = vsel %vm839, %v3231, 0
      %v3319 = vsel %vm839, %v3232, 0
      %v3322 = vsel %vm839, %v3233, 0
      %v3325 = vsel %vm839, %v3234, 0
      %v3328 = vsel %vm839, %v3235, 0
      %v3331 = vsel %vm839, %v3236, 0
      %v3334 = vsel %vm839, %v3237, 0
      %v3337 = vsel %vm936, %v3239, 0
      %3339 = vmatpush.msra.mxu0 0.0
      %3340 = vmatpush.msra.mxu0 0.0
      %3341 = vmatpush.msra.mxu0 0.0
      %3342 = vmatpush.msra.mxu0 0.0
      %3343 = vmatpush.msra.mxu0 0.0
      %3344 = vmatpush.msra.mxu0 0.0
      %3345 = vmatpush.msra.mxu0 0.0
      %3346 = vmatpush.msra.mxu0 0.0
      %3347 = vmatpush.msra.mxu0 0.0
      %3348 = vmatpush.msra.mxu0 0.0
      %3349 = vmatpush.msra.mxu0 0.0
      %3350 = vmatpush.msra.mxu0 0.0
      %3351 = vmatpush.msra.mxu0 0.0
      %3352 = vmatpush.msra.mxu0 0.0
      %3353 = vmatpush.msra.mxu0 0.0
      %3354 = vmatpush.msra.mxu0 %v3337
      %3355 = vmatmul.f32.gmra.mxu0 %v3241
      %v3356 = vpop.f32.mrf.mxu0
      %v3357 = vadd.f32 0.0, %v3356
      %3358 = vmatmul.f32.gmra.mxu0 %v3244
      %v3359 = vpop.f32.mrf.mxu0
      %v3360 = vadd.f32 0.0, %v3359
      %3361 = vmatmul.f32.gmra.mxu0 %v3247
      %v3362 = vpop.f32.mrf.mxu0
      %v3363 = vadd.f32 0.0, %v3362
      %3364 = vmatmul.f32.gmra.mxu0 %v3250
      %v3365 = vpop.f32.mrf.mxu0
      %v3366 = vadd.f32 0.0, %v3365
      %3367 = vmatmul.f32.gmra.mxu0 %v3253
      %v3368 = vpop.f32.mrf.mxu0
      %v3369 = vadd.f32 0.0, %v3368
      %3370 = vmatmul.f32.gmra.mxu0 %v3256
      %v3371 = vpop.f32.mrf.mxu0
      %v3372 = vadd.f32 0.0, %v3371
      %3373 = vmatmul.f32.gmra.mxu0 %v3259
      %v3374 = vpop.f32.mrf.mxu0
      %v3375 = vadd.f32 0.0, %v3374
      %3376 = vmatmul.f32.gmra.mxu0 %v3262
      %v3377 = vpop.f32.mrf.mxu0
      %v3378 = vadd.f32 0.0, %v3377
      %3379 = vmatmul.f32.gmra.mxu0 %v3265
      %v3380 = vpop.f32.mrf.mxu0
      %v3381 = vadd.f32 0.0, %v3380
      %3382 = vmatmul.f32.gmra.mxu0 %v3268
      %v3383 = vpop.f32.mrf.mxu0
      %v3384 = vadd.f32 0.0, %v3383
      %3385 = vmatmul.f32.gmra.mxu0 %v3271
      %v3386 = vpop.f32.mrf.mxu0
      %v3387 = vadd.f32 0.0, %v3386
      %3388 = vmatmul.f32.gmra.mxu0 %v3274
      %v3389 = vpop.f32.mrf.mxu0
      %v3390 = vadd.f32 0.0, %v3389
      %3391 = vmatmul.f32.gmra.mxu0 %v3277
      %v3392 = vpop.f32.mrf.mxu0
      %v3393 = vadd.f32 0.0, %v3392
      %3394 = vmatmul.f32.gmra.mxu0 %v3280
      %v3395 = vpop.f32.mrf.mxu0
      %v3396 = vadd.f32 0.0, %v3395
      %3397 = vmatmul.f32.gmra.mxu0 %v3283
      %v3398 = vpop.f32.mrf.mxu0
      %v3399 = vadd.f32 0.0, %v3398
      %3400 = vmatmul.f32.gmra.mxu0 %v3286
      %v3401 = vpop.f32.mrf.mxu0
      %v3402 = vadd.f32 0.0, %v3401
      %3403 = vmatmul.f32.gmra.mxu0 %v3289
      %v3404 = vpop.f32.mrf.mxu0
      %v3405 = vadd.f32 0.0, %v3404
      %3406 = vmatmul.f32.gmra.mxu0 %v3292
      %v3407 = vpop.f32.mrf.mxu0
      %v3408 = vadd.f32 0.0, %v3407
      %3409 = vmatmul.f32.gmra.mxu0 %v3295
      %v3410 = vpop.f32.mrf.mxu0
      %v3411 = vadd.f32 0.0, %v3410
      %3412 = vmatmul.f32.gmra.mxu0 %v3298
      %v3413 = vpop.f32.mrf.mxu0
      %v3414 = vadd.f32 0.0, %v3413
      %3415 = vmatmul.f32.gmra.mxu0 %v3301
      %v3416 = vpop.f32.mrf.mxu0
      %v3417 = vadd.f32 0.0, %v3416
      %3418 = vmatmul.f32.gmra.mxu0 %v3304
      %v3419 = vpop.f32.mrf.mxu0
      %v3420 = vadd.f32 0.0, %v3419
      %3421 = vmatmul.f32.gmra.mxu0 %v3307
      %v3422 = vpop.f32.mrf.mxu0
      %v3423 = vadd.f32 0.0, %v3422
      %3424 = vmatmul.f32.gmra.mxu0 %v3310
      %v3425 = vpop.f32.mrf.mxu0
      %v3426 = vadd.f32 0.0, %v3425
      %3427 = vmatmul.f32.gmra.mxu0 %v3313
      %v3428 = vpop.f32.mrf.mxu0
      %v3429 = vadd.f32 0.0, %v3428
      %3430 = vmatmul.f32.gmra.mxu0 %v3316
      %v3431 = vpop.f32.mrf.mxu0
      %v3432 = vadd.f32 0.0, %v3431
      %3433 = vmatmul.f32.gmra.mxu0 %v3319
      %v3434 = vpop.f32.mrf.mxu0
      %v3435 = vadd.f32 0.0, %v3434
      %3436 = vmatmul.f32.gmra.mxu0 %v3322
      %v3437 = vpop.f32.mrf.mxu0
      %v3438 = vadd.f32 0.0, %v3437
      %3439 = vmatmul.f32.gmra.mxu0 %v3325
      %v3440 = vpop.f32.mrf.mxu0
      %v3441 = vadd.f32 0.0, %v3440
      %3442 = vmatmul.f32.gmra.mxu0 %v3328
      %v3443 = vpop.f32.mrf.mxu0
      %v3444 = vadd.f32 0.0, %v3443
      %3445 = vmatmul.f32.gmra.mxu0 %v3331
      %v3446 = vpop.f32.mrf.mxu0
      %v3447 = vadd.f32 0.0, %v3446
      %3448 = vmatmul.f32.gmra.mxu0 %v3334
      %v3449 = vpop.f32.mrf.mxu0
      %v3450 = vadd.f32 0.0, %v3449
      %3451 = vdwg.mxu0
      %v3453 = vsel %vm839, %v1969, 0
      %v3456 = vsel %vm839, %v1970, 0
      %v3459 = vsel %vm839, %v1971, 0
      %v3462 = vsel %vm839, %v1972, 0
      %v3465 = vsel %vm839, %v1973, 0
      %v3468 = vsel %vm839, %v1974, 0
      %v3471 = vsel %vm839, %v1975, 0
      %v3474 = vsel %vm839, %v1976, 0
      %v3477 = vsel %vm839, %v1977, 0
      %v3480 = vsel %vm839, %v1978, 0
      %v3483 = vsel %vm839, %v1979, 0
      %v3486 = vsel %vm839, %v1980, 0
      %v3489 = vsel %vm839, %v1981, 0
      %v3492 = vsel %vm839, %v1982, 0
      %v3495 = vsel %vm839, %v1983, 0
      %v3498 = vsel %vm839, %v1984, 0
      %v3501 = vsel %vm839, %v1985, 0
      %v3504 = vsel %vm839, %v1986, 0
      %v3507 = vsel %vm839, %v1987, 0
      %v3510 = vsel %vm839, %v1988, 0
      %v3513 = vsel %vm839, %v1989, 0
      %v3516 = vsel %vm839, %v1990, 0
      %v3519 = vsel %vm839, %v1991, 0
      %v3522 = vsel %vm839, %v1992, 0
      %v3525 = vsel %vm839, %v1993, 0
      %v3528 = vsel %vm839, %v1994, 0
      %v3531 = vsel %vm839, %v1995, 0
      %v3534 = vsel %vm839, %v1996, 0
      %v3537 = vsel %vm839, %v1997, 0
      %v3540 = vsel %vm839, %v1998, 0
      %v3543 = vsel %vm839, %v1999, 0
      %v3546 = vsel %vm839, %v2000, 0
      %v3549 = vsel %vm936, %v2001, 0
      %3551 = vmatpush.msra.mxu0 0.0
      %3552 = vmatpush.msra.mxu0 0.0
      %3553 = vmatpush.msra.mxu0 0.0
      %3554 = vmatpush.msra.mxu0 0.0
      %3555 = vmatpush.msra.mxu0 0.0
      %3556 = vmatpush.msra.mxu0 0.0
      %3557 = vmatpush.msra.mxu0 0.0
      %3558 = vmatpush.msra.mxu0 0.0
      %3559 = vmatpush.msra.mxu0 0.0
      %3560 = vmatpush.msra.mxu0 0.0
      %3561 = vmatpush.msra.mxu0 0.0
      %3562 = vmatpush.msra.mxu0 0.0
      %3563 = vmatpush.msra.mxu0 0.0
      %3564 = vmatpush.msra.mxu0 0.0
      %3565 = vmatpush.msra.mxu0 0.0
      %3566 = vmatpush.msra.mxu0 %v3549
      %3567 = vmatmul.f32.gmra.mxu0 %v3453
      %v3568 = vpop.f32.mrf.mxu0
      %v3569 = vadd.f32 %v3357, %v3568
      %3570 = vmatmul.f32.gmra.mxu0 %v3456
      %v3571 = vpop.f32.mrf.mxu0
      %v3572 = vadd.f32 %v3360, %v3571
      %3573 = vmatmul.f32.gmra.mxu0 %v3459
      %v3574 = vpop.f32.mrf.mxu0
      %v3575 = vadd.f32 %v3363, %v3574
      %3576 = vmatmul.f32.gmra.mxu0 %v3462
      %v3577 = vpop.f32.mrf.mxu0
      %v3578 = vadd.f32 %v3366, %v3577
      %3579 = vmatmul.f32.gmra.mxu0 %v3465
      %v3580 = vpop.f32.mrf.mxu0
      %v3581 = vadd.f32 %v3369, %v3580
      %3582 = vmatmul.f32.gmra.mxu0 %v3468
      %v3583 = vpop.f32.mrf.mxu0
      %v3584 = vadd.f32 %v3372, %v3583
      %3585 = vmatmul.f32.gmra.mxu0 %v3471
      %v3586 = vpop.f32.mrf.mxu0
      %v3587 = vadd.f32 %v3375, %v3586
      %3588 = vmatmul.f32.gmra.mxu0 %v3474
      %v3589 = vpop.f32.mrf.mxu0
      %v3590 = vadd.f32 %v3378, %v3589
      %3591 = vmatmul.f32.gmra.mxu0 %v3477
      %v3592 = vpop.f32.mrf.mxu0
      %v3593 = vadd.f32 %v3381, %v3592
      %3594 = vmatmul.f32.gmra.mxu0 %v3480
      %v3595 = vpop.f32.mrf.mxu0
      %v3596 = vadd.f32 %v3384, %v3595
      %3597 = vmatmul.f32.gmra.mxu0 %v3483
      %v3598 = vpop.f32.mrf.mxu0
      %v3599 = vadd.f32 %v3387, %v3598
      %3600 = vmatmul.f32.gmra.mxu0 %v3486
      %v3601 = vpop.f32.mrf.mxu0
      %v3602 = vadd.f32 %v3390, %v3601
      %3603 = vmatmul.f32.gmra.mxu0 %v3489
      %v3604 = vpop.f32.mrf.mxu0
      %v3605 = vadd.f32 %v3393, %v3604
      %3606 = vmatmul.f32.gmra.mxu0 %v3492
      %v3607 = vpop.f32.mrf.mxu0
      %v3608 = vadd.f32 %v3396, %v3607
      %3609 = vmatmul.f32.gmra.mxu0 %v3495
      %v3610 = vpop.f32.mrf.mxu0
      %v3611 = vadd.f32 %v3399, %v3610
      %3612 = vmatmul.f32.gmra.mxu0 %v3498
      %v3613 = vpop.f32.mrf.mxu0
      %v3614 = vadd.f32 %v3402, %v3613
      %3615 = vmatmul.f32.gmra.mxu0 %v3501
      %v3616 = vpop.f32.mrf.mxu0
      %v3617 = vadd.f32 %v3405, %v3616
      %3618 = vmatmul.f32.gmra.mxu0 %v3504
      %v3619 = vpop.f32.mrf.mxu0
      %v3620 = vadd.f32 %v3408, %v3619
      %3621 = vmatmul.f32.gmra.mxu0 %v3507
      %v3622 = vpop.f32.mrf.mxu0
      %v3623 = vadd.f32 %v3411, %v3622
      %3624 = vmatmul.f32.gmra.mxu0 %v3510
      %v3625 = vpop.f32.mrf.mxu0
      %v3626 = vadd.f32 %v3414, %v3625
      %3627 = vmatmul.f32.gmra.mxu0 %v3513
      %v3628 = vpop.f32.mrf.mxu0
      %v3629 = vadd.f32 %v3417, %v3628
      %3630 = vmatmul.f32.gmra.mxu0 %v3516
      %v3631 = vpop.f32.mrf.mxu0
      %v3632 = vadd.f32 %v3420, %v3631
      %3633 = vmatmul.f32.gmra.mxu0 %v3519
      %v3634 = vpop.f32.mrf.mxu0
      %v3635 = vadd.f32 %v3423, %v3634
      %3636 = vmatmul.f32.gmra.mxu0 %v3522
      %v3637 = vpop.f32.mrf.mxu0
      %v3638 = vadd.f32 %v3426, %v3637
      %3639 = vmatmul.f32.gmra.mxu0 %v3525
      %v3640 = vpop.f32.mrf.mxu0
      %v3641 = vadd.f32 %v3429, %v3640
      %3642 = vmatmul.f32.gmra.mxu0 %v3528
      %v3643 = vpop.f32.mrf.mxu0
      %v3644 = vadd.f32 %v3432, %v3643
      %3645 = vmatmul.f32.gmra.mxu0 %v3531
      %v3646 = vpop.f32.mrf.mxu0
      %v3647 = vadd.f32 %v3435, %v3646
      %3648 = vmatmul.f32.gmra.mxu0 %v3534
      %v3649 = vpop.f32.mrf.mxu0
      %v3650 = vadd.f32 %v3438, %v3649
      %3651 = vmatmul.f32.gmra.mxu0 %v3537
      %v3652 = vpop.f32.mrf.mxu0
      %v3653 = vadd.f32 %v3441, %v3652
      %3654 = vmatmul.f32.gmra.mxu0 %v3540
      %v3655 = vpop.f32.mrf.mxu0
      %v3656 = vadd.f32 %v3444, %v3655
      %3657 = vmatmul.f32.gmra.mxu0 %v3543
      %v3658 = vpop.f32.mrf.mxu0
      %v3659 = vadd.f32 %v3447, %v3658
      %3660 = vmatmul.f32.gmra.mxu0 %v3546
      %v3661 = vpop.f32.mrf.mxu0
      %v3662 = vadd.f32 %v3450, %v3661
      %3663 = vdwg.mxu0
      %3664 = vxpose.xlu0.b32.start [1/16] %v3569, 128
      %3665 = vxpose.xlu0.b32.cont [2/16] %v3572, 128
      %3666 = vxpose.xlu0.b32.cont [3/16] %v3575, 128
      %3667 = vxpose.xlu0.b32.cont [4/16] %v3578, 128
      %3668 = vxpose.xlu0.b32.cont [5/16] %v3581, 128
      %3669 = vxpose.xlu0.b32.cont [6/16] %v3584, 128
      %3670 = vxpose.xlu0.b32.cont [7/16] %v3587, 128
      %3671 = vxpose.xlu0.b32.cont [8/16] %v3590, 128
      %3672 = vxpose.xlu0.b32.cont [9/16] %v3593, 128
      %3673 = vxpose.xlu0.b32.cont [10/16] %v3596, 128
      %3674 = vxpose.xlu0.b32.cont [11/16] %v3599, 128
      %3675 = vxpose.xlu0.b32.cont [12/16] %v3602, 128
      %3676 = vxpose.xlu0.b32.cont [13/16] %v3605, 128
      %3677 = vxpose.xlu0.b32.cont [14/16] %v3608, 128
      %3678 = vxpose.xlu0.b32.cont [15/16] %v3611, 128
      %3679 = vxpose.xlu0.b32.end [16/16] %v3614, 128
      %v3680 = vpop.trf.xlu0
      %v3681 = vpop.trf.xlu0
      %v3682 = vpop.trf.xlu0
      %v3683 = vpop.trf.xlu0
      %v3684 = vpop.trf.xlu0
      %v3685 = vpop.trf.xlu0
      %v3686 = vpop.trf.xlu0
      %v3687 = vpop.trf.xlu0
      %v3688 = vpop.trf.xlu0
      %v3689 = vpop.trf.xlu0
      %v3690 = vpop.trf.xlu0
      %v3691 = vpop.trf.xlu0
      %v3692 = vpop.trf.xlu0
      %v3693 = vpop.trf.xlu0
      %v3694 = vpop.trf.xlu0
      %v3695 = vpop.trf.xlu0
      %3696 = vxpose.xlu0.b32.start [1/16] %v3617, 128
      %3697 = vxpose.xlu0.b32.cont [2/16] %v3620, 128
      %3698 = vxpose.xlu0.b32.cont [3/16] %v3623, 128
      %3699 = vxpose.xlu0.b32.cont [4/16] %v3626, 128
      %3700 = vxpose.xlu0.b32.cont [5/16] %v3629, 128
      %3701 = vxpose.xlu0.b32.cont [6/16] %v3632, 128
      %3702 = vxpose.xlu0.b32.cont [7/16] %v3635, 128
      %3703 = vxpose.xlu0.b32.cont [8/16] %v3638, 128
      %3704 = vxpose.xlu0.b32.cont [9/16] %v3641, 128
      %3705 = vxpose.xlu0.b32.cont [10/16] %v3644, 128
      %3706 = vxpose.xlu0.b32.cont [11/16] %v3647, 128
      %3707 = vxpose.xlu0.b32.cont [12/16] %v3650, 128
      %3708 = vxpose.xlu0.b32.cont [13/16] %v3653, 128
      %3709 = vxpose.xlu0.b32.cont [14/16] %v3656, 128
      %3710 = vxpose.xlu0.b32.cont [15/16] %v3659, 128
      %3711 = vxpose.xlu0.b32.end [16/16] %v3662, 128
      %v3712 = vpop.trf.xlu0
      %v3713 = vpop.trf.xlu0
      %v3714 = vpop.trf.xlu0
      %v3715 = vpop.trf.xlu0
      %v3716 = vpop.trf.xlu0
      %v3717 = vpop.trf.xlu0
      %v3718 = vpop.trf.xlu0
      %v3719 = vpop.trf.xlu0
      %v3720 = vpop.trf.xlu0
      %v3721 = vpop.trf.xlu0
      %v3722 = vpop.trf.xlu0
      %v3723 = vpop.trf.xlu0
      %v3724 = vpop.trf.xlu0
      %v3725 = vpop.trf.xlu0
      %v3726 = vpop.trf.xlu0
      %v3727 = vpop.trf.xlu0
      %v3728 = vld [vmem:[%s3] sm:$0xf]
      %3730 = vset.pattern.permute.xlu0 0
      %3731 = vperm.xlu0 %3730, %v3728
      %v3732 = vpop.permute.xlu0 %3731
      %v3734 = vadd.f32 %v3680, %v3732
      %v3735 = vadd.f32 %v3712, %v3732
      %v3738 = vrot.slane %v3735, 4
      %v3739 = vsel %vm212, %v3734, %v3738
      %3741 = vst [vmem:[%s197] sm:$0xff] %v3739
      %p3742 = scmp.lt.s32.totalorder %s15, 1
      %s3743 = scalar_select %p3742, %s15, 1
      %s3744 = smul.addr %s3743, 2
      %s3745 = smul.addr %s3744, 4
      %s3746 = scalar_lea.vmem %s4, %s3745
      // Predicated region
      $region37: #{permute_to_from.1} parent=35 // pred_check
        %p3747 = pneg %p122
      $region38: #{permute_to_from.1} parent=35 // pred_check_branch
        %3749 = sbr.rel (%p3747) target = $region40
      $region39: #{permute_to_from.1} parent=35 // pred_region
        _
      $region40: #{permute_to_from.1} parent=35 // pred_fallthru
        _
    $region36: #{permute_to_from.1} parent=5 // pred_fallthru
      _
    %p3750 = scmp.le.s32.totalorder 2, %s10
    // Predicated region
    $region41: #{permute_to_from.1} parent=5 // pred_check
      %p3751 = pneg %p3750
    $region42: #{permute_to_from.1} parent=5 // pred_check_branch
      %3753 = sbr.rel (%p3751) target = $region44
    $region43: #{permute_to_from.1} parent=5 // pred_region
      %s3754 = ssub.s32 %s10, 2
      // Predicated region
      $region45: #{permute_to_from.1} parent=43 // pred_check
        %p3755 = pneg %p128
      $region46: #{permute_to_from.1} parent=43 // pred_check_branch
        %3757 = sbr.rel (%p3755) target = $region48
      $region47: #{permute_to_from.1} parent=43 // pred_region
        %p3758 = scmp.lt.s32.totalorder %s16, 1
        %s3759 = scalar_select %p3758, %s16, 1
        %s3760 = smul.addr %s3759, 2
        %s3761 = smul.addr %s3760, 4
        %s3762 = scalar_lea.vmem %s4, %s3761
      $region48: #{permute_to_from.1} parent=43 // pred_fallthru
        _
    $region44: #{permute_to_from.1} parent=5 // pred_fallthru
      _
  $region6: #{permute_to_from.1} parent=0 // loop_footer
    %s14 = sadd.s32 1, %s10
  $region7: #{permute_to_from.1} parent=0 // loop_footer_branch
    %9 = sbr.rel target = $region3
  $region8: #{permute_to_from.1} parent=0 // loop_exit
    _

</llo_original>
